<compile_context>
chip_gen: v5e
topology: v5e:2x2
jax: 0.10.0
libtpu: 0.0.40
codegen_flags: <defaults>
</compile_context>

<pallas_src>
import jax
import jax.numpy as jnp
from jax import lax
from jax.experimental import pallas as pl
from jax.experimental.pallas import tpu as pltpu

# ---------------- configuration (small, consistent with the module) ----------------
VOCAB = 32
HIDDEN = 32            # hidden_size
N_HEAD = 4             # num_attention_heads
HEAD_DIM = HIDDEN // N_HEAD
N_LAYER = 2            # num_hidden_layers
INTERMEDIATE = 64
SEQ = 8                # input sequence length
PRE_SEQ_LEN = 4        # prefix length
MASK_ID = 4            # tokenizer.convert_tokens_to_ids('[MASK]')
BATCH = 2
LN_EPS = 1e-5
ATTN_SCALE = 1.0 / float(HEAD_DIM) ** 0.5


# ================================ fused Pallas kernel ===============================
def _layernorm(x, g, b, eps=LN_EPS):
    mu = jnp.mean(x, axis=-1, keepdims=True)
    var = jnp.mean((x - mu) ** 2, axis=-1, keepdims=True)
    return (x - mu) * lax.rsqrt(var + eps) * g + b


def _gelu(x):
    # tanh-approximate GELU (EUP friendly)
    # TODO(synk): HF RoBERTa uses the exact erf GELU; tanh approx differs by ~1e-3.
    return 0.5 * x * (1.0 + jnp.tanh(0.7978845608028654 * (x + 0.044715 * x * x * x)))


def _encoder_kernel(emb_ref, bias_ref, mask_ref, eg_ref, eb_ref,
                    pk_ref, pv_ref,
                    wqkv_ref, bqkv_ref, wo_ref, bo_ref, g1_ref, b1_ref,
                    wi_ref, bi_ref, wf_ref, bf_ref, g2_ref, b2_ref,
                    out_ref):
    """One grid step = one batch element: full 2-layer encoder + mask pooling."""
    H, D = HIDDEN, HEAD_DIM
    # Additive attention bias for the token positions only; the prefix positions
    # always have mask==1 (bias 0), so they need no bias term.
    bias = bias_ref[...]                                   # [1, S]

    # ----- embeddings LayerNorm -----
    h = _layernorm(emb_ref[...], eg_ref[...], eb_ref[...])  # [S, H]

    # ----- transformer layers (statically unrolled; weights resident in VMEM) -----
    for l in range(N_LAYER):
        x = h
        # fused QKV projection: [S, H] @ [H, 3H]
        qkv = jnp.dot(x, wqkv_ref[l], preferred_element_type=jnp.float32) + bqkv_ref[l]
        q = qkv[:, 0:H]
        k = qkv[:, H:2 * H]
        v = qkv[:, 2 * H:3 * H]

        pk_l = pk_ref[l]          # [P, H]  prefix keys   (heads along lanes)
        pv_l = pv_ref[l]          # [P, H]  prefix values
        wo_l = wo_ref[l]          # [H, H]

        dn = (((1,), (1,)), ((), ()))   # contract last dims (A @ B^T, no transpose op)

        # per-head attention with the output projection folded into the head loop
        attn_out = bo_ref[l]                                # [1, H] -> broadcasts
        for hh in range(N_HEAD):
            sl = slice(hh * D, (hh + 1) * D)
            qh, kh, vh = q[:, sl], k[:, sl], v[:, sl]       # [S, D]
            pkh, pvh = pk_l[:, sl], pv_l[:, sl]             # [P, D]

            s_pre = lax.dot_general(qh, pkh, dn,
                                    preferred_element_type=jnp.float32) * ATTN_SCALE
            s_tok = lax.dot_general(qh, kh, dn,
                                    preferred_element_type=jnp.float32) * ATTN_SCALE
            s_tok = s_tok + bias                            # [S, S]

            m = jnp.maximum(jnp.max(s_pre, axis=-1, keepdims=True),
                            jnp.max(s_tok, axis=-1, keepdims=True))
            p_pre = jnp.exp(s_pre - m)                      # [S, P]
            p_tok = jnp.exp(s_tok - m)                      # [S, S]
            denom = (jnp.sum(p_pre, axis=-1, keepdims=True)
                     + jnp.sum(p_tok, axis=-1, keepdims=True))
            inv = pl.reciprocal(denom, approx=True)

            ctx = (jnp.dot(p_pre, pvh, preferred_element_type=jnp.float32)
                   + jnp.dot(p_tok, vh, preferred_element_type=jnp.float32)) * inv
            attn_out = attn_out + jnp.dot(ctx, wo_l[sl, :],
                                          preferred_element_type=jnp.float32)

        h1 = _layernorm(attn_out + x, g1_ref[l], b1_ref[l])
        ff = _gelu(jnp.dot(h1, wi_ref[l], preferred_element_type=jnp.float32) + bi_ref[l])
        ff = jnp.dot(ff, wf_ref[l], preferred_element_type=jnp.float32) + bf_ref[l]
        h = _layernorm(ff + h1, g2_ref[l], b2_ref[l])

    # ----- [MASK]-token pooling epilogue: mask [1,S] @ h [S,H] -----
    out_ref[...] = jnp.dot(mask_ref[...], h,
                           preferred_element_type=jnp.float32).astype(out_ref.dtype)


def encoder_forward(emb, attn_bias, mask_index, emb_ln_g, emb_ln_b,
                    pk, pv, packed):
    B = emb.shape[0]
    L = N_LAYER
    out = pl.pallas_call(
        _encoder_kernel,
        grid=(B,),
        in_specs=[
            pl.BlockSpec((None, SEQ, HIDDEN), lambda b: (b, 0, 0)),        # emb
            pl.BlockSpec((None, 1, SEQ), lambda b: (b, 0, 0)),             # attn bias
            pl.BlockSpec((None, 1, SEQ), lambda b: (b, 0, 0)),             # mask index
            pl.BlockSpec((1, HIDDEN), lambda b: (0, 0)),                   # emb LN gamma
            pl.BlockSpec((1, HIDDEN), lambda b: (0, 0)),                   # emb LN beta
            pl.BlockSpec((L, PRE_SEQ_LEN, HIDDEN), lambda b: (0, 0, 0)),   # prefix K
            pl.BlockSpec((L, PRE_SEQ_LEN, HIDDEN), lambda b: (0, 0, 0)),   # prefix V
            pl.BlockSpec((L, HIDDEN, 3 * HIDDEN), lambda b: (0, 0, 0)),    # Wqkv
            pl.BlockSpec((L, 1, 3 * HIDDEN), lambda b: (0, 0, 0)),         # bqkv
            pl.BlockSpec((L, HIDDEN, HIDDEN), lambda b: (0, 0, 0)),        # Wo
            pl.BlockSpec((L, 1, HIDDEN), lambda b: (0, 0, 0)),             # bo
            pl.BlockSpec((L, 1, HIDDEN), lambda b: (0, 0, 0)),             # ln1 gamma
            pl.BlockSpec((L, 1, HIDDEN), lambda b: (0, 0, 0)),             # ln1 beta
            pl.BlockSpec((L, HIDDEN, INTERMEDIATE), lambda b: (0, 0, 0)),  # Wi
            pl.BlockSpec((L, 1, INTERMEDIATE), lambda b: (0, 0, 0)),       # bi
            pl.BlockSpec((L, INTERMEDIATE, HIDDEN), lambda b: (0, 0, 0)),  # Wf
            pl.BlockSpec((L, 1, HIDDEN), lambda b: (0, 0, 0)),             # bf
            pl.BlockSpec((L, 1, HIDDEN), lambda b: (0, 0, 0)),             # ln2 gamma
            pl.BlockSpec((L, 1, HIDDEN), lambda b: (0, 0, 0)),             # ln2 beta
        ],
        out_specs=pl.BlockSpec((None, 1, HIDDEN), lambda b: (b, 0, 0)),
        out_shape=jax.ShapeDtypeStruct((B, 1, HIDDEN), jnp.float32),
        compiler_params=pltpu.CompilerParams(
            dimension_semantics=("parallel",)),   # v7x: split batch across 2 TCs
    )(emb, attn_bias, mask_index, emb_ln_g, emb_ln_b, pk, pv,
      packed["wqkv"], packed["bqkv"], packed["wo"], packed["bo"],
      packed["ln1_g"], packed["ln1_b"], packed["wi"], packed["bi"],
      packed["wf"], packed["bf"], packed["ln2_g"], packed["ln2_b"])
    return out.reshape(B, HIDDEN)


# ============================= model (JAX glue + kernel) ============================
def init_params(key):
    ks = jax.random.split(key, 8)

    def nrm(k, shape):
        return jax.random.normal(k, shape, jnp.float32) * 0.02

    params = {
        "word_emb": nrm(ks[0], (VOCAB, HIDDEN)),
        "pos_emb": nrm(ks[1], (SEQ, HIDDEN)),
        "type_emb": nrm(ks[2], (1, HIDDEN)),
        "emb_ln_g": jnp.ones((1, HIDDEN), jnp.float32),
        "emb_ln_b": jnp.zeros((1, HIDDEN), jnp.float32),
        # PrefixEncoder (no projection): Embedding(pre_seq_len, n_layer*2*hidden)
        "prefix_emb": nrm(ks[3], (PRE_SEQ_LEN, N_LAYER * 2 * HIDDEN)),
    }
    layer_keys = jax.random.split(ks[4], N_LAYER)
    layers = []
    for l in range(N_LAYER):
        kl = jax.random.split(layer_keys[l], 6)
        layers.append(dict(
            wq=nrm(kl[0], (HIDDEN, HIDDEN)), bq=jnp.zeros((1, HIDDEN), jnp.float32),
            wk=nrm(kl[1], (HIDDEN, HIDDEN)), bk=jnp.zeros((1, HIDDEN), jnp.float32),
            wv=nrm(kl[2], (HIDDEN, HIDDEN)), bv=jnp.zeros((1, HIDDEN), jnp.float32),
            wo=nrm(kl[3], (HIDDEN, HIDDEN)), bo=jnp.zeros((1, HIDDEN), jnp.float32),
            ln1_g=jnp.ones((1, HIDDEN), jnp.float32), ln1_b=jnp.zeros((1, HIDDEN), jnp.float32),
            wi=nrm(kl[4], (HIDDEN, INTERMEDIATE)), bi=jnp.zeros((1, INTERMEDIATE), jnp.float32),
            wf=nrm(kl[5], (INTERMEDIATE, HIDDEN)), bf=jnp.zeros((1, HIDDEN), jnp.float32),
            ln2_g=jnp.ones((1, HIDDEN), jnp.float32), ln2_b=jnp.zeros((1, HIDDEN), jnp.float32),
        ))
    params["layers"] = layers
    return params


def pack_params(params):
    """Stack per-layer weights -> [N_LAYER, ...] and fuse Q/K/V into one matmul."""
    ls = params["layers"]

    def stack(name):
        return jnp.stack([lp[name] for lp in ls], axis=0)

    wqkv = jnp.stack([jnp.concatenate([lp["wq"], lp["wk"], lp["wv"]], axis=1)
                      for lp in ls], axis=0)                 # [L, H, 3H]
    bqkv = jnp.stack([jnp.concatenate([lp["bq"], lp["bk"], lp["bv"]], axis=1)
                      for lp in ls], axis=0)                 # [L, 1, 3H]
    return dict(
        wqkv=wqkv, bqkv=bqkv,
        wo=stack("wo"), bo=stack("bo"),
        ln1_g=stack("ln1_g"), ln1_b=stack("ln1_b"),
        wi=stack("wi"), bi=stack("bi"),
        wf=stack("wf"), bf=stack("bf"),
        ln2_g=stack("ln2_g"), ln2_b=stack("ln2_b"),
    )


def get_prompt(params):
    # prefix_tokens = arange(pre_seq_len); Embedding lookup == full table.
    # view(P, n_layer*2, n_head, head_dim): chunk 2l is key, 2l+1 is value of layer l,
    # with the head/head_dim axes flattened along lanes (matches in-kernel slicing).
    pr = params["prefix_emb"].reshape(PRE_SEQ_LEN, N_LAYER * 2, HIDDEN)
    pk = jnp.transpose(pr[:, 0::2, :], (1, 0, 2))            # [L, P, H]
    pv = jnp.transpose(pr[:, 1::2, :], (1, 0, 2))            # [L, P, H]
    # dropout(hidden_dropout_prob) is identity at inference
    return pk, pv


def p_tuningv2_forward(params, prompt_ids, prompt_mask, template_ids, template_mask):
    # prompt & template towers share all parameters -> run both in one batched pass
    input_ids = jnp.concatenate([prompt_ids, template_ids], axis=0)           # [2B, S]
    attention_mask = jnp.concatenate([prompt_mask, template_mask], axis=0)    # [2B, S]
    S = input_ids.shape[1]

    # embeddings (word + position + token_type); the LayerNorm is fused in the kernel
    emb = (jnp.take(params["word_emb"], input_ids, axis=0)
           + params["pos_emb"][None, :S, :]
           + params["type_emb"][None, :, :])                                  # [2B, S, H]

    # additive attention-mask bias for token positions; prefix positions have mask==1
    attn_bias = ((1.0 - attention_mask.astype(jnp.float32)) * -1e9)[:, None, :]  # [2B,1,S]

    # [MASK]-token pooling weights
    mask_index = (input_ids == MASK_ID).astype(jnp.float32)[:, None, :]       # [2B, 1, S]

    pk, pv = get_prompt(params)
    packed = pack_params(params)

    mask_emb = encoder_forward(emb, attn_bias, mask_index,
                               params["emb_ln_g"], params["emb_ln_b"],
                               pk, pv, packed)                                # [2B, H]
    return mask_emb[:BATCH] - mask_emb[BATCH:]                                # [B, H]


# ====================================== main ========================================
if __name__ == "__main__":
    key = jax.random.PRNGKey(0)
    kp, kt, kparams = jax.random.split(key, 3)

    params = init_params(kparams)

    prompt_ids = jax.random.randint(kp, (BATCH, SEQ), 5, VOCAB, dtype=jnp.int32)
    template_ids = jax.random.randint(kt, (BATCH, SEQ), 5, VOCAB, dtype=jnp.int32)
    # ensure a [MASK] token is present in each sequence
    prompt_ids = prompt_ids.at[:, 2].set(MASK_ID)
    template_ids = template_ids.at[:, 3].set(MASK_ID)

    prompt_mask = jnp.ones((BATCH, SEQ), jnp.float32).at[:, -2:].set(0.0)
    template_mask = jnp.ones((BATCH, SEQ), jnp.float32).at[:, -1:].set(0.0)

    out = jax.jit(p_tuningv2_forward)(params, prompt_ids, prompt_mask,
                                      template_ids, template_mask)
    jax.block_until_ready(out)
    assert out.shape == (BATCH, HIDDEN) and out.dtype == jnp.float32
    print("KERNEL_OK")
</pallas_src>

<mosaic_0001>
module attributes {stable_mosaic.version = 11 : i64} {
  func.func @_encoder_kernel(%arg0: i32, %arg1: memref<1x8x32xf32, #tpu.memory_space<vmem>>, %arg2: memref<1x1x8xf32, #tpu.memory_space<vmem>>, %arg3: memref<1x1x8xf32, #tpu.memory_space<vmem>>, %arg4: memref<1x32xf32, #tpu.memory_space<vmem>>, %arg5: memref<1x32xf32, #tpu.memory_space<vmem>>, %arg6: memref<2x4x32xf32, #tpu.memory_space<vmem>>, %arg7: memref<2x4x32xf32, #tpu.memory_space<vmem>>, %arg8: memref<2x32x96xf32, #tpu.memory_space<vmem>>, %arg9: memref<2x1x96xf32, #tpu.memory_space<vmem>>, %arg10: memref<2x32x32xf32, #tpu.memory_space<vmem>>, %arg11: memref<2x1x32xf32, #tpu.memory_space<vmem>>, %arg12: memref<2x1x32xf32, #tpu.memory_space<vmem>>, %arg13: memref<2x1x32xf32, #tpu.memory_space<vmem>>, %arg14: memref<2x32x64xf32, #tpu.memory_space<vmem>>, %arg15: memref<2x1x64xf32, #tpu.memory_space<vmem>>, %arg16: memref<2x64x32xf32, #tpu.memory_space<vmem>>, %arg17: memref<2x1x32xf32, #tpu.memory_space<vmem>>, %arg18: memref<2x1x32xf32, #tpu.memory_space<vmem>>, %arg19: memref<2x1x32xf32, #tpu.memory_space<vmem>>, %arg20: memref<1x1x32xf32, #tpu.memory_space<vmem>>) attributes {dimension_semantics = [#tpu.dimension_semantics<parallel>], iteration_bounds = array<i64: 4>, scalar_prefetch = 0 : i64, scratch_operands = 0 : i64, tpu.core_type = #tpu.core_type<tc>, window_params = [{transform_indices = @transform_0, window_bounds = array<i64: 1, 8, 32>}, {transform_indices = @transform_1, window_bounds = array<i64: 1, 1, 8>}, {transform_indices = @transform_2, window_bounds = array<i64: 1, 1, 8>}, {pipeline_mode = #tpu.pipeline_mode<synchronous>, transform_indices = @transform_3, window_bounds = array<i64: 1, 32>}, {pipeline_mode = #tpu.pipeline_mode<synchronous>, transform_indices = @transform_4, window_bounds = array<i64: 1, 32>}, {pipeline_mode = #tpu.pipeline_mode<synchronous>, transform_indices = @transform_5, window_bounds = array<i64: 2, 4, 32>}, {pipeline_mode = #tpu.pipeline_mode<synchronous>, transform_indices = @transform_6, window_bounds = array<i64: 2, 4, 32>}, {pipeline_mode = #tpu.pipeline_mode<synchronous>, transform_indices = @transform_7, window_bounds = array<i64: 2, 32, 96>}, {pipeline_mode = #tpu.pipeline_mode<synchronous>, transform_indices = @transform_8, window_bounds = array<i64: 2, 1, 96>}, {pipeline_mode = #tpu.pipeline_mode<synchronous>, transform_indices = @transform_9, window_bounds = array<i64: 2, 32, 32>}, {pipeline_mode = #tpu.pipeline_mode<synchronous>, transform_indices = @transform_10, window_bounds = array<i64: 2, 1, 32>}, {pipeline_mode = #tpu.pipeline_mode<synchronous>, transform_indices = @transform_11, window_bounds = array<i64: 2, 1, 32>}, {pipeline_mode = #tpu.pipeline_mode<synchronous>, transform_indices = @transform_12, window_bounds = array<i64: 2, 1, 32>}, {pipeline_mode = #tpu.pipeline_mode<synchronous>, transform_indices = @transform_13, window_bounds = array<i64: 2, 32, 64>}, {pipeline_mode = #tpu.pipeline_mode<synchronous>, transform_indices = @transform_14, window_bounds = array<i64: 2, 1, 64>}, {pipeline_mode = #tpu.pipeline_mode<synchronous>, transform_indices = @transform_15, window_bounds = array<i64: 2, 64, 32>}, {pipeline_mode = #tpu.pipeline_mode<synchronous>, transform_indices = @transform_16, window_bounds = array<i64: 2, 1, 32>}, {pipeline_mode = #tpu.pipeline_mode<synchronous>, transform_indices = @transform_17, window_bounds = array<i64: 2, 1, 32>}, {pipeline_mode = #tpu.pipeline_mode<synchronous>, transform_indices = @transform_18, window_bounds = array<i64: 2, 1, 32>}, {transform_indices = @transform_19, window_bounds = array<i64: 1, 1, 32>}]} {
    %c0 = arith.constant 0 : index
    %c0_0 = arith.constant 0 : index
    %c0_1 = arith.constant 0 : index
    %0 = vector.load %arg2[%c0, %c0_0, %c0_1] : memref<1x1x8xf32, #tpu.memory_space<vmem>>, vector<1x1x8xf32>
    %1 = vector.shape_cast %0 : vector<1x1x8xf32> to vector<1x8xf32>
    %c0_2 = arith.constant 0 : index
    %c0_3 = arith.constant 0 : index
    %c0_4 = arith.constant 0 : index
    %2 = vector.load %arg1[%c0_2, %c0_3, %c0_4] : memref<1x8x32xf32, #tpu.memory_space<vmem>>, vector<1x8x32xf32>
    %3 = vector.shape_cast %2 : vector<1x8x32xf32> to vector<8x32xf32>
    %c0_5 = arith.constant 0 : index
    %c0_6 = arith.constant 0 : index
    %4 = vector.load %arg4[%c0_5, %c0_6] : memref<1x32xf32, #tpu.memory_space<vmem>>, vector<1x32xf32>
    %c0_7 = arith.constant 0 : index
    %c0_8 = arith.constant 0 : index
    %5 = vector.load %arg5[%c0_7, %c0_8] : memref<1x32xf32, #tpu.memory_space<vmem>>, vector<1x32xf32>
    %cst = arith.constant dense<0.000000e+00> : vector<8xf32>
    %6 = vector.multi_reduction <add>, %3, %cst [1] : vector<8x32xf32> to vector<8xf32>
    %7 = vector.shape_cast %6 : vector<8xf32> to vector<8x1xf32>
    %cst_9 = arith.constant 3.200000e+01 : f32
    %8 = vector.broadcast %cst_9 : f32 to vector<8x1xf32>
    %9 = arith.divf %7, %8 : vector<8x1xf32>
    %10 = vector.broadcast %9 : vector<8x1xf32> to vector<8x32xf32>
    %11 = arith.subf %3, %10 : vector<8x32xf32>
    %12 = arith.mulf %11, %11 : vector<8x32xf32>
    %cst_10 = arith.constant dense<0.000000e+00> : vector<8xf32>
    %13 = vector.multi_reduction <add>, %12, %cst_10 [1] : vector<8x32xf32> to vector<8xf32>
    %14 = vector.shape_cast %13 : vector<8xf32> to vector<8x1xf32>
    %cst_11 = arith.constant 3.200000e+01 : f32
    %15 = vector.broadcast %cst_11 : f32 to vector<8x1xf32>
    %16 = arith.divf %14, %15 : vector<8x1xf32>
    %17 = vector.broadcast %9 : vector<8x1xf32> to vector<8x32xf32>
    %18 = arith.subf %3, %17 : vector<8x32xf32>
    %cst_12 = arith.constant 9.99999974E-6 : f32
    %19 = vector.broadcast %cst_12 : f32 to vector<8x1xf32>
    %20 = arith.addf %16, %19 : vector<8x1xf32>
    %21 = math.rsqrt %20 : vector<8x1xf32>
    %22 = vector.broadcast %21 : vector<8x1xf32> to vector<8x32xf32>
    %23 = arith.mulf %18, %22 : vector<8x32xf32>
    %24 = vector.broadcast %4 : vector<1x32xf32> to vector<8x32xf32>
    %25 = arith.mulf %23, %24 : vector<8x32xf32>
    %26 = vector.broadcast %5 : vector<1x32xf32> to vector<8x32xf32>
    %27 = arith.addf %25, %26 : vector<8x32xf32>
    %c0_13 = arith.constant 0 : index
    %c0_14 = arith.constant 0 : index
    %c0_15 = arith.constant 0 : index
    %28 = vector.load %arg8[%c0_13, %c0_14, %c0_15] : memref<2x32x96xf32, #tpu.memory_space<vmem>>, vector<1x32x96xf32>
    %29 = vector.shape_cast %28 : vector<1x32x96xf32> to vector<32x96xf32>
    %cst_16 = arith.constant dense<0.000000e+00> : vector<8x96xf32>
    %30 = tpu.matmul %27, %29, %cst_16 {dimension_numbers = #tpu.dot_dimension_numbers<[1], [0], [0], [1], [0, 0, 1, 1], [], []>} : vector<8x32xf32>, vector<32x96xf32>, vector<8x96xf32> -> vector<8x96xf32>
    %c0_17 = arith.constant 0 : index
    %c0_18 = arith.constant 0 : index
    %c0_19 = arith.constant 0 : index
    %31 = vector.load %arg9[%c0_17, %c0_18, %c0_19] : memref<2x1x96xf32, #tpu.memory_space<vmem>>, vector<1x1x96xf32>
    %32 = vector.shape_cast %31 : vector<1x1x96xf32> to vector<1x96xf32>
    %33 = vector.broadcast %32 : vector<1x96xf32> to vector<8x96xf32>
    %34 = arith.addf %30, %33 : vector<8x96xf32>
    %35 = vector.extract_strided_slice %34 {offsets = [0, 0], sizes = [8, 32], strides = [1, 1]} : vector<8x96xf32> to vector<8x32xf32>
    %36 = vector.extract_strided_slice %34 {offsets = [0, 32], sizes = [8, 32], strides = [1, 1]} : vector<8x96xf32> to vector<8x32xf32>
    %37 = vector.extract_strided_slice %34 {offsets = [0, 64], sizes = [8, 32], strides = [1, 1]} : vector<8x96xf32> to vector<8x32xf32>
    %c0_20 = arith.constant 0 : index
    %c0_21 = arith.constant 0 : index
    %c0_22 = arith.constant 0 : index
    %38 = vector.load %arg6[%c0_20, %c0_21, %c0_22] : memref<2x4x32xf32, #tpu.memory_space<vmem>>, vector<1x4x32xf32>
    %39 = vector.shape_cast %38 : vector<1x4x32xf32> to vector<4x32xf32>
    %c0_23 = arith.constant 0 : index
    %c0_24 = arith.constant 0 : index
    %c0_25 = arith.constant 0 : index
    %40 = vector.load %arg7[%c0_23, %c0_24, %c0_25] : memref<2x4x32xf32, #tpu.memory_space<vmem>>, vector<1x4x32xf32>
    %41 = vector.shape_cast %40 : vector<1x4x32xf32> to vector<4x32xf32>
    %c0_26 = arith.constant 0 : index
    %c0_27 = arith.constant 0 : index
    %c0_28 = arith.constant 0 : index
    %42 = vector.load %arg10[%c0_26, %c0_27, %c0_28] : memref<2x32x32xf32, #tpu.memory_space<vmem>>, vector<1x32x32xf32>
    %43 = vector.shape_cast %42 : vector<1x32x32xf32> to vector<32x32xf32>
    %c0_29 = arith.constant 0 : index
    %c0_30 = arith.constant 0 : index
    %c0_31 = arith.constant 0 : index
    %44 = vector.load %arg11[%c0_29, %c0_30, %c0_31] : memref<2x1x32xf32, #tpu.memory_space<vmem>>, vector<1x1x32xf32>
    %45 = vector.shape_cast %44 : vector<1x1x32xf32> to vector<1x32xf32>
    %46 = vector.extract_strided_slice %35 {offsets = [0, 0], sizes = [8, 8], strides = [1, 1]} : vector<8x32xf32> to vector<8x8xf32>
    %47 = vector.extract_strided_slice %36 {offsets = [0, 0], sizes = [8, 8], strides = [1, 1]} : vector<8x32xf32> to vector<8x8xf32>
    %48 = vector.extract_strided_slice %37 {offsets = [0, 0], sizes = [8, 8], strides = [1, 1]} : vector<8x32xf32> to vector<8x8xf32>
    %49 = vector.extract_strided_slice %39 {offsets = [0, 0], sizes = [4, 8], strides = [1, 1]} : vector<4x32xf32> to vector<4x8xf32>
    %50 = vector.extract_strided_slice %41 {offsets = [0, 0], sizes = [4, 8], strides = [1, 1]} : vector<4x32xf32> to vector<4x8xf32>
    %cst_32 = arith.constant dense<0.000000e+00> : vector<8x4xf32>
    %51 = tpu.matmul %46, %49, %cst_32 {dimension_numbers = #tpu.dot_dimension_numbers<[1], [1], [0], [0], [0, 0, 1, 0], [], []>} : vector<8x8xf32>, vector<4x8xf32>, vector<8x4xf32> -> vector<8x4xf32>
    %cst_33 = arith.constant 0.353553385 : f32
    %52 = vector.broadcast %cst_33 : f32 to vector<8x4xf32>
    %53 = arith.mulf %51, %52 : vector<8x4xf32>
    %cst_34 = arith.constant dense<0.000000e+00> : vector<8x8xf32>
    %54 = tpu.matmul %46, %47, %cst_34 {dimension_numbers = #tpu.dot_dimension_numbers<[1], [1], [0], [0], [0, 0, 1, 0], [], []>} : vector<8x8xf32>, vector<8x8xf32>, vector<8x8xf32> -> vector<8x8xf32>
    %cst_35 = arith.constant 0.353553385 : f32
    %55 = vector.broadcast %cst_35 : f32 to vector<8x8xf32>
    %56 = arith.mulf %54, %55 : vector<8x8xf32>
    %57 = vector.broadcast %1 : vector<1x8xf32> to vector<8x8xf32>
    %58 = arith.addf %56, %57 : vector<8x8xf32>
    %cst_36 = arith.constant dense<0xFF800000> : vector<8xf32>
    %59 = vector.multi_reduction <maximumf>, %53, %cst_36 [1] : vector<8x4xf32> to vector<8xf32>
    %60 = vector.shape_cast %59 : vector<8xf32> to vector<8x1xf32>
    %cst_37 = arith.constant dense<0xFF800000> : vector<8xf32>
    %61 = vector.multi_reduction <maximumf>, %58, %cst_37 [1] : vector<8x8xf32> to vector<8xf32>
    %62 = vector.shape_cast %61 : vector<8xf32> to vector<8x1xf32>
    %63 = arith.maximumf %60, %62 : vector<8x1xf32>
    %64 = vector.broadcast %63 : vector<8x1xf32> to vector<8x4xf32>
    %65 = arith.subf %53, %64 : vector<8x4xf32>
    %66 = math.exp %65 : vector<8x4xf32>
    %67 = vector.broadcast %63 : vector<8x1xf32> to vector<8x8xf32>
    %68 = arith.subf %58, %67 : vector<8x8xf32>
    %69 = math.exp %68 : vector<8x8xf32>
    %cst_38 = arith.constant dense<0.000000e+00> : vector<8xf32>
    %70 = vector.multi_reduction <add>, %66, %cst_38 [1] : vector<8x4xf32> to vector<8xf32>
    %71 = vector.shape_cast %70 : vector<8xf32> to vector<8x1xf32>
    %cst_39 = arith.constant dense<0.000000e+00> : vector<8xf32>
    %72 = vector.multi_reduction <add>, %69, %cst_39 [1] : vector<8x8xf32> to vector<8xf32>
    %73 = vector.shape_cast %72 : vector<8xf32> to vector<8x1xf32>
    %74 = arith.addf %71, %73 : vector<8x1xf32>
    %75 = tpu.reciprocal %74 {approx = true} : vector<8x1xf32> -> vector<8x1xf32>
    %cst_40 = arith.constant dense<0.000000e+00> : vector<8x8xf32>
    %76 = tpu.matmul %66, %50, %cst_40 {dimension_numbers = #tpu.dot_dimension_numbers<[1], [0], [0], [1], [0, 0, 1, 1], [], []>} : vector<8x4xf32>, vector<4x8xf32>, vector<8x8xf32> -> vector<8x8xf32>
    %cst_41 = arith.constant dense<0.000000e+00> : vector<8x8xf32>
    %77 = tpu.matmul %69, %48, %cst_41 {dimension_numbers = #tpu.dot_dimension_numbers<[1], [0], [0], [1], [0, 0, 1, 1], [], []>} : vector<8x8xf32>, vector<8x8xf32>, vector<8x8xf32> -> vector<8x8xf32>
    %78 = arith.addf %76, %77 : vector<8x8xf32>
    %79 = vector.broadcast %75 : vector<8x1xf32> to vector<8x8xf32>
    %80 = arith.mulf %78, %79 : vector<8x8xf32>
    %81 = vector.extract_strided_slice %43 {offsets = [0, 0], sizes = [8, 32], strides = [1, 1]} : vector<32x32xf32> to vector<8x32xf32>
    %cst_42 = arith.constant dense<0.000000e+00> : vector<8x32xf32>
    %82 = tpu.matmul %80, %81, %cst_42 {dimension_numbers = #tpu.dot_dimension_numbers<[1], [0], [0], [1], [0, 0, 1, 1], [], []>} : vector<8x8xf32>, vector<8x32xf32>, vector<8x32xf32> -> vector<8x32xf32>
    %83 = vector.broadcast %45 : vector<1x32xf32> to vector<8x32xf32>
    %84 = arith.addf %83, %82 : vector<8x32xf32>
    %85 = vector.extract_strided_slice %35 {offsets = [0, 8], sizes = [8, 8], strides = [1, 1]} : vector<8x32xf32> to vector<8x8xf32>
    %86 = vector.extract_strided_slice %36 {offsets = [0, 8], sizes = [8, 8], strides = [1, 1]} : vector<8x32xf32> to vector<8x8xf32>
    %87 = vector.extract_strided_slice %37 {offsets = [0, 8], sizes = [8, 8], strides = [1, 1]} : vector<8x32xf32> to vector<8x8xf32>
    %88 = vector.extract_strided_slice %39 {offsets = [0, 8], sizes = [4, 8], strides = [1, 1]} : vector<4x32xf32> to vector<4x8xf32>
    %89 = vector.extract_strided_slice %41 {offsets = [0, 8], sizes = [4, 8], strides = [1, 1]} : vector<4x32xf32> to vector<4x8xf32>
    %cst_43 = arith.constant dense<0.000000e+00> : vector<8x4xf32>
    %90 = tpu.matmul %85, %88, %cst_43 {dimension_numbers = #tpu.dot_dimension_numbers<[1], [1], [0], [0], [0, 0, 1, 0], [], []>} : vector<8x8xf32>, vector<4x8xf32>, vector<8x4xf32> -> vector<8x4xf32>
    %cst_44 = arith.constant 0.353553385 : f32
    %91 = vector.broadcast %cst_44 : f32 to vector<8x4xf32>
    %92 = arith.mulf %90, %91 : vector<8x4xf32>
    %cst_45 = arith.constant dense<0.000000e+00> : vector<8x8xf32>
    %93 = tpu.matmul %85, %86, %cst_45 {dimension_numbers = #tpu.dot_dimension_numbers<[1], [1], [0], [0], [0, 0, 1, 0], [], []>} : vector<8x8xf32>, vector<8x8xf32>, vector<8x8xf32> -> vector<8x8xf32>
    %cst_46 = arith.constant 0.353553385 : f32
    %94 = vector.broadcast %cst_46 : f32 to vector<8x8xf32>
    %95 = arith.mulf %93, %94 : vector<8x8xf32>
    %96 = vector.broadcast %1 : vector<1x8xf32> to vector<8x8xf32>
    %97 = arith.addf %95, %96 : vector<8x8xf32>
    %cst_47 = arith.constant dense<0xFF800000> : vector<8xf32>
    %98 = vector.multi_reduction <maximumf>, %92, %cst_47 [1] : vector<8x4xf32> to vector<8xf32>
    %99 = vector.shape_cast %98 : vector<8xf32> to vector<8x1xf32>
    %cst_48 = arith.constant dense<0xFF800000> : vector<8xf32>
    %100 = vector.multi_reduction <maximumf>, %97, %cst_48 [1] : vector<8x8xf32> to vector<8xf32>
    %101 = vector.shape_cast %100 : vector<8xf32> to vector<8x1xf32>
    %102 = arith.maximumf %99, %101 : vector<8x1xf32>
    %103 = vector.broadcast %102 : vector<8x1xf32> to vector<8x4xf32>
    %104 = arith.subf %92, %103 : vector<8x4xf32>
    %105 = math.exp %104 : vector<8x4xf32>
    %106 = vector.broadcast %102 : vector<8x1xf32> to vector<8x8xf32>
    %107 = arith.subf %97, %106 : vector<8x8xf32>
    %108 = math.exp %107 : vector<8x8xf32>
    %cst_49 = arith.constant dense<0.000000e+00> : vector<8xf32>
    %109 = vector.multi_reduction <add>, %105, %cst_49 [1] : vector<8x4xf32> to vector<8xf32>
    %110 = vector.shape_cast %109 : vector<8xf32> to vector<8x1xf32>
    %cst_50 = arith.constant dense<0.000000e+00> : vector<8xf32>
    %111 = vector.multi_reduction <add>, %108, %cst_50 [1] : vector<8x8xf32> to vector<8xf32>
    %112 = vector.shape_cast %111 : vector<8xf32> to vector<8x1xf32>
    %113 = arith.addf %110, %112 : vector<8x1xf32>
    %114 = tpu.reciprocal %113 {approx = true} : vector<8x1xf32> -> vector<8x1xf32>
    %cst_51 = arith.constant dense<0.000000e+00> : vector<8x8xf32>
    %115 = tpu.matmul %105, %89, %cst_51 {dimension_numbers = #tpu.dot_dimension_numbers<[1], [0], [0], [1], [0, 0, 1, 1], [], []>} : vector<8x4xf32>, vector<4x8xf32>, vector<8x8xf32> -> vector<8x8xf32>
    %cst_52 = arith.constant dense<0.000000e+00> : vector<8x8xf32>
    %116 = tpu.matmul %108, %87, %cst_52 {dimension_numbers = #tpu.dot_dimension_numbers<[1], [0], [0], [1], [0, 0, 1, 1], [], []>} : vector<8x8xf32>, vector<8x8xf32>, vector<8x8xf32> -> vector<8x8xf32>
    %117 = arith.addf %115, %116 : vector<8x8xf32>
    %118 = vector.broadcast %114 : vector<8x1xf32> to vector<8x8xf32>
    %119 = arith.mulf %117, %118 : vector<8x8xf32>
    %120 = vector.extract_strided_slice %43 {offsets = [8, 0], sizes = [8, 32], strides = [1, 1]} : vector<32x32xf32> to vector<8x32xf32>
    %cst_53 = arith.constant dense<0.000000e+00> : vector<8x32xf32>
    %121 = tpu.matmul %119, %120, %cst_53 {dimension_numbers = #tpu.dot_dimension_numbers<[1], [0], [0], [1], [0, 0, 1, 1], [], []>} : vector<8x8xf32>, vector<8x32xf32>, vector<8x32xf32> -> vector<8x32xf32>
    %122 = arith.addf %84, %121 : vector<8x32xf32>
    %123 = vector.extract_strided_slice %35 {offsets = [0, 16], sizes = [8, 8], strides = [1, 1]} : vector<8x32xf32> to vector<8x8xf32>
    %124 = vector.extract_strided_slice %36 {offsets = [0, 16], sizes = [8, 8], strides = [1, 1]} : vector<8x32xf32> to vector<8x8xf32>
    %125 = vector.extract_strided_slice %37 {offsets = [0, 16], sizes = [8, 8], strides = [1, 1]} : vector<8x32xf32> to vector<8x8xf32>
    %126 = vector.extract_strided_slice %39 {offsets = [0, 16], sizes = [4, 8], strides = [1, 1]} : vector<4x32xf32> to vector<4x8xf32>
    %127 = vector.extract_strided_slice %41 {offsets = [0, 16], sizes = [4, 8], strides = [1, 1]} : vector<4x32xf32> to vector<4x8xf32>
    %cst_54 = arith.constant dense<0.000000e+00> : vector<8x4xf32>
    %128 = tpu.matmul %123, %126, %cst_54 {dimension_numbers = #tpu.dot_dimension_numbers<[1], [1], [0], [0], [0, 0, 1, 0], [], []>} : vector<8x8xf32>, vector<4x8xf32>, vector<8x4xf32> -> vector<8x4xf32>
    %cst_55 = arith.constant 0.353553385 : f32
    %129 = vector.broadcast %cst_55 : f32 to vector<8x4xf32>
    %130 = arith.mulf %128, %129 : vector<8x4xf32>
    %cst_56 = arith.constant dense<0.000000e+00> : vector<8x8xf32>
    %131 = tpu.matmul %123, %124, %cst_56 {dimension_numbers = #tpu.dot_dimension_numbers<[1], [1], [0], [0], [0, 0, 1, 0], [], []>} : vector<8x8xf32>, vector<8x8xf32>, vector<8x8xf32> -> vector<8x8xf32>
    %cst_57 = arith.constant 0.353553385 : f32
    %132 = vector.broadcast %cst_57 : f32 to vector<8x8xf32>
    %133 = arith.mulf %131, %132 : vector<8x8xf32>
    %134 = vector.broadcast %1 : vector<1x8xf32> to vector<8x8xf32>
    %135 = arith.addf %133, %134 : vector<8x8xf32>
    %cst_58 = arith.constant dense<0xFF800000> : vector<8xf32>
    %136 = vector.multi_reduction <maximumf>, %130, %cst_58 [1] : vector<8x4xf32> to vector<8xf32>
    %137 = vector.shape_cast %136 : vector<8xf32> to vector<8x1xf32>
    %cst_59 = arith.constant dense<0xFF800000> : vector<8xf32>
    %138 = vector.multi_reduction <maximumf>, %135, %cst_59 [1] : vector<8x8xf32> to vector<8xf32>
    %139 = vector.shape_cast %138 : vector<8xf32> to vector<8x1xf32>
    %140 = arith.maximumf %137, %139 : vector<8x1xf32>
    %141 = vector.broadcast %140 : vector<8x1xf32> to vector<8x4xf32>
    %142 = arith.subf %130, %141 : vector<8x4xf32>
    %143 = math.exp %142 : vector<8x4xf32>
    %144 = vector.broadcast %140 : vector<8x1xf32> to vector<8x8xf32>
    %145 = arith.subf %135, %144 : vector<8x8xf32>
    %146 = math.exp %145 : vector<8x8xf32>
    %cst_60 = arith.constant dense<0.000000e+00> : vector<8xf32>
    %147 = vector.multi_reduction <add>, %143, %cst_60 [1] : vector<8x4xf32> to vector<8xf32>
    %148 = vector.shape_cast %147 : vector<8xf32> to vector<8x1xf32>
    %cst_61 = arith.constant dense<0.000000e+00> : vector<8xf32>
    %149 = vector.multi_reduction <add>, %146, %cst_61 [1] : vector<8x8xf32> to vector<8xf32>
    %150 = vector.shape_cast %149 : vector<8xf32> to vector<8x1xf32>
    %151 = arith.addf %148, %150 : vector<8x1xf32>
    %152 = tpu.reciprocal %151 {approx = true} : vector<8x1xf32> -> vector<8x1xf32>
    %cst_62 = arith.constant dense<0.000000e+00> : vector<8x8xf32>
    %153 = tpu.matmul %143, %127, %cst_62 {dimension_numbers = #tpu.dot_dimension_numbers<[1], [0], [0], [1], [0, 0, 1, 1], [], []>} : vector<8x4xf32>, vector<4x8xf32>, vector<8x8xf32> -> vector<8x8xf32>
    %cst_63 = arith.constant dense<0.000000e+00> : vector<8x8xf32>
    %154 = tpu.matmul %146, %125, %cst_63 {dimension_numbers = #tpu.dot_dimension_numbers<[1], [0], [0], [1], [0, 0, 1, 1], [], []>} : vector<8x8xf32>, vector<8x8xf32>, vector<8x8xf32> -> vector<8x8xf32>
    %155 = arith.addf %153, %154 : vector<8x8xf32>
    %156 = vector.broadcast %152 : vector<8x1xf32> to vector<8x8xf32>
    %157 = arith.mulf %155, %156 : vector<8x8xf32>
    %158 = vector.extract_strided_slice %43 {offsets = [16, 0], sizes = [8, 32], strides = [1, 1]} : vector<32x32xf32> to vector<8x32xf32>
    %cst_64 = arith.constant dense<0.000000e+00> : vector<8x32xf32>
    %159 = tpu.matmul %157, %158, %cst_64 {dimension_numbers = #tpu.dot_dimension_numbers<[1], [0], [0], [1], [0, 0, 1, 1], [], []>} : vector<8x8xf32>, vector<8x32xf32>, vector<8x32xf32> -> vector<8x32xf32>
    %160 = arith.addf %122, %159 : vector<8x32xf32>
    %161 = vector.extract_strided_slice %35 {offsets = [0, 24], sizes = [8, 8], strides = [1, 1]} : vector<8x32xf32> to vector<8x8xf32>
    %162 = vector.extract_strided_slice %36 {offsets = [0, 24], sizes = [8, 8], strides = [1, 1]} : vector<8x32xf32> to vector<8x8xf32>
    %163 = vector.extract_strided_slice %37 {offsets = [0, 24], sizes = [8, 8], strides = [1, 1]} : vector<8x32xf32> to vector<8x8xf32>
    %164 = vector.extract_strided_slice %39 {offsets = [0, 24], sizes = [4, 8], strides = [1, 1]} : vector<4x32xf32> to vector<4x8xf32>
    %165 = vector.extract_strided_slice %41 {offsets = [0, 24], sizes = [4, 8], strides = [1, 1]} : vector<4x32xf32> to vector<4x8xf32>
    %cst_65 = arith.constant dense<0.000000e+00> : vector<8x4xf32>
    %166 = tpu.matmul %161, %164, %cst_65 {dimension_numbers = #tpu.dot_dimension_numbers<[1], [1], [0], [0], [0, 0, 1, 0], [], []>} : vector<8x8xf32>, vector<4x8xf32>, vector<8x4xf32> -> vector<8x4xf32>
    %cst_66 = arith.constant 0.353553385 : f32
    %167 = vector.broadcast %cst_66 : f32 to vector<8x4xf32>
    %168 = arith.mulf %166, %167 : vector<8x4xf32>
    %cst_67 = arith.constant dense<0.000000e+00> : vector<8x8xf32>
    %169 = tpu.matmul %161, %162, %cst_67 {dimension_numbers = #tpu.dot_dimension_numbers<[1], [1], [0], [0], [0, 0, 1, 0], [], []>} : vector<8x8xf32>, vector<8x8xf32>, vector<8x8xf32> -> vector<8x8xf32>
    %cst_68 = arith.constant 0.353553385 : f32
    %170 = vector.broadcast %cst_68 : f32 to vector<8x8xf32>
    %171 = arith.mulf %169, %170 : vector<8x8xf32>
    %172 = vector.broadcast %1 : vector<1x8xf32> to vector<8x8xf32>
    %173 = arith.addf %171, %172 : vector<8x8xf32>
    %cst_69 = arith.constant dense<0xFF800000> : vector<8xf32>
    %174 = vector.multi_reduction <maximumf>, %168, %cst_69 [1] : vector<8x4xf32> to vector<8xf32>
    %175 = vector.shape_cast %174 : vector<8xf32> to vector<8x1xf32>
    %cst_70 = arith.constant dense<0xFF800000> : vector<8xf32>
    %176 = vector.multi_reduction <maximumf>, %173, %cst_70 [1] : vector<8x8xf32> to vector<8xf32>
    %177 = vector.shape_cast %176 : vector<8xf32> to vector<8x1xf32>
    %178 = arith.maximumf %175, %177 : vector<8x1xf32>
    %179 = vector.broadcast %178 : vector<8x1xf32> to vector<8x4xf32>
    %180 = arith.subf %168, %179 : vector<8x4xf32>
    %181 = math.exp %180 : vector<8x4xf32>
    %182 = vector.broadcast %178 : vector<8x1xf32> to vector<8x8xf32>
    %183 = arith.subf %173, %182 : vector<8x8xf32>
    %184 = math.exp %183 : vector<8x8xf32>
    %cst_71 = arith.constant dense<0.000000e+00> : vector<8xf32>
    %185 = vector.multi_reduction <add>, %181, %cst_71 [1] : vector<8x4xf32> to vector<8xf32>
    %186 = vector.shape_cast %185 : vector<8xf32> to vector<8x1xf32>
    %cst_72 = arith.constant dense<0.000000e+00> : vector<8xf32>
    %187 = vector.multi_reduction <add>, %184, %cst_72 [1] : vector<8x8xf32> to vector<8xf32>
    %188 = vector.shape_cast %187 : vector<8xf32> to vector<8x1xf32>
    %189 = arith.addf %186, %188 : vector<8x1xf32>
    %190 = tpu.reciprocal %189 {approx = true} : vector<8x1xf32> -> vector<8x1xf32>
    %cst_73 = arith.constant dense<0.000000e+00> : vector<8x8xf32>
    %191 = tpu.matmul %181, %165, %cst_73 {dimension_numbers = #tpu.dot_dimension_numbers<[1], [0], [0], [1], [0, 0, 1, 1], [], []>} : vector<8x4xf32>, vector<4x8xf32>, vector<8x8xf32> -> vector<8x8xf32>
    %cst_74 = arith.constant dense<0.000000e+00> : vector<8x8xf32>
    %192 = tpu.matmul %184, %163, %cst_74 {dimension_numbers = #tpu.dot_dimension_numbers<[1], [0], [0], [1], [0, 0, 1, 1], [], []>} : vector<8x8xf32>, vector<8x8xf32>, vector<8x8xf32> -> vector<8x8xf32>
    %193 = arith.addf %191, %192 : vector<8x8xf32>
    %194 = vector.broadcast %190 : vector<8x1xf32> to vector<8x8xf32>
    %195 = arith.mulf %193, %194 : vector<8x8xf32>
    %196 = vector.extract_strided_slice %43 {offsets = [24, 0], sizes = [8, 32], strides = [1, 1]} : vector<32x32xf32> to vector<8x32xf32>
    %cst_75 = arith.constant dense<0.000000e+00> : vector<8x32xf32>
    %197 = tpu.matmul %195, %196, %cst_75 {dimension_numbers = #tpu.dot_dimension_numbers<[1], [0], [0], [1], [0, 0, 1, 1], [], []>} : vector<8x8xf32>, vector<8x32xf32>, vector<8x32xf32> -> vector<8x32xf32>
    %198 = arith.addf %160, %197 : vector<8x32xf32>
    %199 = arith.addf %198, %27 : vector<8x32xf32>
    %c0_76 = arith.constant 0 : index
    %c0_77 = arith.constant 0 : index
    %c0_78 = arith.constant 0 : index
    %200 = vector.load %arg12[%c0_76, %c0_77, %c0_78] : memref<2x1x32xf32, #tpu.memory_space<vmem>>, vector<1x1x32xf32>
    %201 = vector.shape_cast %200 : vector<1x1x32xf32> to vector<1x32xf32>
    %c0_79 = arith.constant 0 : index
    %c0_80 = arith.constant 0 : index
    %c0_81 = arith.constant 0 : index
    %202 = vector.load %arg13[%c0_79, %c0_80, %c0_81] : memref<2x1x32xf32, #tpu.memory_space<vmem>>, vector<1x1x32xf32>
    %203 = vector.shape_cast %202 : vector<1x1x32xf32> to vector<1x32xf32>
    %cst_82 = arith.constant dense<0.000000e+00> : vector<8xf32>
    %204 = vector.multi_reduction <add>, %199, %cst_82 [1] : vector<8x32xf32> to vector<8xf32>
    %205 = vector.shape_cast %204 : vector<8xf32> to vector<8x1xf32>
    %cst_83 = arith.constant 3.200000e+01 : f32
    %206 = vector.broadcast %cst_83 : f32 to vector<8x1xf32>
    %207 = arith.divf %205, %206 : vector<8x1xf32>
    %208 = vector.broadcast %207 : vector<8x1xf32> to vector<8x32xf32>
    %209 = arith.subf %199, %208 : vector<8x32xf32>
    %210 = arith.mulf %209, %209 : vector<8x32xf32>
    %cst_84 = arith.constant dense<0.000000e+00> : vector<8xf32>
    %211 = vector.multi_reduction <add>, %210, %cst_84 [1] : vector<8x32xf32> to vector<8xf32>
    %212 = vector.shape_cast %211 : vector<8xf32> to vector<8x1xf32>
    %cst_85 = arith.constant 3.200000e+01 : f32
    %213 = vector.broadcast %cst_85 : f32 to vector<8x1xf32>
    %214 = arith.divf %212, %213 : vector<8x1xf32>
    %215 = vector.broadcast %207 : vector<8x1xf32> to vector<8x32xf32>
    %216 = arith.subf %199, %215 : vector<8x32xf32>
    %cst_86 = arith.constant 9.99999974E-6 : f32
    %217 = vector.broadcast %cst_86 : f32 to vector<8x1xf32>
    %218 = arith.addf %214, %217 : vector<8x1xf32>
    %219 = math.rsqrt %218 : vector<8x1xf32>
    %220 = vector.broadcast %219 : vector<8x1xf32> to vector<8x32xf32>
    %221 = arith.mulf %216, %220 : vector<8x32xf32>
    %222 = vector.broadcast %201 : vector<1x32xf32> to vector<8x32xf32>
    %223 = arith.mulf %221, %222 : vector<8x32xf32>
    %224 = vector.broadcast %203 : vector<1x32xf32> to vector<8x32xf32>
    %225 = arith.addf %223, %224 : vector<8x32xf32>
    %c0_87 = arith.constant 0 : index
    %c0_88 = arith.constant 0 : index
    %c0_89 = arith.constant 0 : index
    %226 = vector.load %arg14[%c0_87, %c0_88, %c0_89] : memref<2x32x64xf32, #tpu.memory_space<vmem>>, vector<1x32x64xf32>
    %227 = vector.shape_cast %226 : vector<1x32x64xf32> to vector<32x64xf32>
    %cst_90 = arith.constant dense<0.000000e+00> : vector<8x64xf32>
    %228 = tpu.matmul %225, %227, %cst_90 {dimension_numbers = #tpu.dot_dimension_numbers<[1], [0], [0], [1], [0, 0, 1, 1], [], []>} : vector<8x32xf32>, vector<32x64xf32>, vector<8x64xf32> -> vector<8x64xf32>
    %c0_91 = arith.constant 0 : index
    %c0_92 = arith.constant 0 : index
    %c0_93 = arith.constant 0 : index
    %229 = vector.load %arg15[%c0_91, %c0_92, %c0_93] : memref<2x1x64xf32, #tpu.memory_space<vmem>>, vector<1x1x64xf32>
    %230 = vector.shape_cast %229 : vector<1x1x64xf32> to vector<1x64xf32>
    %231 = vector.broadcast %230 : vector<1x64xf32> to vector<8x64xf32>
    %232 = arith.addf %228, %231 : vector<8x64xf32>
    %cst_94 = arith.constant 5.000000e-01 : f32
    %233 = vector.broadcast %cst_94 : f32 to vector<8x64xf32>
    %234 = arith.mulf %233, %232 : vector<8x64xf32>
    %cst_95 = arith.constant 4.471500e-02 : f32
    %235 = vector.broadcast %cst_95 : f32 to vector<8x64xf32>
    %236 = arith.mulf %235, %232 : vector<8x64xf32>
    %237 = arith.mulf %236, %232 : vector<8x64xf32>
    %238 = arith.mulf %237, %232 : vector<8x64xf32>
    %239 = arith.addf %232, %238 : vector<8x64xf32>
    %cst_96 = arith.constant 0.797884583 : f32
    %240 = vector.broadcast %cst_96 : f32 to vector<8x64xf32>
    %241 = arith.mulf %240, %239 : vector<8x64xf32>
    %242 = math.tanh %241 : vector<8x64xf32>
    %cst_97 = arith.constant 1.000000e+00 : f32
    %243 = vector.broadcast %cst_97 : f32 to vector<8x64xf32>
    %244 = arith.addf %243, %242 : vector<8x64xf32>
    %245 = arith.mulf %234, %244 : vector<8x64xf32>
    %c0_98 = arith.constant 0 : index
    %c0_99 = arith.constant 0 : index
    %c0_100 = arith.constant 0 : index
    %246 = vector.load %arg16[%c0_98, %c0_99, %c0_100] : memref<2x64x32xf32, #tpu.memory_space<vmem>>, vector<1x64x32xf32>
    %247 = vector.shape_cast %246 : vector<1x64x32xf32> to vector<64x32xf32>
    %cst_101 = arith.constant dense<0.000000e+00> : vector<8x32xf32>
    %248 = tpu.matmul %245, %247, %cst_101 {dimension_numbers = #tpu.dot_dimension_numbers<[1], [0], [0], [1], [0, 0, 1, 1], [], []>} : vector<8x64xf32>, vector<64x32xf32>, vector<8x32xf32> -> vector<8x32xf32>
    %c0_102 = arith.constant 0 : index
    %c0_103 = arith.constant 0 : index
    %c0_104 = arith.constant 0 : index
    %249 = vector.load %arg17[%c0_102, %c0_103, %c0_104] : memref<2x1x32xf32, #tpu.memory_space<vmem>>, vector<1x1x32xf32>
    %250 = vector.shape_cast %249 : vector<1x1x32xf32> to vector<1x32xf32>
    %251 = vector.broadcast %250 : vector<1x32xf32> to vector<8x32xf32>
    %252 = arith.addf %248, %251 : vector<8x32xf32>
    %253 = arith.addf %252, %225 : vector<8x32xf32>
    %c0_105 = arith.constant 0 : index
    %c0_106 = arith.constant 0 : index
    %c0_107 = arith.constant 0 : index
    %254 = vector.load %arg18[%c0_105, %c0_106, %c0_107] : memref<2x1x32xf32, #tpu.memory_space<vmem>>, vector<1x1x32xf32>
    %255 = vector.shape_cast %254 : vector<1x1x32xf32> to vector<1x32xf32>
    %c0_108 = arith.constant 0 : index
    %c0_109 = arith.constant 0 : index
    %c0_110 = arith.constant 0 : index
    %256 = vector.load %arg19[%c0_108, %c0_109, %c0_110] : memref<2x1x32xf32, #tpu.memory_space<vmem>>, vector<1x1x32xf32>
    %257 = vector.shape_cast %256 : vector<1x1x32xf32> to vector<1x32xf32>
    %cst_111 = arith.constant dense<0.000000e+00> : vector<8xf32>
    %258 = vector.multi_reduction <add>, %253, %cst_111 [1] : vector<8x32xf32> to vector<8xf32>
    %259 = vector.shape_cast %258 : vector<8xf32> to vector<8x1xf32>
    %cst_112 = arith.constant 3.200000e+01 : f32
    %260 = vector.broadcast %cst_112 : f32 to vector<8x1xf32>
    %261 = arith.divf %259, %260 : vector<8x1xf32>
    %262 = vector.broadcast %261 : vector<8x1xf32> to vector<8x32xf32>
    %263 = arith.subf %253, %262 : vector<8x32xf32>
    %264 = arith.mulf %263, %263 : vector<8x32xf32>
    %cst_113 = arith.constant dense<0.000000e+00> : vector<8xf32>
    %265 = vector.multi_reduction <add>, %264, %cst_113 [1] : vector<8x32xf32> to vector<8xf32>
    %266 = vector.shape_cast %265 : vector<8xf32> to vector<8x1xf32>
    %cst_114 = arith.constant 3.200000e+01 : f32
    %267 = vector.broadcast %cst_114 : f32 to vector<8x1xf32>
    %268 = arith.divf %266, %267 : vector<8x1xf32>
    %269 = vector.broadcast %261 : vector<8x1xf32> to vector<8x32xf32>
    %270 = arith.subf %253, %269 : vector<8x32xf32>
    %cst_115 = arith.constant 9.99999974E-6 : f32
    %271 = vector.broadcast %cst_115 : f32 to vector<8x1xf32>
    %272 = arith.addf %268, %271 : vector<8x1xf32>
    %273 = math.rsqrt %272 : vector<8x1xf32>
    %274 = vector.broadcast %273 : vector<8x1xf32> to vector<8x32xf32>
    %275 = arith.mulf %270, %274 : vector<8x32xf32>
    %276 = vector.broadcast %255 : vector<1x32xf32> to vector<8x32xf32>
    %277 = arith.mulf %275, %276 : vector<8x32xf32>
    %278 = vector.broadcast %257 : vector<1x32xf32> to vector<8x32xf32>
    %279 = arith.addf %277, %278 : vector<8x32xf32>
    %c1 = arith.constant 1 : index
    %c0_116 = arith.constant 0 : index
    %c0_117 = arith.constant 0 : index
    %280 = vector.load %arg8[%c1, %c0_116, %c0_117] : memref<2x32x96xf32, #tpu.memory_space<vmem>>, vector<1x32x96xf32>
    %281 = vector.shape_cast %280 : vector<1x32x96xf32> to vector<32x96xf32>
    %cst_118 = arith.constant dense<0.000000e+00> : vector<8x96xf32>
    %282 = tpu.matmul %279, %281, %cst_118 {dimension_numbers = #tpu.dot_dimension_numbers<[1], [0], [0], [1], [0, 0, 1, 1], [], []>} : vector<8x32xf32>, vector<32x96xf32>, vector<8x96xf32> -> vector<8x96xf32>
    %c1_119 = arith.constant 1 : index
    %c0_120 = arith.constant 0 : index
    %c0_121 = arith.constant 0 : index
    %283 = vector.load %arg9[%c1_119, %c0_120, %c0_121] : memref<2x1x96xf32, #tpu.memory_space<vmem>>, vector<1x1x96xf32>
    %284 = vector.shape_cast %283 : vector<1x1x96xf32> to vector<1x96xf32>
    %285 = vector.broadcast %284 : vector<1x96xf32> to vector<8x96xf32>
    %286 = arith.addf %282, %285 : vector<8x96xf32>
    %287 = vector.extract_strided_slice %286 {offsets = [0, 0], sizes = [8, 32], strides = [1, 1]} : vector<8x96xf32> to vector<8x32xf32>
    %288 = vector.extract_strided_slice %286 {offsets = [0, 32], sizes = [8, 32], strides = [1, 1]} : vector<8x96xf32> to vector<8x32xf32>
    %289 = vector.extract_strided_slice %286 {offsets = [0, 64], sizes = [8, 32], strides = [1, 1]} : vector<8x96xf32> to vector<8x32xf32>
    %c1_122 = arith.constant 1 : index
    %c0_123 = arith.constant 0 : index
    %c0_124 = arith.constant 0 : index
    %290 = vector.load %arg6[%c1_122, %c0_123, %c0_124] : memref<2x4x32xf32, #tpu.memory_space<vmem>>, vector<1x4x32xf32>
    %291 = vector.shape_cast %290 : vector<1x4x32xf32> to vector<4x32xf32>
    %c1_125 = arith.constant 1 : index
    %c0_126 = arith.constant 0 : index
    %c0_127 = arith.constant 0 : index
    %292 = vector.load %arg7[%c1_125, %c0_126, %c0_127] : memref<2x4x32xf32, #tpu.memory_space<vmem>>, vector<1x4x32xf32>
    %293 = vector.shape_cast %292 : vector<1x4x32xf32> to vector<4x32xf32>
    %c1_128 = arith.constant 1 : index
    %c0_129 = arith.constant 0 : index
    %c0_130 = arith.constant 0 : index
    %294 = vector.load %arg10[%c1_128, %c0_129, %c0_130] : memref<2x32x32xf32, #tpu.memory_space<vmem>>, vector<1x32x32xf32>
    %295 = vector.shape_cast %294 : vector<1x32x32xf32> to vector<32x32xf32>
    %c1_131 = arith.constant 1 : index
    %c0_132 = arith.constant 0 : index
    %c0_133 = arith.constant 0 : index
    %296 = vector.load %arg11[%c1_131, %c0_132, %c0_133] : memref<2x1x32xf32, #tpu.memory_space<vmem>>, vector<1x1x32xf32>
    %297 = vector.shape_cast %296 : vector<1x1x32xf32> to vector<1x32xf32>
    %298 = vector.extract_strided_slice %287 {offsets = [0, 0], sizes = [8, 8], strides = [1, 1]} : vector<8x32xf32> to vector<8x8xf32>
    %299 = vector.extract_strided_slice %288 {offsets = [0, 0], sizes = [8, 8], strides = [1, 1]} : vector<8x32xf32> to vector<8x8xf32>
    %300 = vector.extract_strided_slice %289 {offsets = [0, 0], sizes = [8, 8], strides = [1, 1]} : vector<8x32xf32> to vector<8x8xf32>
    %301 = vector.extract_strided_slice %291 {offsets = [0, 0], sizes = [4, 8], strides = [1, 1]} : vector<4x32xf32> to vector<4x8xf32>
    %302 = vector.extract_strided_slice %293 {offsets = [0, 0], sizes = [4, 8], strides = [1, 1]} : vector<4x32xf32> to vector<4x8xf32>
    %cst_134 = arith.constant dense<0.000000e+00> : vector<8x4xf32>
    %303 = tpu.matmul %298, %301, %cst_134 {dimension_numbers = #tpu.dot_dimension_numbers<[1], [1], [0], [0], [0, 0, 1, 0], [], []>} : vector<8x8xf32>, vector<4x8xf32>, vector<8x4xf32> -> vector<8x4xf32>
    %cst_135 = arith.constant 0.353553385 : f32
    %304 = vector.broadcast %cst_135 : f32 to vector<8x4xf32>
    %305 = arith.mulf %303, %304 : vector<8x4xf32>
    %cst_136 = arith.constant dense<0.000000e+00> : vector<8x8xf32>
    %306 = tpu.matmul %298, %299, %cst_136 {dimension_numbers = #tpu.dot_dimension_numbers<[1], [1], [0], [0], [0, 0, 1, 0], [], []>} : vector<8x8xf32>, vector<8x8xf32>, vector<8x8xf32> -> vector<8x8xf32>
    %cst_137 = arith.constant 0.353553385 : f32
    %307 = vector.broadcast %cst_137 : f32 to vector<8x8xf32>
    %308 = arith.mulf %306, %307 : vector<8x8xf32>
    %309 = vector.broadcast %1 : vector<1x8xf32> to vector<8x8xf32>
    %310 = arith.addf %308, %309 : vector<8x8xf32>
    %cst_138 = arith.constant dense<0xFF800000> : vector<8xf32>
    %311 = vector.multi_reduction <maximumf>, %305, %cst_138 [1] : vector<8x4xf32> to vector<8xf32>
    %312 = vector.shape_cast %311 : vector<8xf32> to vector<8x1xf32>
    %cst_139 = arith.constant dense<0xFF800000> : vector<8xf32>
    %313 = vector.multi_reduction <maximumf>, %310, %cst_139 [1] : vector<8x8xf32> to vector<8xf32>
    %314 = vector.shape_cast %313 : vector<8xf32> to vector<8x1xf32>
    %315 = arith.maximumf %312, %314 : vector<8x1xf32>
    %316 = vector.broadcast %315 : vector<8x1xf32> to vector<8x4xf32>
    %317 = arith.subf %305, %316 : vector<8x4xf32>
    %318 = math.exp %317 : vector<8x4xf32>
    %319 = vector.broadcast %315 : vector<8x1xf32> to vector<8x8xf32>
    %320 = arith.subf %310, %319 : vector<8x8xf32>
    %321 = math.exp %320 : vector<8x8xf32>
    %cst_140 = arith.constant dense<0.000000e+00> : vector<8xf32>
    %322 = vector.multi_reduction <add>, %318, %cst_140 [1] : vector<8x4xf32> to vector<8xf32>
    %323 = vector.shape_cast %322 : vector<8xf32> to vector<8x1xf32>
    %cst_141 = arith.constant dense<0.000000e+00> : vector<8xf32>
    %324 = vector.multi_reduction <add>, %321, %cst_141 [1] : vector<8x8xf32> to vector<8xf32>
    %325 = vector.shape_cast %324 : vector<8xf32> to vector<8x1xf32>
    %326 = arith.addf %323, %325 : vector<8x1xf32>
    %327 = tpu.reciprocal %326 {approx = true} : vector<8x1xf32> -> vector<8x1xf32>
    %cst_142 = arith.constant dense<0.000000e+00> : vector<8x8xf32>
    %328 = tpu.matmul %318, %302, %cst_142 {dimension_numbers = #tpu.dot_dimension_numbers<[1], [0], [0], [1], [0, 0, 1, 1], [], []>} : vector<8x4xf32>, vector<4x8xf32>, vector<8x8xf32> -> vector<8x8xf32>
    %cst_143 = arith.constant dense<0.000000e+00> : vector<8x8xf32>
    %329 = tpu.matmul %321, %300, %cst_143 {dimension_numbers = #tpu.dot_dimension_numbers<[1], [0], [0], [1], [0, 0, 1, 1], [], []>} : vector<8x8xf32>, vector<8x8xf32>, vector<8x8xf32> -> vector<8x8xf32>
    %330 = arith.addf %328, %329 : vector<8x8xf32>
    %331 = vector.broadcast %327 : vector<8x1xf32> to vector<8x8xf32>
    %332 = arith.mulf %330, %331 : vector<8x8xf32>
    %333 = vector.extract_strided_slice %295 {offsets = [0, 0], sizes = [8, 32], strides = [1, 1]} : vector<32x32xf32> to vector<8x32xf32>
    %cst_144 = arith.constant dense<0.000000e+00> : vector<8x32xf32>
    %334 = tpu.matmul %332, %333, %cst_144 {dimension_numbers = #tpu.dot_dimension_numbers<[1], [0], [0], [1], [0, 0, 1, 1], [], []>} : vector<8x8xf32>, vector<8x32xf32>, vector<8x32xf32> -> vector<8x32xf32>
    %335 = vector.broadcast %297 : vector<1x32xf32> to vector<8x32xf32>
    %336 = arith.addf %335, %334 : vector<8x32xf32>
    %337 = vector.extract_strided_slice %287 {offsets = [0, 8], sizes = [8, 8], strides = [1, 1]} : vector<8x32xf32> to vector<8x8xf32>
    %338 = vector.extract_strided_slice %288 {offsets = [0, 8], sizes = [8, 8], strides = [1, 1]} : vector<8x32xf32> to vector<8x8xf32>
    %339 = vector.extract_strided_slice %289 {offsets = [0, 8], sizes = [8, 8], strides = [1, 1]} : vector<8x32xf32> to vector<8x8xf32>
    %340 = vector.extract_strided_slice %291 {offsets = [0, 8], sizes = [4, 8], strides = [1, 1]} : vector<4x32xf32> to vector<4x8xf32>
    %341 = vector.extract_strided_slice %293 {offsets = [0, 8], sizes = [4, 8], strides = [1, 1]} : vector<4x32xf32> to vector<4x8xf32>
    %cst_145 = arith.constant dense<0.000000e+00> : vector<8x4xf32>
    %342 = tpu.matmul %337, %340, %cst_145 {dimension_numbers = #tpu.dot_dimension_numbers<[1], [1], [0], [0], [0, 0, 1, 0], [], []>} : vector<8x8xf32>, vector<4x8xf32>, vector<8x4xf32> -> vector<8x4xf32>
    %cst_146 = arith.constant 0.353553385 : f32
    %343 = vector.broadcast %cst_146 : f32 to vector<8x4xf32>
    %344 = arith.mulf %342, %343 : vector<8x4xf32>
    %cst_147 = arith.constant dense<0.000000e+00> : vector<8x8xf32>
    %345 = tpu.matmul %337, %338, %cst_147 {dimension_numbers = #tpu.dot_dimension_numbers<[1], [1], [0], [0], [0, 0, 1, 0], [], []>} : vector<8x8xf32>, vector<8x8xf32>, vector<8x8xf32> -> vector<8x8xf32>
    %cst_148 = arith.constant 0.353553385 : f32
    %346 = vector.broadcast %cst_148 : f32 to vector<8x8xf32>
    %347 = arith.mulf %345, %346 : vector<8x8xf32>
    %348 = vector.broadcast %1 : vector<1x8xf32> to vector<8x8xf32>
    %349 = arith.addf %347, %348 : vector<8x8xf32>
    %cst_149 = arith.constant dense<0xFF800000> : vector<8xf32>
    %350 = vector.multi_reduction <maximumf>, %344, %cst_149 [1] : vector<8x4xf32> to vector<8xf32>
    %351 = vector.shape_cast %350 : vector<8xf32> to vector<8x1xf32>
    %cst_150 = arith.constant dense<0xFF800000> : vector<8xf32>
    %352 = vector.multi_reduction <maximumf>, %349, %cst_150 [1] : vector<8x8xf32> to vector<8xf32>
    %353 = vector.shape_cast %352 : vector<8xf32> to vector<8x1xf32>
    %354 = arith.maximumf %351, %353 : vector<8x1xf32>
    %355 = vector.broadcast %354 : vector<8x1xf32> to vector<8x4xf32>
    %356 = arith.subf %344, %355 : vector<8x4xf32>
    %357 = math.exp %356 : vector<8x4xf32>
    %358 = vector.broadcast %354 : vector<8x1xf32> to vector<8x8xf32>
    %359 = arith.subf %349, %358 : vector<8x8xf32>
    %360 = math.exp %359 : vector<8x8xf32>
    %cst_151 = arith.constant dense<0.000000e+00> : vector<8xf32>
    %361 = vector.multi_reduction <add>, %357, %cst_151 [1] : vector<8x4xf32> to vector<8xf32>
    %362 = vector.shape_cast %361 : vector<8xf32> to vector<8x1xf32>
    %cst_152 = arith.constant dense<0.000000e+00> : vector<8xf32>
    %363 = vector.multi_reduction <add>, %360, %cst_152 [1] : vector<8x8xf32> to vector<8xf32>
    %364 = vector.shape_cast %363 : vector<8xf32> to vector<8x1xf32>
    %365 = arith.addf %362, %364 : vector<8x1xf32>
    %366 = tpu.reciprocal %365 {approx = true} : vector<8x1xf32> -> vector<8x1xf32>
    %cst_153 = arith.constant dense<0.000000e+00> : vector<8x8xf32>
    %367 = tpu.matmul %357, %341, %cst_153 {dimension_numbers = #tpu.dot_dimension_numbers<[1], [0], [0], [1], [0, 0, 1, 1], [], []>} : vector<8x4xf32>, vector<4x8xf32>, vector<8x8xf32> -> vector<8x8xf32>
    %cst_154 = arith.constant dense<0.000000e+00> : vector<8x8xf32>
    %368 = tpu.matmul %360, %339, %cst_154 {dimension_numbers = #tpu.dot_dimension_numbers<[1], [0], [0], [1], [0, 0, 1, 1], [], []>} : vector<8x8xf32>, vector<8x8xf32>, vector<8x8xf32> -> vector<8x8xf32>
    %369 = arith.addf %367, %368 : vector<8x8xf32>
    %370 = vector.broadcast %366 : vector<8x1xf32> to vector<8x8xf32>
    %371 = arith.mulf %369, %370 : vector<8x8xf32>
    %372 = vector.extract_strided_slice %295 {offsets = [8, 0], sizes = [8, 32], strides = [1, 1]} : vector<32x32xf32> to vector<8x32xf32>
    %cst_155 = arith.constant dense<0.000000e+00> : vector<8x32xf32>
    %373 = tpu.matmul %371, %372, %cst_155 {dimension_numbers = #tpu.dot_dimension_numbers<[1], [0], [0], [1], [0, 0, 1, 1], [], []>} : vector<8x8xf32>, vector<8x32xf32>, vector<8x32xf32> -> vector<8x32xf32>
    %374 = arith.addf %336, %373 : vector<8x32xf32>
    %375 = vector.extract_strided_slice %287 {offsets = [0, 16], sizes = [8, 8], strides = [1, 1]} : vector<8x32xf32> to vector<8x8xf32>
    %376 = vector.extract_strided_slice %288 {offsets = [0, 16], sizes = [8, 8], strides = [1, 1]} : vector<8x32xf32> to vector<8x8xf32>
    %377 = vector.extract_strided_slice %289 {offsets = [0, 16], sizes = [8, 8], strides = [1, 1]} : vector<8x32xf32> to vector<8x8xf32>
    %378 = vector.extract_strided_slice %291 {offsets = [0, 16], sizes = [4, 8], strides = [1, 1]} : vector<4x32xf32> to vector<4x8xf32>
    %379 = vector.extract_strided_slice %293 {offsets = [0, 16], sizes = [4, 8], strides = [1, 1]} : vector<4x32xf32> to vector<4x8xf32>
    %cst_156 = arith.constant dense<0.000000e+00> : vector<8x4xf32>
    %380 = tpu.matmul %375, %378, %cst_156 {dimension_numbers = #tpu.dot_dimension_numbers<[1], [1], [0], [0], [0, 0, 1, 0], [], []>} : vector<8x8xf32>, vector<4x8xf32>, vector<8x4xf32> -> vector<8x4xf32>
    %cst_157 = arith.constant 0.353553385 : f32
    %381 = vector.broadcast %cst_157 : f32 to vector<8x4xf32>
    %382 = arith.mulf %380, %381 : vector<8x4xf32>
    %cst_158 = arith.constant dense<0.000000e+00> : vector<8x8xf32>
    %383 = tpu.matmul %375, %376, %cst_158 {dimension_numbers = #tpu.dot_dimension_numbers<[1], [1], [0], [0], [0, 0, 1, 0], [], []>} : vector<8x8xf32>, vector<8x8xf32>, vector<8x8xf32> -> vector<8x8xf32>
    %cst_159 = arith.constant 0.353553385 : f32
    %384 = vector.broadcast %cst_159 : f32 to vector<8x8xf32>
    %385 = arith.mulf %383, %384 : vector<8x8xf32>
    %386 = vector.broadcast %1 : vector<1x8xf32> to vector<8x8xf32>
    %387 = arith.addf %385, %386 : vector<8x8xf32>
    %cst_160 = arith.constant dense<0xFF800000> : vector<8xf32>
    %388 = vector.multi_reduction <maximumf>, %382, %cst_160 [1] : vector<8x4xf32> to vector<8xf32>
    %389 = vector.shape_cast %388 : vector<8xf32> to vector<8x1xf32>
    %cst_161 = arith.constant dense<0xFF800000> : vector<8xf32>
    %390 = vector.multi_reduction <maximumf>, %387, %cst_161 [1] : vector<8x8xf32> to vector<8xf32>
    %391 = vector.shape_cast %390 : vector<8xf32> to vector<8x1xf32>
    %392 = arith.maximumf %389, %391 : vector<8x1xf32>
    %393 = vector.broadcast %392 : vector<8x1xf32> to vector<8x4xf32>
    %394 = arith.subf %382, %393 : vector<8x4xf32>
    %395 = math.exp %394 : vector<8x4xf32>
    %396 = vector.broadcast %392 : vector<8x1xf32> to vector<8x8xf32>
    %397 = arith.subf %387, %396 : vector<8x8xf32>
    %398 = math.exp %397 : vector<8x8xf32>
    %cst_162 = arith.constant dense<0.000000e+00> : vector<8xf32>
    %399 = vector.multi_reduction <add>, %395, %cst_162 [1] : vector<8x4xf32> to vector<8xf32>
    %400 = vector.shape_cast %399 : vector<8xf32> to vector<8x1xf32>
    %cst_163 = arith.constant dense<0.000000e+00> : vector<8xf32>
    %401 = vector.multi_reduction <add>, %398, %cst_163 [1] : vector<8x8xf32> to vector<8xf32>
    %402 = vector.shape_cast %401 : vector<8xf32> to vector<8x1xf32>
    %403 = arith.addf %400, %402 : vector<8x1xf32>
    %404 = tpu.reciprocal %403 {approx = true} : vector<8x1xf32> -> vector<8x1xf32>
    %cst_164 = arith.constant dense<0.000000e+00> : vector<8x8xf32>
    %405 = tpu.matmul %395, %379, %cst_164 {dimension_numbers = #tpu.dot_dimension_numbers<[1], [0], [0], [1], [0, 0, 1, 1], [], []>} : vector<8x4xf32>, vector<4x8xf32>, vector<8x8xf32> -> vector<8x8xf32>
    %cst_165 = arith.constant dense<0.000000e+00> : vector<8x8xf32>
    %406 = tpu.matmul %398, %377, %cst_165 {dimension_numbers = #tpu.dot_dimension_numbers<[1], [0], [0], [1], [0, 0, 1, 1], [], []>} : vector<8x8xf32>, vector<8x8xf32>, vector<8x8xf32> -> vector<8x8xf32>
    %407 = arith.addf %405, %406 : vector<8x8xf32>
    %408 = vector.broadcast %404 : vector<8x1xf32> to vector<8x8xf32>
    %409 = arith.mulf %407, %408 : vector<8x8xf32>
    %410 = vector.extract_strided_slice %295 {offsets = [16, 0], sizes = [8, 32], strides = [1, 1]} : vector<32x32xf32> to vector<8x32xf32>
    %cst_166 = arith.constant dense<0.000000e+00> : vector<8x32xf32>
    %411 = tpu.matmul %409, %410, %cst_166 {dimension_numbers = #tpu.dot_dimension_numbers<[1], [0], [0], [1], [0, 0, 1, 1], [], []>} : vector<8x8xf32>, vector<8x32xf32>, vector<8x32xf32> -> vector<8x32xf32>
    %412 = arith.addf %374, %411 : vector<8x32xf32>
    %413 = vector.extract_strided_slice %287 {offsets = [0, 24], sizes = [8, 8], strides = [1, 1]} : vector<8x32xf32> to vector<8x8xf32>
    %414 = vector.extract_strided_slice %288 {offsets = [0, 24], sizes = [8, 8], strides = [1, 1]} : vector<8x32xf32> to vector<8x8xf32>
    %415 = vector.extract_strided_slice %289 {offsets = [0, 24], sizes = [8, 8], strides = [1, 1]} : vector<8x32xf32> to vector<8x8xf32>
    %416 = vector.extract_strided_slice %291 {offsets = [0, 24], sizes = [4, 8], strides = [1, 1]} : vector<4x32xf32> to vector<4x8xf32>
    %417 = vector.extract_strided_slice %293 {offsets = [0, 24], sizes = [4, 8], strides = [1, 1]} : vector<4x32xf32> to vector<4x8xf32>
    %cst_167 = arith.constant dense<0.000000e+00> : vector<8x4xf32>
    %418 = tpu.matmul %413, %416, %cst_167 {dimension_numbers = #tpu.dot_dimension_numbers<[1], [1], [0], [0], [0, 0, 1, 0], [], []>} : vector<8x8xf32>, vector<4x8xf32>, vector<8x4xf32> -> vector<8x4xf32>
    %cst_168 = arith.constant 0.353553385 : f32
    %419 = vector.broadcast %cst_168 : f32 to vector<8x4xf32>
    %420 = arith.mulf %418, %419 : vector<8x4xf32>
    %cst_169 = arith.constant dense<0.000000e+00> : vector<8x8xf32>
    %421 = tpu.matmul %413, %414, %cst_169 {dimension_numbers = #tpu.dot_dimension_numbers<[1], [1], [0], [0], [0, 0, 1, 0], [], []>} : vector<8x8xf32>, vector<8x8xf32>, vector<8x8xf32> -> vector<8x8xf32>
    %cst_170 = arith.constant 0.353553385 : f32
    %422 = vector.broadcast %cst_170 : f32 to vector<8x8xf32>
    %423 = arith.mulf %421, %422 : vector<8x8xf32>
    %424 = vector.broadcast %1 : vector<1x8xf32> to vector<8x8xf32>
    %425 = arith.addf %423, %424 : vector<8x8xf32>
    %cst_171 = arith.constant dense<0xFF800000> : vector<8xf32>
    %426 = vector.multi_reduction <maximumf>, %420, %cst_171 [1] : vector<8x4xf32> to vector<8xf32>
    %427 = vector.shape_cast %426 : vector<8xf32> to vector<8x1xf32>
    %cst_172 = arith.constant dense<0xFF800000> : vector<8xf32>
    %428 = vector.multi_reduction <maximumf>, %425, %cst_172 [1] : vector<8x8xf32> to vector<8xf32>
    %429 = vector.shape_cast %428 : vector<8xf32> to vector<8x1xf32>
    %430 = arith.maximumf %427, %429 : vector<8x1xf32>
    %431 = vector.broadcast %430 : vector<8x1xf32> to vector<8x4xf32>
    %432 = arith.subf %420, %431 : vector<8x4xf32>
    %433 = math.exp %432 : vector<8x4xf32>
    %434 = vector.broadcast %430 : vector<8x1xf32> to vector<8x8xf32>
    %435 = arith.subf %425, %434 : vector<8x8xf32>
    %436 = math.exp %435 : vector<8x8xf32>
    %cst_173 = arith.constant dense<0.000000e+00> : vector<8xf32>
    %437 = vector.multi_reduction <add>, %433, %cst_173 [1] : vector<8x4xf32> to vector<8xf32>
    %438 = vector.shape_cast %437 : vector<8xf32> to vector<8x1xf32>
    %cst_174 = arith.constant dense<0.000000e+00> : vector<8xf32>
    %439 = vector.multi_reduction <add>, %436, %cst_174 [1] : vector<8x8xf32> to vector<8xf32>
    %440 = vector.shape_cast %439 : vector<8xf32> to vector<8x1xf32>
    %441 = arith.addf %438, %440 : vector<8x1xf32>
    %442 = tpu.reciprocal %441 {approx = true} : vector<8x1xf32> -> vector<8x1xf32>
    %cst_175 = arith.constant dense<0.000000e+00> : vector<8x8xf32>
    %443 = tpu.matmul %433, %417, %cst_175 {dimension_numbers = #tpu.dot_dimension_numbers<[1], [0], [0], [1], [0, 0, 1, 1], [], []>} : vector<8x4xf32>, vector<4x8xf32>, vector<8x8xf32> -> vector<8x8xf32>
    %cst_176 = arith.constant dense<0.000000e+00> : vector<8x8xf32>
    %444 = tpu.matmul %436, %415, %cst_176 {dimension_numbers = #tpu.dot_dimension_numbers<[1], [0], [0], [1], [0, 0, 1, 1], [], []>} : vector<8x8xf32>, vector<8x8xf32>, vector<8x8xf32> -> vector<8x8xf32>
    %445 = arith.addf %443, %444 : vector<8x8xf32>
    %446 = vector.broadcast %442 : vector<8x1xf32> to vector<8x8xf32>
    %447 = arith.mulf %445, %446 : vector<8x8xf32>
    %448 = vector.extract_strided_slice %295 {offsets = [24, 0], sizes = [8, 32], strides = [1, 1]} : vector<32x32xf32> to vector<8x32xf32>
    %cst_177 = arith.constant dense<0.000000e+00> : vector<8x32xf32>
    %449 = tpu.matmul %447, %448, %cst_177 {dimension_numbers = #tpu.dot_dimension_numbers<[1], [0], [0], [1], [0, 0, 1, 1], [], []>} : vector<8x8xf32>, vector<8x32xf32>, vector<8x32xf32> -> vector<8x32xf32>
    %450 = arith.addf %412, %449 : vector<8x32xf32>
    %451 = arith.addf %450, %279 : vector<8x32xf32>
    %c1_178 = arith.constant 1 : index
    %c0_179 = arith.constant 0 : index
    %c0_180 = arith.constant 0 : index
    %452 = vector.load %arg12[%c1_178, %c0_179, %c0_180] : memref<2x1x32xf32, #tpu.memory_space<vmem>>, vector<1x1x32xf32>
    %453 = vector.shape_cast %452 : vector<1x1x32xf32> to vector<1x32xf32>
    %c1_181 = arith.constant 1 : index
    %c0_182 = arith.constant 0 : index
    %c0_183 = arith.constant 0 : index
    %454 = vector.load %arg13[%c1_181, %c0_182, %c0_183] : memref<2x1x32xf32, #tpu.memory_space<vmem>>, vector<1x1x32xf32>
    %455 = vector.shape_cast %454 : vector<1x1x32xf32> to vector<1x32xf32>
    %cst_184 = arith.constant dense<0.000000e+00> : vector<8xf32>
    %456 = vector.multi_reduction <add>, %451, %cst_184 [1] : vector<8x32xf32> to vector<8xf32>
    %457 = vector.shape_cast %456 : vector<8xf32> to vector<8x1xf32>
    %cst_185 = arith.constant 3.200000e+01 : f32
    %458 = vector.broadcast %cst_185 : f32 to vector<8x1xf32>
    %459 = arith.divf %457, %458 : vector<8x1xf32>
    %460 = vector.broadcast %459 : vector<8x1xf32> to vector<8x32xf32>
    %461 = arith.subf %451, %460 : vector<8x32xf32>
    %462 = arith.mulf %461, %461 : vector<8x32xf32>
    %cst_186 = arith.constant dense<0.000000e+00> : vector<8xf32>
    %463 = vector.multi_reduction <add>, %462, %cst_186 [1] : vector<8x32xf32> to vector<8xf32>
    %464 = vector.shape_cast %463 : vector<8xf32> to vector<8x1xf32>
    %cst_187 = arith.constant 3.200000e+01 : f32
    %465 = vector.broadcast %cst_187 : f32 to vector<8x1xf32>
    %466 = arith.divf %464, %465 : vector<8x1xf32>
    %467 = vector.broadcast %459 : vector<8x1xf32> to vector<8x32xf32>
    %468 = arith.subf %451, %467 : vector<8x32xf32>
    %cst_188 = arith.constant 9.99999974E-6 : f32
    %469 = vector.broadcast %cst_188 : f32 to vector<8x1xf32>
    %470 = arith.addf %466, %469 : vector<8x1xf32>
    %471 = math.rsqrt %470 : vector<8x1xf32>
    %472 = vector.broadcast %471 : vector<8x1xf32> to vector<8x32xf32>
    %473 = arith.mulf %468, %472 : vector<8x32xf32>
    %474 = vector.broadcast %453 : vector<1x32xf32> to vector<8x32xf32>
    %475 = arith.mulf %473, %474 : vector<8x32xf32>
    %476 = vector.broadcast %455 : vector<1x32xf32> to vector<8x32xf32>
    %477 = arith.addf %475, %476 : vector<8x32xf32>
    %c1_189 = arith.constant 1 : index
    %c0_190 = arith.constant 0 : index
    %c0_191 = arith.constant 0 : index
    %478 = vector.load %arg14[%c1_189, %c0_190, %c0_191] : memref<2x32x64xf32, #tpu.memory_space<vmem>>, vector<1x32x64xf32>
    %479 = vector.shape_cast %478 : vector<1x32x64xf32> to vector<32x64xf32>
    %cst_192 = arith.constant dense<0.000000e+00> : vector<8x64xf32>
    %480 = tpu.matmul %477, %479, %cst_192 {dimension_numbers = #tpu.dot_dimension_numbers<[1], [0], [0], [1], [0, 0, 1, 1], [], []>} : vector<8x32xf32>, vector<32x64xf32>, vector<8x64xf32> -> vector<8x64xf32>
    %c1_193 = arith.constant 1 : index
    %c0_194 = arith.constant 0 : index
    %c0_195 = arith.constant 0 : index
    %481 = vector.load %arg15[%c1_193, %c0_194, %c0_195] : memref<2x1x64xf32, #tpu.memory_space<vmem>>, vector<1x1x64xf32>
    %482 = vector.shape_cast %481 : vector<1x1x64xf32> to vector<1x64xf32>
    %483 = vector.broadcast %482 : vector<1x64xf32> to vector<8x64xf32>
    %484 = arith.addf %480, %483 : vector<8x64xf32>
    %cst_196 = arith.constant 5.000000e-01 : f32
    %485 = vector.broadcast %cst_196 : f32 to vector<8x64xf32>
    %486 = arith.mulf %485, %484 : vector<8x64xf32>
    %cst_197 = arith.constant 4.471500e-02 : f32
    %487 = vector.broadcast %cst_197 : f32 to vector<8x64xf32>
    %488 = arith.mulf %487, %484 : vector<8x64xf32>
    %489 = arith.mulf %488, %484 : vector<8x64xf32>
    %490 = arith.mulf %489, %484 : vector<8x64xf32>
    %491 = arith.addf %484, %490 : vector<8x64xf32>
    %cst_198 = arith.constant 0.797884583 : f32
    %492 = vector.broadcast %cst_198 : f32 to vector<8x64xf32>
    %493 = arith.mulf %492, %491 : vector<8x64xf32>
    %494 = math.tanh %493 : vector<8x64xf32>
    %cst_199 = arith.constant 1.000000e+00 : f32
    %495 = vector.broadcast %cst_199 : f32 to vector<8x64xf32>
    %496 = arith.addf %495, %494 : vector<8x64xf32>
    %497 = arith.mulf %486, %496 : vector<8x64xf32>
    %c1_200 = arith.constant 1 : index
    %c0_201 = arith.constant 0 : index
    %c0_202 = arith.constant 0 : index
    %498 = vector.load %arg16[%c1_200, %c0_201, %c0_202] : memref<2x64x32xf32, #tpu.memory_space<vmem>>, vector<1x64x32xf32>
    %499 = vector.shape_cast %498 : vector<1x64x32xf32> to vector<64x32xf32>
    %cst_203 = arith.constant dense<0.000000e+00> : vector<8x32xf32>
    %500 = tpu.matmul %497, %499, %cst_203 {dimension_numbers = #tpu.dot_dimension_numbers<[1], [0], [0], [1], [0, 0, 1, 1], [], []>} : vector<8x64xf32>, vector<64x32xf32>, vector<8x32xf32> -> vector<8x32xf32>
    %c1_204 = arith.constant 1 : index
    %c0_205 = arith.constant 0 : index
    %c0_206 = arith.constant 0 : index
    %501 = vector.load %arg17[%c1_204, %c0_205, %c0_206] : memref<2x1x32xf32, #tpu.memory_space<vmem>>, vector<1x1x32xf32>
    %502 = vector.shape_cast %501 : vector<1x1x32xf32> to vector<1x32xf32>
    %503 = vector.broadcast %502 : vector<1x32xf32> to vector<8x32xf32>
    %504 = arith.addf %500, %503 : vector<8x32xf32>
    %505 = arith.addf %504, %477 : vector<8x32xf32>
    %c1_207 = arith.constant 1 : index
    %c0_208 = arith.constant 0 : index
    %c0_209 = arith.constant 0 : index
    %506 = vector.load %arg18[%c1_207, %c0_208, %c0_209] : memref<2x1x32xf32, #tpu.memory_space<vmem>>, vector<1x1x32xf32>
    %507 = vector.shape_cast %506 : vector<1x1x32xf32> to vector<1x32xf32>
    %c1_210 = arith.constant 1 : index
    %c0_211 = arith.constant 0 : index
    %c0_212 = arith.constant 0 : index
    %508 = vector.load %arg19[%c1_210, %c0_211, %c0_212] : memref<2x1x32xf32, #tpu.memory_space<vmem>>, vector<1x1x32xf32>
    %509 = vector.shape_cast %508 : vector<1x1x32xf32> to vector<1x32xf32>
    %cst_213 = arith.constant dense<0.000000e+00> : vector<8xf32>
    %510 = vector.multi_reduction <add>, %505, %cst_213 [1] : vector<8x32xf32> to vector<8xf32>
    %511 = vector.shape_cast %510 : vector<8xf32> to vector<8x1xf32>
    %cst_214 = arith.constant 3.200000e+01 : f32
    %512 = vector.broadcast %cst_214 : f32 to vector<8x1xf32>
    %513 = arith.divf %511, %512 : vector<8x1xf32>
    %514 = vector.broadcast %513 : vector<8x1xf32> to vector<8x32xf32>
    %515 = arith.subf %505, %514 : vector<8x32xf32>
    %516 = arith.mulf %515, %515 : vector<8x32xf32>
    %cst_215 = arith.constant dense<0.000000e+00> : vector<8xf32>
    %517 = vector.multi_reduction <add>, %516, %cst_215 [1] : vector<8x32xf32> to vector<8xf32>
    %518 = vector.shape_cast %517 : vector<8xf32> to vector<8x1xf32>
    %cst_216 = arith.constant 3.200000e+01 : f32
    %519 = vector.broadcast %cst_216 : f32 to vector<8x1xf32>
    %520 = arith.divf %518, %519 : vector<8x1xf32>
    %521 = vector.broadcast %513 : vector<8x1xf32> to vector<8x32xf32>
    %522 = arith.subf %505, %521 : vector<8x32xf32>
    %cst_217 = arith.constant 9.99999974E-6 : f32
    %523 = vector.broadcast %cst_217 : f32 to vector<8x1xf32>
    %524 = arith.addf %520, %523 : vector<8x1xf32>
    %525 = math.rsqrt %524 : vector<8x1xf32>
    %526 = vector.broadcast %525 : vector<8x1xf32> to vector<8x32xf32>
    %527 = arith.mulf %522, %526 : vector<8x32xf32>
    %528 = vector.broadcast %507 : vector<1x32xf32> to vector<8x32xf32>
    %529 = arith.mulf %527, %528 : vector<8x32xf32>
    %530 = vector.broadcast %509 : vector<1x32xf32> to vector<8x32xf32>
    %531 = arith.addf %529, %530 : vector<8x32xf32>
    %c0_218 = arith.constant 0 : index
    %c0_219 = arith.constant 0 : index
    %c0_220 = arith.constant 0 : index
    %532 = vector.load %arg3[%c0_218, %c0_219, %c0_220] : memref<1x1x8xf32, #tpu.memory_space<vmem>>, vector<1x1x8xf32>
    %533 = vector.shape_cast %532 : vector<1x1x8xf32> to vector<1x8xf32>
    %cst_221 = arith.constant dense<0.000000e+00> : vector<1x32xf32>
    %534 = tpu.matmul %533, %531, %cst_221 {dimension_numbers = #tpu.dot_dimension_numbers<[1], [0], [0], [1], [0, 0, 1, 1], [], []>} : vector<1x8xf32>, vector<8x32xf32>, vector<1x32xf32> -> vector<1x32xf32>
    %c0_222 = arith.constant 0 : index
    %c0_223 = arith.constant 0 : index
    %c0_224 = arith.constant 0 : index
    %535 = vector.load %arg20[%c0_222, %c0_223, %c0_224] : memref<1x1x32xf32, #tpu.memory_space<vmem>>, vector<1x1x32xf32>
    %536 = vector.shape_cast %535 : vector<1x1x32xf32> to vector<1x32xf32>
    %537 = vector.shape_cast %534 : vector<1x32xf32> to vector<1x1x32xf32>
    tpu.vector_store %arg20[%c0_222, %c0_223, %c0_224], %537 {strides = array<i32>} : memref<1x1x32xf32, #tpu.memory_space<vmem>>, vector<1x1x32xf32>,
    return
  }
  func.func @transform_0(%arg0: i32) -> (i32, i32, i32) {
    %c0_i32 = arith.constant 0 : i32
    %c0_i32_0 = arith.constant 0 : i32
    %c0_i32_1 = arith.constant 0 : i32
    return %arg0, %c0_i32, %c0_i32_0 : i32, i32, i32
  }
  func.func @transform_1(%arg0: i32) -> (i32, i32, i32) {
    %c0_i32 = arith.constant 0 : i32
    %c0_i32_0 = arith.constant 0 : i32
    %c0_i32_1 = arith.constant 0 : i32
    return %arg0, %c0_i32, %c0_i32_0 : i32, i32, i32
  }
  func.func @transform_2(%arg0: i32) -> (i32, i32, i32) {
    %c0_i32 = arith.constant 0 : i32
    %c0_i32_0 = arith.constant 0 : i32
    %c0_i32_1 = arith.constant 0 : i32
    return %arg0, %c0_i32, %c0_i32_0 : i32, i32, i32
  }
  func.func @transform_3(%arg0: i32) -> (i32, i32) {
    %c0_i32 = arith.constant 0 : i32
    %c0_i32_0 = arith.constant 0 : i32
    %c0_i32_1 = arith.constant 0 : i32
    return %c0_i32, %c0_i32_0 : i32, i32
  }
  func.func @transform_4(%arg0: i32) -> (i32, i32) {
    %c0_i32 = arith.constant 0 : i32
    %c0_i32_0 = arith.constant 0 : i32
    %c0_i32_1 = arith.constant 0 : i32
    return %c0_i32, %c0_i32_0 : i32, i32
  }
  func.func @transform_5(%arg0: i32) -> (i32, i32, i32) {
    %c0_i32 = arith.constant 0 : i32
    %c0_i32_0 = arith.constant 0 : i32
    %c0_i32_1 = arith.constant 0 : i32
    %c0_i32_2 = arith.constant 0 : i32
    return %c0_i32, %c0_i32_0, %c0_i32_1 : i32, i32, i32
  }
  func.func @transform_6(%arg0: i32) -> (i32, i32, i32) {
    %c0_i32 = arith.constant 0 : i32
    %c0_i32_0 = arith.constant 0 : i32
    %c0_i32_1 = arith.constant 0 : i32
    %c0_i32_2 = arith.constant 0 : i32
    return %c0_i32, %c0_i32_0, %c0_i32_1 : i32, i32, i32
  }
  func.func @transform_7(%arg0: i32) -> (i32, i32, i32) {
    %c0_i32 = arith.constant 0 : i32
    %c0_i32_0 = arith.constant 0 : i32
    %c0_i32_1 = arith.constant 0 : i32
    %c0_i32_2 = arith.constant 0 : i32
    return %c0_i32, %c0_i32_0, %c0_i32_1 : i32, i32, i32
  }
  func.func @transform_8(%arg0: i32) -> (i32, i32, i32) {
    %c0_i32 = arith.constant 0 : i32
    %c0_i32_0 = arith.constant 0 : i32
    %c0_i32_1 = arith.constant 0 : i32
    %c0_i32_2 = arith.constant 0 : i32
    return %c0_i32, %c0_i32_0, %c0_i32_1 : i32, i32, i32
  }
  func.func @transform_9(%arg0: i32) -> (i32, i32, i32) {
    %c0_i32 = arith.constant 0 : i32
    %c0_i32_0 = arith.constant 0 : i32
    %c0_i32_1 = arith.constant 0 : i32
    %c0_i32_2 = arith.constant 0 : i32
    return %c0_i32, %c0_i32_0, %c0_i32_1 : i32, i32, i32
  }
  func.func @transform_10(%arg0: i32) -> (i32, i32, i32) {
    %c0_i32 = arith.constant 0 : i32
    %c0_i32_0 = arith.constant 0 : i32
    %c0_i32_1 = arith.constant 0 : i32
    %c0_i32_2 = arith.constant 0 : i32
    return %c0_i32, %c0_i32_0, %c0_i32_1 : i32, i32, i32
  }
  func.func @transform_11(%arg0: i32) -> (i32, i32, i32) {
    %c0_i32 = arith.constant 0 : i32
    %c0_i32_0 = arith.constant 0 : i32
    %c0_i32_1 = arith.constant 0 : i32
    %c0_i32_2 = arith.constant 0 : i32
    return %c0_i32, %c0_i32_0, %c0_i32_1 : i32, i32, i32
  }
  func.func @transform_12(%arg0: i32) -> (i32, i32, i32) {
    %c0_i32 = arith.constant 0 : i32
    %c0_i32_0 = arith.constant 0 : i32
    %c0_i32_1 = arith.constant 0 : i32
    %c0_i32_2 = arith.constant 0 : i32
    return %c0_i32, %c0_i32_0, %c0_i32_1 : i32, i32, i32
  }
  func.func @transform_13(%arg0: i32) -> (i32, i32, i32) {
    %c0_i32 = arith.constant 0 : i32
    %c0_i32_0 = arith.constant 0 : i32
    %c0_i32_1 = arith.constant 0 : i32
    %c0_i32_2 = arith.constant 0 : i32
    return %c0_i32, %c0_i32_0, %c0_i32_1 : i32, i32, i32
  }
  func.func @transform_14(%arg0: i32) -> (i32, i32, i32) {
    %c0_i32 = arith.constant 0 : i32
    %c0_i32_0 = arith.constant 0 : i32
    %c0_i32_1 = arith.constant 0 : i32
    %c0_i32_2 = arith.constant 0 : i32
    return %c0_i32, %c0_i32_0, %c0_i32_1 : i32, i32, i32
  }
  func.func @transform_15(%arg0: i32) -> (i32, i32, i32) {
    %c0_i32 = arith.constant 0 : i32
    %c0_i32_0 = arith.constant 0 : i32
    %c0_i32_1 = arith.constant 0 : i32
    %c0_i32_2 = arith.constant 0 : i32
    return %c0_i32, %c0_i32_0, %c0_i32_1 : i32, i32, i32
  }
  func.func @transform_16(%arg0: i32) -> (i32, i32, i32) {
    %c0_i32 = arith.constant 0 : i32
    %c0_i32_0 = arith.constant 0 : i32
    %c0_i32_1 = arith.constant 0 : i32
    %c0_i32_2 = arith.constant 0 : i32
    return %c0_i32, %c0_i32_0, %c0_i32_1 : i32, i32, i32
  }
  func.func @transform_17(%arg0: i32) -> (i32, i32, i32) {
    %c0_i32 = arith.constant 0 : i32
    %c0_i32_0 = arith.constant 0 : i32
    %c0_i32_1 = arith.constant 0 : i32
    %c0_i32_2 = arith.constant 0 : i32
    return %c0_i32, %c0_i32_0, %c0_i32_1 : i32, i32, i32
  }
  func.func @transform_18(%arg0: i32) -> (i32, i32, i32) {
    %c0_i32 = arith.constant 0 : i32
    %c0_i32_0 = arith.constant 0 : i32
    %c0_i32_1 = arith.constant 0 : i32
    %c0_i32_2 = arith.constant 0 : i32
    return %c0_i32, %c0_i32_0, %c0_i32_1 : i32, i32, i32
  }
  func.func @transform_19(%arg0: i32) -> (i32, i32, i32) {
    %c0_i32 = arith.constant 0 : i32
    %c0_i32_0 = arith.constant 0 : i32
    %c0_i32_1 = arith.constant 0 : i32
    return %arg0, %c0_i32, %c0_i32_0 : i32, i32, i32
  }
}

</mosaic_0001>

<llo_original>
// kernel: p_tuningv2_forward.1
$region0: #{p_tuningv2_forward.1}
  #allocation0 [shape = 'u32[]', space=smem, size = 0x4, offset = 0x4, fixed_abs, tag = 'smem constant byte address 0x4 - core index']
  #allocation1 [shape = 'u32[72,128]{1,0:T(1,128)}', space=vmem, size = 0x9000, scoped, tag = 'internal scratch']
  %s0 = inlined_call_operand.vmem [shape: f32[4,8,32], index: 0, kind: input, shape index: {}]
  %s1 = inlined_call_operand.vmem [shape: f32[4,1,8], index: 1, kind: input, shape index: {}]
  %s2 = inlined_call_operand.vmem [shape: f32[4,1,8], index: 2, kind: input, shape index: {}]
  %s3 = inlined_call_operand.vmem [shape: f32[1,32], index: 3, kind: input, shape index: {}]
  %s4 = inlined_call_operand.vmem [shape: f32[1,32], index: 4, kind: input, shape index: {}]
  %s5 = inlined_call_operand.vmem [shape: f32[2,4,32], index: 5, kind: input, shape index: {}]
  %s6 = inlined_call_operand.vmem [shape: f32[2,4,32], index: 6, kind: input, shape index: {}]
  %s7 = inlined_call_operand.vmem [shape: f32[2,32,96], index: 7, kind: input, shape index: {}]
  %s8 = inlined_call_operand.vmem [shape: f32[2,1,96], index: 8, kind: input, shape index: {}]
  %s9 = inlined_call_operand.vmem [shape: f32[2,32,32], index: 9, kind: input, shape index: {}]
  %s10 = inlined_call_operand.vmem [shape: f32[2,1,32], index: 10, kind: input, shape index: {}]
  %s11 = inlined_call_operand.vmem [shape: f32[2,1,32], index: 11, kind: input, shape index: {}]
  %s12 = inlined_call_operand.vmem [shape: f32[2,1,32], index: 12, kind: input, shape index: {}]
  %s13 = inlined_call_operand.vmem [shape: f32[2,32,64], index: 13, kind: input, shape index: {}]
  %s14 = inlined_call_operand.vmem [shape: f32[2,1,64], index: 14, kind: input, shape index: {}]
  %s15 = inlined_call_operand.vmem [shape: f32[2,64,32], index: 15, kind: input, shape index: {}]
  %s16 = inlined_call_operand.vmem [shape: f32[2,1,32], index: 16, kind: input, shape index: {}]
  %s17 = inlined_call_operand.vmem [shape: f32[2,1,32], index: 17, kind: input, shape index: {}]
  %s18 = inlined_call_operand.vmem [shape: f32[2,1,32], index: 18, kind: input, shape index: {}]
  %s19 = inlined_call_operand.vmem [shape: f32[4,1,32], index: 19, kind: output, shape index: {}]
  %s20 = sld [smem:[#allocation0]]
  $region109: #{p_tuningv2_forward.1} parent=0
    _
  %s22 = ssub.s32 1, %s20
  %s23 = scalar_select 0, %s22, %s20
  loop: start=0, step=1, limit=6
  $region2: #{p_tuningv2_forward.1} parent=0 // loop_pre_header
    _
  $region3: #{p_tuningv2_forward.1} parent=0 // loop_header
    %s25 = sphi 0, %s29
    %p26 = scmp.ge.s32.totalorder %s25, 6
    %s35 = sphi 0, %s37
    %s38 = sphi 0, %s35
    %s39 = sphi 0, %s38
    %s55 = sphi 0, %s39
    %s61 = sphi 0, %s63
    %s64 = sphi 0, %s61
    %s65 = sphi 0, %s64
    %s81 = sphi 0, %s65
    %s87 = sphi 0, %s89
    %s90 = sphi 0, %s87
    %s91 = sphi 0, %s90
    %s107 = sphi 0, %s91
    %s111 = sphi 0, %s111
    %s113 = sphi 0, %s111
    %s114 = sphi 0, %s113
    %s128 = sphi 0, %s114
    %s132 = sphi 0, %s132
    %s134 = sphi 0, %s132
    %s135 = sphi 0, %s134
    %s149 = sphi 0, %s135
    %s153 = sphi 0, %s153
    %s155 = sphi 0, %s153
    %s156 = sphi 0, %s155
    %s170 = sphi 0, %s156
    %s174 = sphi 0, %s174
    %s176 = sphi 0, %s174
    %s177 = sphi 0, %s176
    %s191 = sphi 0, %s177
    %s195 = sphi 0, %s195
    %s197 = sphi 0, %s195
    %s198 = sphi 0, %s197
    %s212 = sphi 0, %s198
    %s216 = sphi 0, %s216
    %s218 = sphi 0, %s216
    %s219 = sphi 0, %s218
    %s233 = sphi 0, %s219
    %s237 = sphi 0, %s237
    %s239 = sphi 0, %s237
    %s240 = sphi 0, %s239
    %s254 = sphi 0, %s240
    %s258 = sphi 0, %s258
    %s260 = sphi 0, %s258
    %s261 = sphi 0, %s260
    %s275 = sphi 0, %s261
    %s279 = sphi 0, %s279
    %s281 = sphi 0, %s279
    %s282 = sphi 0, %s281
    %s296 = sphi 0, %s282
    %s300 = sphi 0, %s300
    %s302 = sphi 0, %s300
    %s303 = sphi 0, %s302
    %s317 = sphi 0, %s303
    %s321 = sphi 0, %s321
    %s323 = sphi 0, %s321
    %s324 = sphi 0, %s323
    %s338 = sphi 0, %s324
    %s342 = sphi 0, %s342
    %s344 = sphi 0, %s342
    %s345 = sphi 0, %s344
    %s359 = sphi 0, %s345
    %s363 = sphi 0, %s363
    %s365 = sphi 0, %s363
    %s366 = sphi 0, %s365
    %s380 = sphi 0, %s366
    %s384 = sphi 0, %s384
    %s386 = sphi 0, %s384
    %s387 = sphi 0, %s386
    %s401 = sphi 0, %s387
    %s405 = sphi 0, %s405
    %s407 = sphi 0, %s405
    %s408 = sphi 0, %s407
    %s422 = sphi 0, %s408
    %s426 = sphi 0, %s426
    %s428 = sphi 0, %s426
    %s429 = sphi 0, %s428
    %s443 = sphi 0, %s429
    %s449 = sphi 0, %s451
    %s452 = sphi 0, %s449
    %s453 = sphi 0, %s452
    %s469 = sphi 0, %s453
  $region4: #{p_tuningv2_forward.1} parent=0 // loop_header_branch
    %28 = sbr.rel (%p26) target = $region8
  $region5: #{p_tuningv2_forward.1} parent=0 // loop_body
    %s30 = ssub.s32 %s25, 1
    %s31 = ssub.s32 %s25, 2
    %s32 = sadd.s32 %s25, 1
    %s33 = ssub.s32 %s25, %s32
    %p34 = scmp.eq.s32.totalorder %s33, 0
    %s36 = sadd.s32 %s35, 1
    %s37 = scalar_select %p34, %s35, %s36
    %p40 = pneg %p34
    %p41 = scmp.eq.s32.totalorder %s25, 3
    %p42 = por %p40, %p41
    %p43 = scmp.ne.s32.totalorder %s35, %s38
    %p44 = scmp.eq.s32.totalorder %s25, 0
    %p45 = por %p43, %p44
    %p46 = scmp.ne.s32.totalorder %s35, %s38
    %p47 = scmp.eq.s32.totalorder %s30, 3
    %p48 = por %p46, %p47
    %p49 = scmp.ne.s32.totalorder %s38, %s39
    %p50 = scmp.eq.s32.totalorder %s30, 0
    %p51 = por %p49, %p50
    %p52 = scmp.ne.s32.totalorder %s38, %s39
    %p53 = scmp.eq.s32.totalorder %s31, 3
    %p54 = por %p52, %p53
    %p56 = scmp.ne.s32.totalorder %s39, %s55
    %p57 = scmp.eq.s32.totalorder %s31, 0
    %p58 = por %p56, %p57
    %s59 = ssub.s32 %s25, %s32
    %p60 = scmp.eq.s32.totalorder %s59, 0
    %s62 = sadd.s32 %s61, 1
    %s63 = scalar_select %p60, %s61, %s62
    %p66 = pneg %p60
    %p67 = scmp.eq.s32.totalorder %s25, 3
    %p68 = por %p66, %p67
    %p69 = scmp.ne.s32.totalorder %s61, %s64
    %p70 = scmp.eq.s32.totalorder %s25, 0
    %p71 = por %p69, %p70
    %p72 = scmp.ne.s32.totalorder %s61, %s64
    %p73 = scmp.eq.s32.totalorder %s30, 3
    %p74 = por %p72, %p73
    %p75 = scmp.ne.s32.totalorder %s64, %s65
    %p76 = scmp.eq.s32.totalorder %s30, 0
    %p77 = por %p75, %p76
    %p78 = scmp.ne.s32.totalorder %s64, %s65
    %p79 = scmp.eq.s32.totalorder %s31, 3
    %p80 = por %p78, %p79
    %p82 = scmp.ne.s32.totalorder %s65, %s81
    %p83 = scmp.eq.s32.totalorder %s31, 0
    %p84 = por %p82, %p83
    %s85 = ssub.s32 %s25, %s32
    %p86 = scmp.eq.s32.totalorder %s85, 0
    %s88 = sadd.s32 %s87, 1
    %s89 = scalar_select %p86, %s87, %s88
    %p92 = pneg %p86
    %p93 = scmp.eq.s32.totalorder %s25, 3
    %p94 = por %p92, %p93
    %p95 = scmp.ne.s32.totalorder %s87, %s90
    %p96 = scmp.eq.s32.totalorder %s25, 0
    %p97 = por %p95, %p96
    %p98 = scmp.ne.s32.totalorder %s87, %s90
    %p99 = scmp.eq.s32.totalorder %s30, 3
    %p100 = por %p98, %p99
    %p101 = scmp.ne.s32.totalorder %s90, %s91
    %p102 = scmp.eq.s32.totalorder %s30, 0
    %p103 = por %p101, %p102
    %p104 = scmp.ne.s32.totalorder %s90, %s91
    %p105 = scmp.eq.s32.totalorder %s31, 3
    %p106 = por %p104, %p105
    %p108 = scmp.ne.s32.totalorder %s91, %s107
    %p109 = scmp.eq.s32.totalorder %s31, 0
    %p110 = por %p108, %p109
    %s112 = sadd.s32 %s111, 1
    %p115 = scmp.eq.s32.totalorder %s25, 3
    %p116 = scmp.ne.s32.totalorder %s111, %s113
    %p117 = scmp.eq.s32.totalorder %s25, 0
    %p118 = por %p116, %p117
    %p119 = scmp.ne.s32.totalorder %s111, %s113
    %p120 = scmp.eq.s32.totalorder %s30, 3
    %p121 = por %p119, %p120
    %p122 = scmp.ne.s32.totalorder %s113, %s114
    %p123 = scmp.eq.s32.totalorder %s30, 0
    %p124 = por %p122, %p123
    %p125 = scmp.ne.s32.totalorder %s113, %s114
    %p126 = scmp.eq.s32.totalorder %s31, 3
    %p127 = por %p125, %p126
    %p129 = scmp.ne.s32.totalorder %s114, %s128
    %p130 = scmp.eq.s32.totalorder %s31, 0
    %p131 = por %p129, %p130
    %s133 = sadd.s32 %s132, 1
    %p136 = scmp.eq.s32.totalorder %s25, 3
    %p137 = scmp.ne.s32.totalorder %s132, %s134
    %p138 = scmp.eq.s32.totalorder %s25, 0
    %p139 = por %p137, %p138
    %p140 = scmp.ne.s32.totalorder %s132, %s134
    %p141 = scmp.eq.s32.totalorder %s30, 3
    %p142 = por %p140, %p141
    %p143 = scmp.ne.s32.totalorder %s134, %s135
    %p144 = scmp.eq.s32.totalorder %s30, 0
    %p145 = por %p143, %p144
    %p146 = scmp.ne.s32.totalorder %s134, %s135
    %p147 = scmp.eq.s32.totalorder %s31, 3
    %p148 = por %p146, %p147
    %p150 = scmp.ne.s32.totalorder %s135, %s149
    %p151 = scmp.eq.s32.totalorder %s31, 0
    %p152 = por %p150, %p151
    %s154 = sadd.s32 %s153, 1
    %p157 = scmp.eq.s32.totalorder %s25, 3
    %p158 = scmp.ne.s32.totalorder %s153, %s155
    %p159 = scmp.eq.s32.totalorder %s25, 0
    %p160 = por %p158, %p159
    %p161 = scmp.ne.s32.totalorder %s153, %s155
    %p162 = scmp.eq.s32.totalorder %s30, 3
    %p163 = por %p161, %p162
    %p164 = scmp.ne.s32.totalorder %s155, %s156
    %p165 = scmp.eq.s32.totalorder %s30, 0
    %p166 = por %p164, %p165
    %p167 = scmp.ne.s32.totalorder %s155, %s156
    %p168 = scmp.eq.s32.totalorder %s31, 3
    %p169 = por %p167, %p168
    %p171 = scmp.ne.s32.totalorder %s156, %s170
    %p172 = scmp.eq.s32.totalorder %s31, 0
    %p173 = por %p171, %p172
    %s175 = sadd.s32 %s174, 1
    %p178 = scmp.eq.s32.totalorder %s25, 3
    %p179 = scmp.ne.s32.totalorder %s174, %s176
    %p180 = scmp.eq.s32.totalorder %s25, 0
    %p181 = por %p179, %p180
    %p182 = scmp.ne.s32.totalorder %s174, %s176
    %p183 = scmp.eq.s32.totalorder %s30, 3
    %p184 = por %p182, %p183
    %p185 = scmp.ne.s32.totalorder %s176, %s177
    %p186 = scmp.eq.s32.totalorder %s30, 0
    %p187 = por %p185, %p186
    %p188 = scmp.ne.s32.totalorder %s176, %s177
    %p189 = scmp.eq.s32.totalorder %s31, 3
    %p190 = por %p188, %p189
    %p192 = scmp.ne.s32.totalorder %s177, %s191
    %p193 = scmp.eq.s32.totalorder %s31, 0
    %p194 = por %p192, %p193
    %s196 = sadd.s32 %s195, 1
    %p199 = scmp.eq.s32.totalorder %s25, 3
    %p200 = scmp.ne.s32.totalorder %s195, %s197
    %p201 = scmp.eq.s32.totalorder %s25, 0
    %p202 = por %p200, %p201
    %p203 = scmp.ne.s32.totalorder %s195, %s197
    %p204 = scmp.eq.s32.totalorder %s30, 3
    %p205 = por %p203, %p204
    %p206 = scmp.ne.s32.totalorder %s197, %s198
    %p207 = scmp.eq.s32.totalorder %s30, 0
    %p208 = por %p206, %p207
    %p209 = scmp.ne.s32.totalorder %s197, %s198
    %p210 = scmp.eq.s32.totalorder %s31, 3
    %p211 = por %p209, %p210
    %p213 = scmp.ne.s32.totalorder %s198, %s212
    %p214 = scmp.eq.s32.totalorder %s31, 0
    %p215 = por %p213, %p214
    %s217 = sadd.s32 %s216, 1
    %p220 = scmp.eq.s32.totalorder %s25, 3
    %p221 = scmp.ne.s32.totalorder %s216, %s218
    %p222 = scmp.eq.s32.totalorder %s25, 0
    %p223 = por %p221, %p222
    %p224 = scmp.ne.s32.totalorder %s216, %s218
    %p225 = scmp.eq.s32.totalorder %s30, 3
    %p226 = por %p224, %p225
    %p227 = scmp.ne.s32.totalorder %s218, %s219
    %p228 = scmp.eq.s32.totalorder %s30, 0
    %p229 = por %p227, %p228
    %p230 = scmp.ne.s32.totalorder %s218, %s219
    %p231 = scmp.eq.s32.totalorder %s31, 3
    %p232 = por %p230, %p231
    %p234 = scmp.ne.s32.totalorder %s219, %s233
    %p235 = scmp.eq.s32.totalorder %s31, 0
    %p236 = por %p234, %p235
    %s238 = sadd.s32 %s237, 1
    %p241 = scmp.eq.s32.totalorder %s25, 3
    %p242 = scmp.ne.s32.totalorder %s237, %s239
    %p243 = scmp.eq.s32.totalorder %s25, 0
    %p244 = por %p242, %p243
    %p245 = scmp.ne.s32.totalorder %s237, %s239
    %p246 = scmp.eq.s32.totalorder %s30, 3
    %p247 = por %p245, %p246
    %p248 = scmp.ne.s32.totalorder %s239, %s240
    %p249 = scmp.eq.s32.totalorder %s30, 0
    %p250 = por %p248, %p249
    %p251 = scmp.ne.s32.totalorder %s239, %s240
    %p252 = scmp.eq.s32.totalorder %s31, 3
    %p253 = por %p251, %p252
    %p255 = scmp.ne.s32.totalorder %s240, %s254
    %p256 = scmp.eq.s32.totalorder %s31, 0
    %p257 = por %p255, %p256
    %s259 = sadd.s32 %s258, 1
    %p262 = scmp.eq.s32.totalorder %s25, 3
    %p263 = scmp.ne.s32.totalorder %s258, %s260
    %p264 = scmp.eq.s32.totalorder %s25, 0
    %p265 = por %p263, %p264
    %p266 = scmp.ne.s32.totalorder %s258, %s260
    %p267 = scmp.eq.s32.totalorder %s30, 3
    %p268 = por %p266, %p267
    %p269 = scmp.ne.s32.totalorder %s260, %s261
    %p270 = scmp.eq.s32.totalorder %s30, 0
    %p271 = por %p269, %p270
    %p272 = scmp.ne.s32.totalorder %s260, %s261
    %p273 = scmp.eq.s32.totalorder %s31, 3
    %p274 = por %p272, %p273
    %p276 = scmp.ne.s32.totalorder %s261, %s275
    %p277 = scmp.eq.s32.totalorder %s31, 0
    %p278 = por %p276, %p277
    %s280 = sadd.s32 %s279, 1
    %p283 = scmp.eq.s32.totalorder %s25, 3
    %p284 = scmp.ne.s32.totalorder %s279, %s281
    %p285 = scmp.eq.s32.totalorder %s25, 0
    %p286 = por %p284, %p285
    %p287 = scmp.ne.s32.totalorder %s279, %s281
    %p288 = scmp.eq.s32.totalorder %s30, 3
    %p289 = por %p287, %p288
    %p290 = scmp.ne.s32.totalorder %s281, %s282
    %p291 = scmp.eq.s32.totalorder %s30, 0
    %p292 = por %p290, %p291
    %p293 = scmp.ne.s32.totalorder %s281, %s282
    %p294 = scmp.eq.s32.totalorder %s31, 3
    %p295 = por %p293, %p294
    %p297 = scmp.ne.s32.totalorder %s282, %s296
    %p298 = scmp.eq.s32.totalorder %s31, 0
    %p299 = por %p297, %p298
    %s301 = sadd.s32 %s300, 1
    %p304 = scmp.eq.s32.totalorder %s25, 3
    %p305 = scmp.ne.s32.totalorder %s300, %s302
    %p306 = scmp.eq.s32.totalorder %s25, 0
    %p307 = por %p305, %p306
    %p308 = scmp.ne.s32.totalorder %s300, %s302
    %p309 = scmp.eq.s32.totalorder %s30, 3
    %p310 = por %p308, %p309
    %p311 = scmp.ne.s32.totalorder %s302, %s303
    %p312 = scmp.eq.s32.totalorder %s30, 0
    %p313 = por %p311, %p312
    %p314 = scmp.ne.s32.totalorder %s302, %s303
    %p315 = scmp.eq.s32.totalorder %s31, 3
    %p316 = por %p314, %p315
    %p318 = scmp.ne.s32.totalorder %s303, %s317
    %p319 = scmp.eq.s32.totalorder %s31, 0
    %p320 = por %p318, %p319
    %s322 = sadd.s32 %s321, 1
    %p325 = scmp.eq.s32.totalorder %s25, 3
    %p326 = scmp.ne.s32.totalorder %s321, %s323
    %p327 = scmp.eq.s32.totalorder %s25, 0
    %p328 = por %p326, %p327
    %p329 = scmp.ne.s32.totalorder %s321, %s323
    %p330 = scmp.eq.s32.totalorder %s30, 3
    %p331 = por %p329, %p330
    %p332 = scmp.ne.s32.totalorder %s323, %s324
    %p333 = scmp.eq.s32.totalorder %s30, 0
    %p334 = por %p332, %p333
    %p335 = scmp.ne.s32.totalorder %s323, %s324
    %p336 = scmp.eq.s32.totalorder %s31, 3
    %p337 = por %p335, %p336
    %p339 = scmp.ne.s32.totalorder %s324, %s338
    %p340 = scmp.eq.s32.totalorder %s31, 0
    %p341 = por %p339, %p340
    %s343 = sadd.s32 %s342, 1
    %p346 = scmp.eq.s32.totalorder %s25, 3
    %p347 = scmp.ne.s32.totalorder %s342, %s344
    %p348 = scmp.eq.s32.totalorder %s25, 0
    %p349 = por %p347, %p348
    %p350 = scmp.ne.s32.totalorder %s342, %s344
    %p351 = scmp.eq.s32.totalorder %s30, 3
    %p352 = por %p350, %p351
    %p353 = scmp.ne.s32.totalorder %s344, %s345
    %p354 = scmp.eq.s32.totalorder %s30, 0
    %p355 = por %p353, %p354
    %p356 = scmp.ne.s32.totalorder %s344, %s345
    %p357 = scmp.eq.s32.totalorder %s31, 3
    %p358 = por %p356, %p357
    %p360 = scmp.ne.s32.totalorder %s345, %s359
    %p361 = scmp.eq.s32.totalorder %s31, 0
    %p362 = por %p360, %p361
    %s364 = sadd.s32 %s363, 1
    %p367 = scmp.eq.s32.totalorder %s25, 3
    %p368 = scmp.ne.s32.totalorder %s363, %s365
    %p369 = scmp.eq.s32.totalorder %s25, 0
    %p370 = por %p368, %p369
    %p371 = scmp.ne.s32.totalorder %s363, %s365
    %p372 = scmp.eq.s32.totalorder %s30, 3
    %p373 = por %p371, %p372
    %p374 = scmp.ne.s32.totalorder %s365, %s366
    %p375 = scmp.eq.s32.totalorder %s30, 0
    %p376 = por %p374, %p375
    %p377 = scmp.ne.s32.totalorder %s365, %s366
    %p378 = scmp.eq.s32.totalorder %s31, 3
    %p379 = por %p377, %p378
    %p381 = scmp.ne.s32.totalorder %s366, %s380
    %p382 = scmp.eq.s32.totalorder %s31, 0
    %p383 = por %p381, %p382
    %s385 = sadd.s32 %s384, 1
    %p388 = scmp.eq.s32.totalorder %s25, 3
    %p389 = scmp.ne.s32.totalorder %s384, %s386
    %p390 = scmp.eq.s32.totalorder %s25, 0
    %p391 = por %p389, %p390
    %p392 = scmp.ne.s32.totalorder %s384, %s386
    %p393 = scmp.eq.s32.totalorder %s30, 3
    %p394 = por %p392, %p393
    %p395 = scmp.ne.s32.totalorder %s386, %s387
    %p396 = scmp.eq.s32.totalorder %s30, 0
    %p397 = por %p395, %p396
    %p398 = scmp.ne.s32.totalorder %s386, %s387
    %p399 = scmp.eq.s32.totalorder %s31, 3
    %p400 = por %p398, %p399
    %p402 = scmp.ne.s32.totalorder %s387, %s401
    %p403 = scmp.eq.s32.totalorder %s31, 0
    %p404 = por %p402, %p403
    %s406 = sadd.s32 %s405, 1
    %p409 = scmp.eq.s32.totalorder %s25, 3
    %p410 = scmp.ne.s32.totalorder %s405, %s407
    %p411 = scmp.eq.s32.totalorder %s25, 0
    %p412 = por %p410, %p411
    %p413 = scmp.ne.s32.totalorder %s405, %s407
    %p414 = scmp.eq.s32.totalorder %s30, 3
    %p415 = por %p413, %p414
    %p416 = scmp.ne.s32.totalorder %s407, %s408
    %p417 = scmp.eq.s32.totalorder %s30, 0
    %p418 = por %p416, %p417
    %p419 = scmp.ne.s32.totalorder %s407, %s408
    %p420 = scmp.eq.s32.totalorder %s31, 3
    %p421 = por %p419, %p420
    %p423 = scmp.ne.s32.totalorder %s408, %s422
    %p424 = scmp.eq.s32.totalorder %s31, 0
    %p425 = por %p423, %p424
    %s427 = sadd.s32 %s426, 1
    %p430 = scmp.eq.s32.totalorder %s25, 3
    %p431 = scmp.ne.s32.totalorder %s426, %s428
    %p432 = scmp.eq.s32.totalorder %s25, 0
    %p433 = por %p431, %p432
    %p434 = scmp.ne.s32.totalorder %s426, %s428
    %p435 = scmp.eq.s32.totalorder %s30, 3
    %p436 = por %p434, %p435
    %p437 = scmp.ne.s32.totalorder %s428, %s429
    %p438 = scmp.eq.s32.totalorder %s30, 0
    %p439 = por %p437, %p438
    %p440 = scmp.ne.s32.totalorder %s428, %s429
    %p441 = scmp.eq.s32.totalorder %s31, 3
    %p442 = por %p440, %p441
    %p444 = scmp.ne.s32.totalorder %s429, %s443
    %p445 = scmp.eq.s32.totalorder %s31, 0
    %p446 = por %p444, %p445
    %s447 = ssub.s32 %s25, %s32
    %p448 = scmp.eq.s32.totalorder %s447, 0
    %s450 = sadd.s32 %s449, 1
    %s451 = scalar_select %p448, %s449, %s450
    %p454 = pneg %p448
    %p455 = scmp.eq.s32.totalorder %s25, 3
    %p456 = por %p454, %p455
    %p457 = scmp.ne.s32.totalorder %s449, %s452
    %p458 = scmp.eq.s32.totalorder %s25, 0
    %p459 = por %p457, %p458
    %p460 = scmp.ne.s32.totalorder %s449, %s452
    %p461 = scmp.eq.s32.totalorder %s30, 3
    %p462 = por %p460, %p461
    %p463 = scmp.ne.s32.totalorder %s452, %s453
    %p464 = scmp.eq.s32.totalorder %s30, 0
    %p465 = por %p463, %p464
    %p466 = scmp.ne.s32.totalorder %s452, %s453
    %p467 = scmp.eq.s32.totalorder %s31, 3
    %p468 = por %p466, %p467
    %p470 = scmp.ne.s32.totalorder %s453, %s469
    %p471 = scmp.eq.s32.totalorder %s31, 0
    %p472 = por %p470, %p471
    %p473 = scmp.le.s32.totalorder 1, %s25
    %p474 = scmp.lt.s32.totalorder %s25, 5
    %p475 = pnand %p473, %p474
    %p476 = pneg %p475
    // Predicated region
    $region9: #{p_tuningv2_forward.1} parent=5 // pred_check
      _
    $region10: #{p_tuningv2_forward.1} parent=5 // pred_check_branch
      %478 = sbr.rel (%p475) target = $region12
    $region11: #{p_tuningv2_forward.1} parent=5 // pred_region
      %s479 = ssub.s32 %s25, 1
      // Predicated region
      $region13: #{p_tuningv2_forward.1} parent=11 // pred_check
        %p480 = pneg %p124
      $region14: #{p_tuningv2_forward.1} parent=11 // pred_check_branch
        %482 = sbr.rel (%p480) target = $region16
      $region15: #{p_tuningv2_forward.1} parent=11 // pred_region
        _
      $region16: #{p_tuningv2_forward.1} parent=11 // pred_fallthru
        _
      // Predicated region
      $region17: #{p_tuningv2_forward.1} parent=11 // pred_check
        %p483 = pneg %p145
      $region18: #{p_tuningv2_forward.1} parent=11 // pred_check_branch
        %485 = sbr.rel (%p483) target = $region20
      $region19: #{p_tuningv2_forward.1} parent=11 // pred_region
        _
      $region20: #{p_tuningv2_forward.1} parent=11 // pred_fallthru
        _
      // Predicated region
      $region21: #{p_tuningv2_forward.1} parent=11 // pred_check
        %p486 = pneg %p166
      $region22: #{p_tuningv2_forward.1} parent=11 // pred_check_branch
        %488 = sbr.rel (%p486) target = $region24
      $region23: #{p_tuningv2_forward.1} parent=11 // pred_region
        _
      $region24: #{p_tuningv2_forward.1} parent=11 // pred_fallthru
        _
      // Predicated region
      $region25: #{p_tuningv2_forward.1} parent=11 // pred_check
        %p489 = pneg %p187
      $region26: #{p_tuningv2_forward.1} parent=11 // pred_check_branch
        %491 = sbr.rel (%p489) target = $region28
      $region27: #{p_tuningv2_forward.1} parent=11 // pred_region
        _
      $region28: #{p_tuningv2_forward.1} parent=11 // pred_fallthru
        _
      // Predicated region
      $region29: #{p_tuningv2_forward.1} parent=11 // pred_check
        %p492 = pneg %p208
      $region30: #{p_tuningv2_forward.1} parent=11 // pred_check_branch
        %494 = sbr.rel (%p492) target = $region32
      $region31: #{p_tuningv2_forward.1} parent=11 // pred_region
        _
      $region32: #{p_tuningv2_forward.1} parent=11 // pred_fallthru
        _
      // Predicated region
      $region33: #{p_tuningv2_forward.1} parent=11 // pred_check
        %p495 = pneg %p229
      $region34: #{p_tuningv2_forward.1} parent=11 // pred_check_branch
        %497 = sbr.rel (%p495) target = $region36
      $region35: #{p_tuningv2_forward.1} parent=11 // pred_region
        _
      $region36: #{p_tuningv2_forward.1} parent=11 // pred_fallthru
        _
      // Predicated region
      $region37: #{p_tuningv2_forward.1} parent=11 // pred_check
        %p498 = pneg %p250
      $region38: #{p_tuningv2_forward.1} parent=11 // pred_check_branch
        %500 = sbr.rel (%p498) target = $region40
      $region39: #{p_tuningv2_forward.1} parent=11 // pred_region
        _
      $region40: #{p_tuningv2_forward.1} parent=11 // pred_fallthru
        _
      // Predicated region
      $region41: #{p_tuningv2_forward.1} parent=11 // pred_check
        %p501 = pneg %p271
      $region42: #{p_tuningv2_forward.1} parent=11 // pred_check_branch
        %503 = sbr.rel (%p501) target = $region44
      $region43: #{p_tuningv2_forward.1} parent=11 // pred_region
        _
      $region44: #{p_tuningv2_forward.1} parent=11 // pred_fallthru
        _
      // Predicated region
      $region45: #{p_tuningv2_forward.1} parent=11 // pred_check
        %p504 = pneg %p292
      $region46: #{p_tuningv2_forward.1} parent=11 // pred_check_branch
        %506 = sbr.rel (%p504) target = $region48
      $region47: #{p_tuningv2_forward.1} parent=11 // pred_region
        _
      $region48: #{p_tuningv2_forward.1} parent=11 // pred_fallthru
        _
      // Predicated region
      $region49: #{p_tuningv2_forward.1} parent=11 // pred_check
        %p507 = pneg %p313
      $region50: #{p_tuningv2_forward.1} parent=11 // pred_check_branch
        %509 = sbr.rel (%p507) target = $region52
      $region51: #{p_tuningv2_forward.1} parent=11 // pred_region
        _
      $region52: #{p_tuningv2_forward.1} parent=11 // pred_fallthru
        _
      // Predicated region
      $region53: #{p_tuningv2_forward.1} parent=11 // pred_check
        %p510 = pneg %p334
      $region54: #{p_tuningv2_forward.1} parent=11 // pred_check_branch
        %512 = sbr.rel (%p510) target = $region56
      $region55: #{p_tuningv2_forward.1} parent=11 // pred_region
        _
      $region56: #{p_tuningv2_forward.1} parent=11 // pred_fallthru
        _
      // Predicated region
      $region57: #{p_tuningv2_forward.1} parent=11 // pred_check
        %p513 = pneg %p355
      $region58: #{p_tuningv2_forward.1} parent=11 // pred_check_branch
        %515 = sbr.rel (%p513) target = $region60
      $region59: #{p_tuningv2_forward.1} parent=11 // pred_region
        _
      $region60: #{p_tuningv2_forward.1} parent=11 // pred_fallthru
        _
      // Predicated region
      $region61: #{p_tuningv2_forward.1} parent=11 // pred_check
        %p516 = pneg %p376
      $region62: #{p_tuningv2_forward.1} parent=11 // pred_check_branch
        %518 = sbr.rel (%p516) target = $region64
      $region63: #{p_tuningv2_forward.1} parent=11 // pred_region
        _
      $region64: #{p_tuningv2_forward.1} parent=11 // pred_fallthru
        _
      // Predicated region
      $region65: #{p_tuningv2_forward.1} parent=11 // pred_check
        %p519 = pneg %p397
      $region66: #{p_tuningv2_forward.1} parent=11 // pred_check_branch
        %521 = sbr.rel (%p519) target = $region68
      $region67: #{p_tuningv2_forward.1} parent=11 // pred_region
        _
      $region68: #{p_tuningv2_forward.1} parent=11 // pred_fallthru
        _
      // Predicated region
      $region69: #{p_tuningv2_forward.1} parent=11 // pred_check
        %p522 = pneg %p418
      $region70: #{p_tuningv2_forward.1} parent=11 // pred_check_branch
        %524 = sbr.rel (%p522) target = $region72
      $region71: #{p_tuningv2_forward.1} parent=11 // pred_region
        _
      $region72: #{p_tuningv2_forward.1} parent=11 // pred_fallthru
        _
      // Predicated region
      $region73: #{p_tuningv2_forward.1} parent=11 // pred_check
        %p525 = pneg %p439
      $region74: #{p_tuningv2_forward.1} parent=11 // pred_check_branch
        %527 = sbr.rel (%p525) target = $region76
      $region75: #{p_tuningv2_forward.1} parent=11 // pred_region
        _
      $region76: #{p_tuningv2_forward.1} parent=11 // pred_fallthru
        _
    $region12: #{p_tuningv2_forward.1} parent=5 // pred_fallthru
      _
    %p528 = scmp.lt.s32.totalorder %s25, 4
    // Predicated region
    $region77: #{p_tuningv2_forward.1} parent=5 // pred_check
      %p529 = pneg %p528
    $region78: #{p_tuningv2_forward.1} parent=5 // pred_check_branch
      %531 = sbr.rel (%p529) target = $region80
    $region79: #{p_tuningv2_forward.1} parent=5 // pred_region
      // Predicated region
      $region81: #{p_tuningv2_forward.1} parent=79 // pred_check
        %p532 = pneg %p45
      $region82: #{p_tuningv2_forward.1} parent=79 // pred_check_branch
        %534 = sbr.rel (%p532) target = $region84
      $region83: #{p_tuningv2_forward.1} parent=79 // pred_region
        %p535 = scmp.lt.s32.totalorder %s25, 3
        %s536 = scalar_select %p535, %s25, 3
        %s537 = smul.addr %s536, 8
        %s538 = scalar_lea.vmem %s0, %s537
      $region84: #{p_tuningv2_forward.1} parent=79 // pred_fallthru
        _
      // Predicated region
      $region85: #{p_tuningv2_forward.1} parent=79 // pred_check
        %p539 = pneg %p71
      $region86: #{p_tuningv2_forward.1} parent=79 // pred_check_branch
        %541 = sbr.rel (%p539) target = $region88
      $region87: #{p_tuningv2_forward.1} parent=79 // pred_region
        %p542 = scmp.lt.s32.totalorder %s25, 3
        %s543 = scalar_select %p542, %s25, 3
        %s544 = scalar_lea.vmem %s1, %s543
      $region88: #{p_tuningv2_forward.1} parent=79 // pred_fallthru
        _
      // Predicated region
      $region89: #{p_tuningv2_forward.1} parent=79 // pred_check
        %p545 = pneg %p97
      $region90: #{p_tuningv2_forward.1} parent=79 // pred_check_branch
        %547 = sbr.rel (%p545) target = $region92
      $region91: #{p_tuningv2_forward.1} parent=79 // pred_region
        %p548 = scmp.lt.s32.totalorder %s25, 3
        %s549 = scalar_select %p548, %s25, 3
        %s550 = scalar_lea.vmem %s2, %s549
      $region92: #{p_tuningv2_forward.1} parent=79 // pred_fallthru
        _
    $region80: #{p_tuningv2_forward.1} parent=5 // pred_fallthru
      _
    %p551 = scmp.le.s32.totalorder 1, %s25
    %p552 = scmp.lt.s32.totalorder %s25, 5
    %p553 = pnand %p551, %p552
    %p554 = pneg %p553
    // Predicated region
    $region93: #{p_tuningv2_forward.1} parent=5 // pred_check
      _
    $region94: #{p_tuningv2_forward.1} parent=5 // pred_check_branch
      %556 = sbr.rel (%p553) target = $region96
    $region95: #{p_tuningv2_forward.1} parent=5 // pred_region
      %s557 = ssub.s32 %s25, 1
      %p558 = scmp.lt.s32.totalorder %s30, 3
      %s559 = scalar_select %p558, %s30, 3
      %s560 = smul.addr %s559, 8
      %s561 = scalar_lea.vmem %s0, %s560
      %p562 = pneg %p51
      %p563 = pneg %p48
      %p564 = scmp.lt.s32.totalorder %s30, 3
      %s565 = scalar_select %p564, %s30, 3
      %s566 = scalar_lea.vmem %s1, %s565
      %p567 = pneg %p77
      %p568 = pneg %p74
      %p569 = scmp.lt.s32.totalorder %s30, 3
      %s570 = scalar_select %p569, %s30, 3
      %s571 = scalar_lea.vmem %s2, %s570
      %p572 = pneg %p103
      %p573 = pneg %p100
      %p574 = pneg %p124
      %p575 = pneg %p121
      %p576 = pneg %p145
      %p577 = pneg %p142
      %p578 = pneg %p166
      %p579 = pneg %p163
      %p580 = pneg %p187
      %p581 = pneg %p184
      %p582 = pneg %p208
      %p583 = pneg %p205
      %p584 = pneg %p229
      %p585 = pneg %p226
      %p586 = pneg %p250
      %p587 = pneg %p247
      %p588 = pneg %p271
      %p589 = pneg %p268
      %p590 = pneg %p292
      %p591 = pneg %p289
      %p592 = pneg %p313
      %p593 = pneg %p310
      %p594 = pneg %p334
      %p595 = pneg %p331
      %p596 = pneg %p355
      %p597 = pneg %p352
      %p598 = pneg %p376
      %p599 = pneg %p373
      %p600 = pneg %p397
      %p601 = pneg %p394
      %p602 = pneg %p418
      %p603 = pneg %p415
      %p604 = pneg %p439
      %p605 = pneg %p436
      %p606 = pneg %p465
      %p607 = pneg %p462
      %p608 = scmp.lt.s32.totalorder %s30, 3
      %s609 = scalar_select %p608, %s30, 3
      %s610 = scalar_lea.vmem %s19, %s609
      %p611 = scmp.lt.s32.totalorder %s30, 3
      %s612 = scalar_select %p611, %s30, 3
      %s613 = smul.addr %s612, 8
      %s614 = scalar_lea.vmem %s0, %s613
      %p615 = scmp.lt.s32.totalorder %s30, 3
      %s616 = scalar_select %p615, %s30, 3
      %s617 = scalar_lea.vmem %s1, %s616
      %p618 = scmp.lt.s32.totalorder %s30, 3
      %s619 = scalar_select %p618, %s30, 3
      %s620 = scalar_lea.vmem %s2, %s619
      %p621 = scmp.lt.s32.totalorder %s30, 3
      %s622 = scalar_select %p621, %s30, 3
      %s623 = scalar_lea.vmem %s19, %s622
      %v624 = vld [vmem:[%s617] sm:$0x1]
      %v625 = vld [vmem:[%s614] sm:$0xff]
      %v626 = vld [vmem:[%s3] sm:$0x1]
      %v627 = vld [vmem:[%s4] sm:$0x1]
      %vm628 = vcmask 261120
      %v629 = vsel %vm628, %v625, 0.0
      %630 = vadd.xlane.f32.xlu0 %v629
      %v631 = vpop.xlane.xlu0 %630
      %v632 = vrcp.pop 32.0
      %v633 = vmul.f32 32.0, %v632
      %v634 = vsub.f32 1.0, %v633
      %v635 = vmul.f32 %v632, %v634
      %v636 = vadd.f32 %v632, %v635
      %vm637 = vweird.f32 %v632
      %v638 = vsel %vm637, %v632, %v636
      %v639 = vmul.f32 %v631, %v638
      %v640 = vsub.f32 %v625, %v639
      %v641 = vmul.f32 %v640, %v640
      %v642 = vsel %vm628, %v641, 0.0
      %643 = vadd.xlane.f32.xlu0 %v642
      %v644 = vpop.xlane.xlu0 %643
      %v645 = vmul.f32 %v644, %v638
      %v646 = vadd.f32 %v645, 1e-05
      %v647 = vrsqrt.pop %v646
      %v648 = vmul.f32 %v647, %v646
      %v649 = vmul.f32 %v648, %v647
      %v650 = vmul.f32 0.5, %v649
      %v651 = vsub.f32 1.5, %v650
      %v652 = vmul.f32 %v647, %v651
      %vm653 = vweird.f32 %v646
      %vm654 = vweird.f32 %v647
      %vm655 = vmor %vm653, %vm654
      %v656 = vsel %vm655, %v647, %v652
      %v657 = vmul.f32 %v640, %v656
      %v659 = vperm.slane %v626, 0
      %v661 = vmul.f32 %v657, %v659
      %v663 = vperm.slane %v627, 0
      %v665 = vadd.f32 %v661, %v663
      %v666 = vld [vmem:[%s7] sm:$0xff]
      %v667 = vld [vmem:[%s7 + $0x8] sm:$0xff]
      %v668 = vld [vmem:[%s7 + $0x10] sm:$0xff]
      %v669 = vld [vmem:[%s7 + $0x18] sm:$0xff]
      %v670 = vld [vmem:[%s8] sm:$0x1]
      %v672 = vperm.slane %v670, 0
      %v675 = vsel %vm628, %v665, 0
      %677 = vmatpush.msra.mxu0 0.0
      %678 = vmatpush.msra.mxu0 0.0
      %679 = vmatpush.msra.mxu0 0.0
      %680 = vmatpush.msra.mxu0 0.0
      %681 = vmatpush.msra.mxu0 0.0
      %682 = vmatpush.msra.mxu0 0.0
      %683 = vmatpush.msra.mxu0 0.0
      %684 = vmatpush.msra.mxu0 0.0
      %685 = vmatpush.msra.mxu0 0.0
      %686 = vmatpush.msra.mxu0 0.0
      %687 = vmatpush.msra.mxu0 0.0
      %688 = vmatpush.msra.mxu0 0.0
      %689 = vmatpush.msra.mxu0 %v669
      %690 = vmatpush.msra.mxu0 %v668
      %691 = vmatpush.msra.mxu0 %v667
      %692 = vmatpush.msra.mxu0 %v666
      %693 = vmatmul.f32.gmra.mxu0 %v675
      %v694 = vpop.f32.mrf.mxu0
      %v695 = vadd.f32 %v672, %v694
      %696 = vdwg.mxu0
      %v697 = vld [vmem:[%s5] sm:$0xf]
      %v698 = vld [vmem:[%s6] sm:$0xf]
      %v699 = vld [vmem:[%s9] sm:$0xff]
      %v700 = vld [vmem:[%s9 + $0x8] sm:$0xff]
      %v701 = vld [vmem:[%s9 + $0x10] sm:$0xff]
      %v702 = vld [vmem:[%s9 + $0x18] sm:$0xff]
      %v703 = vld [vmem:[%s10] sm:$0x1]
      %vm704 = vcmask 64512
      %v706 = vsel %vm704, %v695, 0
      %v709 = vsel %vm704, %v697, 0
      %711 = vmatpush.xpose.msra.mxu0 0.0
      %712 = vmatpush.xpose.msra.mxu0 0.0
      %713 = vmatpush.xpose.msra.mxu0 0.0
      %714 = vmatpush.xpose.msra.mxu0 0.0
      %715 = vmatpush.xpose.msra.mxu0 0.0
      %716 = vmatpush.xpose.msra.mxu0 0.0
      %717 = vmatpush.xpose.msra.mxu0 0.0
      %718 = vmatpush.xpose.msra.mxu0 0.0
      %719 = vmatpush.xpose.msra.mxu0 0.0
      %720 = vmatpush.xpose.msra.mxu0 0.0
      %721 = vmatpush.xpose.msra.mxu0 0.0
      %722 = vmatpush.xpose.msra.mxu0 0.0
      %723 = vmatpush.xpose.msra.mxu0 0.0
      %724 = vmatpush.xpose.msra.mxu0 0.0
      %725 = vmatpush.xpose.msra.mxu0 0.0
      %726 = vmatpush.xpose.msra.mxu0 %v709
      %727 = vmatmul.f32.gmra.mxu0 %v706
      %v728 = vpop.f32.mrf.mxu0
      %v729 = vadd.f32 0.0, %v728
      %730 = vdwg.mxu0
      %v731 = vmul.f32 %v729, 0.35355338
      %732 = vrot.lane.b32.xlu0 %v695, 96
      %v733 = vpop.permute.xlu0 %732
      %v734 = vsel %vm704, %v733, 0
      %736 = vmatpush.xpose.msra.mxu0 0.0
      %737 = vmatpush.xpose.msra.mxu0 0.0
      %738 = vmatpush.xpose.msra.mxu0 0.0
      %739 = vmatpush.xpose.msra.mxu0 0.0
      %740 = vmatpush.xpose.msra.mxu0 0.0
      %741 = vmatpush.xpose.msra.mxu0 0.0
      %742 = vmatpush.xpose.msra.mxu0 0.0
      %743 = vmatpush.xpose.msra.mxu0 0.0
      %744 = vmatpush.xpose.msra.mxu0 0.0
      %745 = vmatpush.xpose.msra.mxu0 0.0
      %746 = vmatpush.xpose.msra.mxu0 0.0
      %747 = vmatpush.xpose.msra.mxu0 0.0
      %748 = vmatpush.xpose.msra.mxu0 0.0
      %749 = vmatpush.xpose.msra.mxu0 0.0
      %750 = vmatpush.xpose.msra.mxu0 0.0
      %751 = vmatpush.xpose.msra.mxu0 %v734
      %752 = vmatmul.f32.gmra.mxu0 %v706
      %v753 = vpop.f32.mrf.mxu0
      %v754 = vadd.f32 0.0, %v753
      %755 = vdwg.mxu0
      %v756 = vmul.f32 %v754, 0.35355338
      %v758 = vperm.slane %v624, 0
      %v760 = vadd.f32 %v756, %v758
      %vm761 = vcmask 31744
      %v762 = vsel %vm761, %v731, -inf
      %763 = vmax.xlane.f32.xlu0 %v762
      %v764 = vpop.xlane.xlu0 %763
      %v765 = vsel %vm704, %v760, -inf
      %766 = vmax.xlane.f32.xlu0 %v765
      %v767 = vpop.xlane.xlu0 %766
      %v768 = vmax.f32 %v764, %v767
      %v769 = vsub.f32 %v731, %v768
      %v770 = vmul.f32 %v769, 1.442695
      %v771 = vpow.pop %v770
      %v772 = vsub.f32 %v760, %v768
      %v773 = vmul.f32 %v772, 1.442695
      %v774 = vpow.pop %v773
      %v775 = vsel %vm761, %v771, 0.0
      %776 = vadd.xlane.f32.xlu0 %v775
      %v777 = vpop.xlane.xlu0 %776
      %v778 = vsel %vm704, %v774, 0.0
      %779 = vadd.xlane.f32.xlu0 %v778
      %v780 = vpop.xlane.xlu0 %779
      %v781 = vadd.f32 %v777, %v780
      %v782 = vrcp.pop %v781
      %783 = vrot.lane.b32.xlu0 %v695, 64
      %v784 = vpop.permute.xlu0 %783
      %v787 = vsel %vm704, %v774, 0
      %789 = vmatpush.msra.mxu0 0.0
      %790 = vmatpush.msra.mxu0 0.0
      %791 = vmatpush.msra.mxu0 0.0
      %792 = vmatpush.msra.mxu0 0.0
      %793 = vmatpush.msra.mxu0 0.0
      %794 = vmatpush.msra.mxu0 0.0
      %795 = vmatpush.msra.mxu0 0.0
      %796 = vmatpush.msra.mxu0 0.0
      %797 = vmatpush.msra.mxu0 0.0
      %798 = vmatpush.msra.mxu0 0.0
      %799 = vmatpush.msra.mxu0 0.0
      %800 = vmatpush.msra.mxu0 0.0
      %801 = vmatpush.msra.mxu0 0.0
      %802 = vmatpush.msra.mxu0 0.0
      %803 = vmatpush.msra.mxu0 0.0
      %804 = vmatpush.msra.mxu0 %v784
      %805 = vmatmul.f32.gmra.mxu0 %v787
      %v806 = vpop.f32.mrf.mxu0
      %v807 = vadd.f32 0.0, %v806
      %808 = vdwg.mxu0
      %v810 = vsel %vm761, %v771, 0
      %vm812 = vcmask 1043456
      %v814 = vsel %vm812, %v698, 0
      %816 = vmatpush.msra.mxu0 0.0
      %817 = vmatpush.msra.mxu0 0.0
      %818 = vmatpush.msra.mxu0 0.0
      %819 = vmatpush.msra.mxu0 0.0
      %820 = vmatpush.msra.mxu0 0.0
      %821 = vmatpush.msra.mxu0 0.0
      %822 = vmatpush.msra.mxu0 0.0
      %823 = vmatpush.msra.mxu0 0.0
      %824 = vmatpush.msra.mxu0 0.0
      %825 = vmatpush.msra.mxu0 0.0
      %826 = vmatpush.msra.mxu0 0.0
      %827 = vmatpush.msra.mxu0 0.0
      %828 = vmatpush.msra.mxu0 0.0
      %829 = vmatpush.msra.mxu0 0.0
      %830 = vmatpush.msra.mxu0 0.0
      %831 = vmatpush.msra.mxu0 %v814
      %832 = vmatmul.f32.gmra.mxu0 %v810
      %v833 = vpop.f32.mrf.mxu0
      %v834 = vadd.f32 %v807, %v833
      %835 = vdwg.mxu0
      %v836 = vmul.f32 %v834, %v782
      %v838 = vsel %vm704, %v836, 0
      %840 = vmatpush.msra.mxu0 0.0
      %841 = vmatpush.msra.mxu0 0.0
      %842 = vmatpush.msra.mxu0 0.0
      %843 = vmatpush.msra.mxu0 0.0
      %844 = vmatpush.msra.mxu0 0.0
      %845 = vmatpush.msra.mxu0 0.0
      %846 = vmatpush.msra.mxu0 0.0
      %847 = vmatpush.msra.mxu0 0.0
      %848 = vmatpush.msra.mxu0 0.0
      %849 = vmatpush.msra.mxu0 0.0
      %850 = vmatpush.msra.mxu0 0.0
      %851 = vmatpush.msra.mxu0 0.0
      %852 = vmatpush.msra.mxu0 0.0
      %853 = vmatpush.msra.mxu0 0.0
      %854 = vmatpush.msra.mxu0 0.0
      %855 = vmatpush.msra.mxu0 %v699
      %856 = vmatmul.f32.gmra.mxu0 %v838
      %v857 = vpop.f32.mrf.mxu0
      %v858 = vadd.f32 0.0, %v857
      %859 = vdwg.mxu0
      %v861 = vperm.slane %v703, 0
      %v863 = vadd.f32 %v861, %v858
      %864 = vrot.lane.b32.xlu0 %v695, 120
      %v865 = vpop.permute.xlu0 %864
      %866 = vrot.lane.b32.xlu0 %v697, 120
      %v867 = vpop.permute.xlu0 %866
      %v868 = vsel %vm704, %v865, 0
      %v870 = vsel %vm704, %v867, 0
      %872 = vmatpush.xpose.msra.mxu0 0.0
      %873 = vmatpush.xpose.msra.mxu0 0.0
      %874 = vmatpush.xpose.msra.mxu0 0.0
      %875 = vmatpush.xpose.msra.mxu0 0.0
      %876 = vmatpush.xpose.msra.mxu0 0.0
      %877 = vmatpush.xpose.msra.mxu0 0.0
      %878 = vmatpush.xpose.msra.mxu0 0.0
      %879 = vmatpush.xpose.msra.mxu0 0.0
      %880 = vmatpush.xpose.msra.mxu0 0.0
      %881 = vmatpush.xpose.msra.mxu0 0.0
      %882 = vmatpush.xpose.msra.mxu0 0.0
      %883 = vmatpush.xpose.msra.mxu0 0.0
      %884 = vmatpush.xpose.msra.mxu0 0.0
      %885 = vmatpush.xpose.msra.mxu0 0.0
      %886 = vmatpush.xpose.msra.mxu0 0.0
      %887 = vmatpush.xpose.msra.mxu0 %v870
      %888 = vmatmul.f32.gmra.mxu0 %v868
      %v889 = vpop.f32.mrf.mxu0
      %v890 = vadd.f32 0.0, %v889
      %891 = vdwg.mxu0
      %v892 = vmul.f32 %v890, 0.35355338
      %893 = vrot.lane.b32.xlu0 %v695, 88
      %v894 = vpop.permute.xlu0 %893
      %v895 = vsel %vm704, %v894, 0
      %897 = vmatpush.xpose.msra.mxu0 0.0
      %898 = vmatpush.xpose.msra.mxu0 0.0
      %899 = vmatpush.xpose.msra.mxu0 0.0
      %900 = vmatpush.xpose.msra.mxu0 0.0
      %901 = vmatpush.xpose.msra.mxu0 0.0
      %902 = vmatpush.xpose.msra.mxu0 0.0
      %903 = vmatpush.xpose.msra.mxu0 0.0
      %904 = vmatpush.xpose.msra.mxu0 0.0
      %905 = vmatpush.xpose.msra.mxu0 0.0
      %906 = vmatpush.xpose.msra.mxu0 0.0
      %907 = vmatpush.xpose.msra.mxu0 0.0
      %908 = vmatpush.xpose.msra.mxu0 0.0
      %909 = vmatpush.xpose.msra.mxu0 0.0
      %910 = vmatpush.xpose.msra.mxu0 0.0
      %911 = vmatpush.xpose.msra.mxu0 0.0
      %912 = vmatpush.xpose.msra.mxu0 %v895
      %913 = vmatmul.f32.gmra.mxu0 %v868
      %v914 = vpop.f32.mrf.mxu0
      %v915 = vadd.f32 0.0, %v914
      %916 = vdwg.mxu0
      %v917 = vmul.f32 %v915, 0.35355338
      %v918 = vadd.f32 %v917, %v758
      %v919 = vsel %vm761, %v892, -inf
      %920 = vmax.xlane.f32.xlu0 %v919
      %v921 = vpop.xlane.xlu0 %920
      %v922 = vsel %vm704, %v918, -inf
      %923 = vmax.xlane.f32.xlu0 %v922
      %v924 = vpop.xlane.xlu0 %923
      %v925 = vmax.f32 %v921, %v924
      %v926 = vsub.f32 %v892, %v925
      %v927 = vmul.f32 %v926, 1.442695
      %v928 = vpow.pop %v927
      %v929 = vsub.f32 %v918, %v925
      %v930 = vmul.f32 %v929, 1.442695
      %v931 = vpow.pop %v930
      %v932 = vsel %vm761, %v928, 0.0
      %933 = vadd.xlane.f32.xlu0 %v932
      %v934 = vpop.xlane.xlu0 %933
      %v935 = vsel %vm704, %v931, 0.0
      %936 = vadd.xlane.f32.xlu0 %v935
      %v937 = vpop.xlane.xlu0 %936
      %v938 = vadd.f32 %v934, %v937
      %v939 = vrcp.pop %v938
      %940 = vrot.lane.b32.xlu0 %v695, 56
      %v941 = vpop.permute.xlu0 %940
      %v944 = vsel %vm704, %v931, 0
      %946 = vmatpush.msra.mxu0 0.0
      %947 = vmatpush.msra.mxu0 0.0
      %948 = vmatpush.msra.mxu0 0.0
      %949 = vmatpush.msra.mxu0 0.0
      %950 = vmatpush.msra.mxu0 0.0
      %951 = vmatpush.msra.mxu0 0.0
      %952 = vmatpush.msra.mxu0 0.0
      %953 = vmatpush.msra.mxu0 0.0
      %954 = vmatpush.msra.mxu0 0.0
      %955 = vmatpush.msra.mxu0 0.0
      %956 = vmatpush.msra.mxu0 0.0
      %957 = vmatpush.msra.mxu0 0.0
      %958 = vmatpush.msra.mxu0 0.0
      %959 = vmatpush.msra.mxu0 0.0
      %960 = vmatpush.msra.mxu0 0.0
      %961 = vmatpush.msra.mxu0 %v941
      %962 = vmatmul.f32.gmra.mxu0 %v944
      %v963 = vpop.f32.mrf.mxu0
      %v964 = vadd.f32 0.0, %v963
      %965 = vdwg.mxu0
      %966 = vrot.lane.b32.xlu0 %v698, 120
      %v967 = vpop.permute.xlu0 %966
      %v969 = vsel %vm761, %v928, 0
      %v971 = vsel %vm812, %v967, 0
      %973 = vmatpush.msra.mxu0 0.0
      %974 = vmatpush.msra.mxu0 0.0
      %975 = vmatpush.msra.mxu0 0.0
      %976 = vmatpush.msra.mxu0 0.0
      %977 = vmatpush.msra.mxu0 0.0
      %978 = vmatpush.msra.mxu0 0.0
      %979 = vmatpush.msra.mxu0 0.0
      %980 = vmatpush.msra.mxu0 0.0
      %981 = vmatpush.msra.mxu0 0.0
      %982 = vmatpush.msra.mxu0 0.0
      %983 = vmatpush.msra.mxu0 0.0
      %984 = vmatpush.msra.mxu0 0.0
      %985 = vmatpush.msra.mxu0 0.0
      %986 = vmatpush.msra.mxu0 0.0
      %987 = vmatpush.msra.mxu0 0.0
      %988 = vmatpush.msra.mxu0 %v971
      %989 = vmatmul.f32.gmra.mxu0 %v969
      %v990 = vpop.f32.mrf.mxu0
      %v991 = vadd.f32 %v964, %v990
      %992 = vdwg.mxu0
      %v993 = vmul.f32 %v991, %v939
      %v995 = vsel %vm704, %v993, 0
      %997 = vmatpush.msra.mxu0 0.0
      %998 = vmatpush.msra.mxu0 0.0
      %999 = vmatpush.msra.mxu0 0.0
      %1000 = vmatpush.msra.mxu0 0.0
      %1001 = vmatpush.msra.mxu0 0.0
      %1002 = vmatpush.msra.mxu0 0.0
      %1003 = vmatpush.msra.mxu0 0.0
      %1004 = vmatpush.msra.mxu0 0.0
      %1005 = vmatpush.msra.mxu0 0.0
      %1006 = vmatpush.msra.mxu0 0.0
      %1007 = vmatpush.msra.mxu0 0.0
      %1008 = vmatpush.msra.mxu0 0.0
      %1009 = vmatpush.msra.mxu0 0.0
      %1010 = vmatpush.msra.mxu0 0.0
      %1011 = vmatpush.msra.mxu0 0.0
      %1012 = vmatpush.msra.mxu0 %v700
      %1013 = vmatmul.f32.gmra.mxu0 %v995
      %v1014 = vpop.f32.mrf.mxu0
      %v1015 = vadd.f32 0.0, %v1014
      %1016 = vdwg.mxu0
      %v1017 = vadd.f32 %v863, %v1015
      %1018 = vrot.lane.b32.xlu0 %v695, 112
      %v1019 = vpop.permute.xlu0 %1018
      %1020 = vrot.lane.b32.xlu0 %v697, 112
      %v1021 = vpop.permute.xlu0 %1020
      %v1022 = vsel %vm704, %v1019, 0
      %v1024 = vsel %vm704, %v1021, 0
      %1026 = vmatpush.xpose.msra.mxu0 0.0
      %1027 = vmatpush.xpose.msra.mxu0 0.0
      %1028 = vmatpush.xpose.msra.mxu0 0.0
      %1029 = vmatpush.xpose.msra.mxu0 0.0
      %1030 = vmatpush.xpose.msra.mxu0 0.0
      %1031 = vmatpush.xpose.msra.mxu0 0.0
      %1032 = vmatpush.xpose.msra.mxu0 0.0
      %1033 = vmatpush.xpose.msra.mxu0 0.0
      %1034 = vmatpush.xpose.msra.mxu0 0.0
      %1035 = vmatpush.xpose.msra.mxu0 0.0
      %1036 = vmatpush.xpose.msra.mxu0 0.0
      %1037 = vmatpush.xpose.msra.mxu0 0.0
      %1038 = vmatpush.xpose.msra.mxu0 0.0
      %1039 = vmatpush.xpose.msra.mxu0 0.0
      %1040 = vmatpush.xpose.msra.mxu0 0.0
      %1041 = vmatpush.xpose.msra.mxu0 %v1024
      %1042 = vmatmul.f32.gmra.mxu0 %v1022
      %v1043 = vpop.f32.mrf.mxu0
      %v1044 = vadd.f32 0.0, %v1043
      %1045 = vdwg.mxu0
      %v1046 = vmul.f32 %v1044, 0.35355338
      %1047 = vrot.lane.b32.xlu0 %v695, 80
      %v1048 = vpop.permute.xlu0 %1047
      %v1049 = vsel %vm704, %v1048, 0
      %1051 = vmatpush.xpose.msra.mxu0 0.0
      %1052 = vmatpush.xpose.msra.mxu0 0.0
      %1053 = vmatpush.xpose.msra.mxu0 0.0
      %1054 = vmatpush.xpose.msra.mxu0 0.0
      %1055 = vmatpush.xpose.msra.mxu0 0.0
      %1056 = vmatpush.xpose.msra.mxu0 0.0
      %1057 = vmatpush.xpose.msra.mxu0 0.0
      %1058 = vmatpush.xpose.msra.mxu0 0.0
      %1059 = vmatpush.xpose.msra.mxu0 0.0
      %1060 = vmatpush.xpose.msra.mxu0 0.0
      %1061 = vmatpush.xpose.msra.mxu0 0.0
      %1062 = vmatpush.xpose.msra.mxu0 0.0
      %1063 = vmatpush.xpose.msra.mxu0 0.0
      %1064 = vmatpush.xpose.msra.mxu0 0.0
      %1065 = vmatpush.xpose.msra.mxu0 0.0
      %1066 = vmatpush.xpose.msra.mxu0 %v1049
      %1067 = vmatmul.f32.gmra.mxu0 %v1022
      %v1068 = vpop.f32.mrf.mxu0
      %v1069 = vadd.f32 0.0, %v1068
      %1070 = vdwg.mxu0
      %v1071 = vmul.f32 %v1069, 0.35355338
      %v1072 = vadd.f32 %v1071, %v758
      %v1073 = vsel %vm761, %v1046, -inf
      %1074 = vmax.xlane.f32.xlu0 %v1073
      %v1075 = vpop.xlane.xlu0 %1074
      %v1076 = vsel %vm704, %v1072, -inf
      %1077 = vmax.xlane.f32.xlu0 %v1076
      %v1078 = vpop.xlane.xlu0 %1077
      %v1079 = vmax.f32 %v1075, %v1078
      %v1080 = vsub.f32 %v1046, %v1079
      %v1081 = vmul.f32 %v1080, 1.442695
      %v1082 = vpow.pop %v1081
      %v1083 = vsub.f32 %v1072, %v1079
      %v1084 = vmul.f32 %v1083, 1.442695
      %v1085 = vpow.pop %v1084
      %v1086 = vsel %vm761, %v1082, 0.0
      %1087 = vadd.xlane.f32.xlu0 %v1086
      %v1088 = vpop.xlane.xlu0 %1087
      %v1089 = vsel %vm704, %v1085, 0.0
      %1090 = vadd.xlane.f32.xlu0 %v1089
      %v1091 = vpop.xlane.xlu0 %1090
      %v1092 = vadd.f32 %v1088, %v1091
      %v1093 = vrcp.pop %v1092
      %1094 = vrot.lane.b32.xlu0 %v695, 48
      %v1095 = vpop.permute.xlu0 %1094
      %v1098 = vsel %vm704, %v1085, 0
      %1100 = vmatpush.msra.mxu0 0.0
      %1101 = vmatpush.msra.mxu0 0.0
      %1102 = vmatpush.msra.mxu0 0.0
      %1103 = vmatpush.msra.mxu0 0.0
      %1104 = vmatpush.msra.mxu0 0.0
      %1105 = vmatpush.msra.mxu0 0.0
      %1106 = vmatpush.msra.mxu0 0.0
      %1107 = vmatpush.msra.mxu0 0.0
      %1108 = vmatpush.msra.mxu0 0.0
      %1109 = vmatpush.msra.mxu0 0.0
      %1110 = vmatpush.msra.mxu0 0.0
      %1111 = vmatpush.msra.mxu0 0.0
      %1112 = vmatpush.msra.mxu0 0.0
      %1113 = vmatpush.msra.mxu0 0.0
      %1114 = vmatpush.msra.mxu0 0.0
      %1115 = vmatpush.msra.mxu0 %v1095
      %1116 = vmatmul.f32.gmra.mxu0 %v1098
      %v1117 = vpop.f32.mrf.mxu0
      %v1118 = vadd.f32 0.0, %v1117
      %1119 = vdwg.mxu0
      %1120 = vrot.lane.b32.xlu0 %v698, 112
      %v1121 = vpop.permute.xlu0 %1120
      %v1123 = vsel %vm761, %v1082, 0
      %v1125 = vsel %vm812, %v1121, 0
      %1127 = vmatpush.msra.mxu0 0.0
      %1128 = vmatpush.msra.mxu0 0.0
      %1129 = vmatpush.msra.mxu0 0.0
      %1130 = vmatpush.msra.mxu0 0.0
      %1131 = vmatpush.msra.mxu0 0.0
      %1132 = vmatpush.msra.mxu0 0.0
      %1133 = vmatpush.msra.mxu0 0.0
      %1134 = vmatpush.msra.mxu0 0.0
      %1135 = vmatpush.msra.mxu0 0.0
      %1136 = vmatpush.msra.mxu0 0.0
      %1137 = vmatpush.msra.mxu0 0.0
      %1138 = vmatpush.msra.mxu0 0.0
      %1139 = vmatpush.msra.mxu0 0.0
      %1140 = vmatpush.msra.mxu0 0.0
      %1141 = vmatpush.msra.mxu0 0.0
      %1142 = vmatpush.msra.mxu0 %v1125
      %1143 = vmatmul.f32.gmra.mxu0 %v1123
      %v1144 = vpop.f32.mrf.mxu0
      %v1145 = vadd.f32 %v1118, %v1144
      %1146 = vdwg.mxu0
      %v1147 = vmul.f32 %v1145, %v1093
      %v1149 = vsel %vm704, %v1147, 0
      %1151 = vmatpush.msra.mxu0 0.0
      %1152 = vmatpush.msra.mxu0 0.0
      %1153 = vmatpush.msra.mxu0 0.0
      %1154 = vmatpush.msra.mxu0 0.0
      %1155 = vmatpush.msra.mxu0 0.0
      %1156 = vmatpush.msra.mxu0 0.0
      %1157 = vmatpush.msra.mxu0 0.0
      %1158 = vmatpush.msra.mxu0 0.0
      %1159 = vmatpush.msra.mxu0 0.0
      %1160 = vmatpush.msra.mxu0 0.0
      %1161 = vmatpush.msra.mxu0 0.0
      %1162 = vmatpush.msra.mxu0 0.0
      %1163 = vmatpush.msra.mxu0 0.0
      %1164 = vmatpush.msra.mxu0 0.0
      %1165 = vmatpush.msra.mxu0 0.0
      %1166 = vmatpush.msra.mxu0 %v701
      %1167 = vmatmul.f32.gmra.mxu0 %v1149
      %v1168 = vpop.f32.mrf.mxu0
      %v1169 = vadd.f32 0.0, %v1168
      %1170 = vdwg.mxu0
      %v1171 = vadd.f32 %v1017, %v1169
      %1172 = vrot.lane.b32.xlu0 %v695, 104
      %v1173 = vpop.permute.xlu0 %1172
      %1174 = vrot.lane.b32.xlu0 %v697, 104
      %v1175 = vpop.permute.xlu0 %1174
      %v1176 = vsel %vm704, %v1173, 0
      %v1178 = vsel %vm704, %v1175, 0
      %1180 = vmatpush.xpose.msra.mxu0 0.0
      %1181 = vmatpush.xpose.msra.mxu0 0.0
      %1182 = vmatpush.xpose.msra.mxu0 0.0
      %1183 = vmatpush.xpose.msra.mxu0 0.0
      %1184 = vmatpush.xpose.msra.mxu0 0.0
      %1185 = vmatpush.xpose.msra.mxu0 0.0
      %1186 = vmatpush.xpose.msra.mxu0 0.0
      %1187 = vmatpush.xpose.msra.mxu0 0.0
      %1188 = vmatpush.xpose.msra.mxu0 0.0
      %1189 = vmatpush.xpose.msra.mxu0 0.0
      %1190 = vmatpush.xpose.msra.mxu0 0.0
      %1191 = vmatpush.xpose.msra.mxu0 0.0
      %1192 = vmatpush.xpose.msra.mxu0 0.0
      %1193 = vmatpush.xpose.msra.mxu0 0.0
      %1194 = vmatpush.xpose.msra.mxu0 0.0
      %1195 = vmatpush.xpose.msra.mxu0 %v1178
      %1196 = vmatmul.f32.gmra.mxu0 %v1176
      %v1197 = vpop.f32.mrf.mxu0
      %v1198 = vadd.f32 0.0, %v1197
      %1199 = vdwg.mxu0
      %v1200 = vmul.f32 %v1198, 0.35355338
      %1201 = vrot.lane.b32.xlu0 %v695, 72
      %v1202 = vpop.permute.xlu0 %1201
      %v1203 = vsel %vm704, %v1202, 0
      %1205 = vmatpush.xpose.msra.mxu0 0.0
      %1206 = vmatpush.xpose.msra.mxu0 0.0
      %1207 = vmatpush.xpose.msra.mxu0 0.0
      %1208 = vmatpush.xpose.msra.mxu0 0.0
      %1209 = vmatpush.xpose.msra.mxu0 0.0
      %1210 = vmatpush.xpose.msra.mxu0 0.0
      %1211 = vmatpush.xpose.msra.mxu0 0.0
      %1212 = vmatpush.xpose.msra.mxu0 0.0
      %1213 = vmatpush.xpose.msra.mxu0 0.0
      %1214 = vmatpush.xpose.msra.mxu0 0.0
      %1215 = vmatpush.xpose.msra.mxu0 0.0
      %1216 = vmatpush.xpose.msra.mxu0 0.0
      %1217 = vmatpush.xpose.msra.mxu0 0.0
      %1218 = vmatpush.xpose.msra.mxu0 0.0
      %1219 = vmatpush.xpose.msra.mxu0 0.0
      %1220 = vmatpush.xpose.msra.mxu0 %v1203
      %1221 = vmatmul.f32.gmra.mxu0 %v1176
      %v1222 = vpop.f32.mrf.mxu0
      %v1223 = vadd.f32 0.0, %v1222
      %1224 = vdwg.mxu0
      %v1225 = vmul.f32 %v1223, 0.35355338
      %v1226 = vadd.f32 %v1225, %v758
      %v1227 = vsel %vm761, %v1200, -inf
      %1228 = vmax.xlane.f32.xlu0 %v1227
      %v1229 = vpop.xlane.xlu0 %1228
      %v1230 = vsel %vm704, %v1226, -inf
      %1231 = vmax.xlane.f32.xlu0 %v1230
      %v1232 = vpop.xlane.xlu0 %1231
      %v1233 = vmax.f32 %v1229, %v1232
      %v1234 = vsub.f32 %v1200, %v1233
      %v1235 = vmul.f32 %v1234, 1.442695
      %v1236 = vpow.pop %v1235
      %v1237 = vsub.f32 %v1226, %v1233
      %v1238 = vmul.f32 %v1237, 1.442695
      %v1239 = vpow.pop %v1238
      %v1240 = vsel %vm761, %v1236, 0.0
      %1241 = vadd.xlane.f32.xlu0 %v1240
      %v1242 = vpop.xlane.xlu0 %1241
      %v1243 = vsel %vm704, %v1239, 0.0
      %1244 = vadd.xlane.f32.xlu0 %v1243
      %v1245 = vpop.xlane.xlu0 %1244
      %v1246 = vadd.f32 %v1242, %v1245
      %v1247 = vrcp.pop %v1246
      %1248 = vrot.lane.b32.xlu0 %v695, 40
      %v1249 = vpop.permute.xlu0 %1248
      %v1252 = vsel %vm704, %v1239, 0
      %1254 = vmatpush.msra.mxu0 0.0
      %1255 = vmatpush.msra.mxu0 0.0
      %1256 = vmatpush.msra.mxu0 0.0
      %1257 = vmatpush.msra.mxu0 0.0
      %1258 = vmatpush.msra.mxu0 0.0
      %1259 = vmatpush.msra.mxu0 0.0
      %1260 = vmatpush.msra.mxu0 0.0
      %1261 = vmatpush.msra.mxu0 0.0
      %1262 = vmatpush.msra.mxu0 0.0
      %1263 = vmatpush.msra.mxu0 0.0
      %1264 = vmatpush.msra.mxu0 0.0
      %1265 = vmatpush.msra.mxu0 0.0
      %1266 = vmatpush.msra.mxu0 0.0
      %1267 = vmatpush.msra.mxu0 0.0
      %1268 = vmatpush.msra.mxu0 0.0
      %1269 = vmatpush.msra.mxu0 %v1249
      %1270 = vmatmul.f32.gmra.mxu0 %v1252
      %v1271 = vpop.f32.mrf.mxu0
      %v1272 = vadd.f32 0.0, %v1271
      %1273 = vdwg.mxu0
      %1274 = vrot.lane.b32.xlu0 %v698, 104
      %v1275 = vpop.permute.xlu0 %1274
      %v1277 = vsel %vm761, %v1236, 0
      %v1279 = vsel %vm812, %v1275, 0
      %1281 = vmatpush.msra.mxu0 0.0
      %1282 = vmatpush.msra.mxu0 0.0
      %1283 = vmatpush.msra.mxu0 0.0
      %1284 = vmatpush.msra.mxu0 0.0
      %1285 = vmatpush.msra.mxu0 0.0
      %1286 = vmatpush.msra.mxu0 0.0
      %1287 = vmatpush.msra.mxu0 0.0
      %1288 = vmatpush.msra.mxu0 0.0
      %1289 = vmatpush.msra.mxu0 0.0
      %1290 = vmatpush.msra.mxu0 0.0
      %1291 = vmatpush.msra.mxu0 0.0
      %1292 = vmatpush.msra.mxu0 0.0
      %1293 = vmatpush.msra.mxu0 0.0
      %1294 = vmatpush.msra.mxu0 0.0
      %1295 = vmatpush.msra.mxu0 0.0
      %1296 = vmatpush.msra.mxu0 %v1279
      %1297 = vmatmul.f32.gmra.mxu0 %v1277
      %v1298 = vpop.f32.mrf.mxu0
      %v1299 = vadd.f32 %v1272, %v1298
      %1300 = vdwg.mxu0
      %v1301 = vmul.f32 %v1299, %v1247
      %v1303 = vsel %vm704, %v1301, 0
      %1305 = vmatpush.msra.mxu0 0.0
      %1306 = vmatpush.msra.mxu0 0.0
      %1307 = vmatpush.msra.mxu0 0.0
      %1308 = vmatpush.msra.mxu0 0.0
      %1309 = vmatpush.msra.mxu0 0.0
      %1310 = vmatpush.msra.mxu0 0.0
      %1311 = vmatpush.msra.mxu0 0.0
      %1312 = vmatpush.msra.mxu0 0.0
      %1313 = vmatpush.msra.mxu0 0.0
      %1314 = vmatpush.msra.mxu0 0.0
      %1315 = vmatpush.msra.mxu0 0.0
      %1316 = vmatpush.msra.mxu0 0.0
      %1317 = vmatpush.msra.mxu0 0.0
      %1318 = vmatpush.msra.mxu0 0.0
      %1319 = vmatpush.msra.mxu0 0.0
      %1320 = vmatpush.msra.mxu0 %v702
      %1321 = vmatmul.f32.gmra.mxu0 %v1303
      %v1322 = vpop.f32.mrf.mxu0
      %v1323 = vadd.f32 0.0, %v1322
      %1324 = vdwg.mxu0
      %v1325 = vadd.f32 %v1171, %v1323
      %v1326 = vadd.f32 %v1325, %v665
      %v1327 = vld [vmem:[%s11] sm:$0x1]
      %v1328 = vld [vmem:[%s12] sm:$0x1]
      %v1329 = vsel %vm628, %v1326, 0.0
      %1330 = vadd.xlane.f32.xlu0 %v1329
      %v1331 = vpop.xlane.xlu0 %1330
      %v1332 = vmul.f32 %v1331, %v638
      %v1333 = vsub.f32 %v1326, %v1332
      %v1334 = vmul.f32 %v1333, %v1333
      %v1335 = vsel %vm628, %v1334, 0.0
      %1336 = vadd.xlane.f32.xlu0 %v1335
      %v1337 = vpop.xlane.xlu0 %1336
      %v1338 = vmul.f32 %v1337, %v638
      %v1339 = vadd.f32 %v1338, 1e-05
      %v1340 = vrsqrt.pop %v1339
      %v1341 = vmul.f32 %v1340, %v1339
      %v1342 = vmul.f32 %v1341, %v1340
      %v1343 = vmul.f32 0.5, %v1342
      %v1344 = vsub.f32 1.5, %v1343
      %v1345 = vmul.f32 %v1340, %v1344
      %vm1346 = vweird.f32 %v1339
      %vm1347 = vweird.f32 %v1340
      %vm1348 = vmor %vm1346, %vm1347
      %v1349 = vsel %vm1348, %v1340, %v1345
      %v1350 = vmul.f32 %v1333, %v1349
      %v1352 = vperm.slane %v1327, 0
      %v1354 = vmul.f32 %v1350, %v1352
      %v1356 = vperm.slane %v1328, 0
      %v1358 = vadd.f32 %v1354, %v1356
      %v1359 = vld [vmem:[%s13] sm:$0xff]
      %v1360 = vld [vmem:[%s13 + $0x8] sm:$0xff]
      %v1361 = vld [vmem:[%s13 + $0x10] sm:$0xff]
      %v1362 = vld [vmem:[%s13 + $0x18] sm:$0xff]
      %v1363 = vld [vmem:[%s14] sm:$0x1]
      %v1365 = vperm.slane %v1363, 0
      %v1368 = vsel %vm628, %v1358, 0
      %1370 = vmatpush.msra.mxu0 0.0
      %1371 = vmatpush.msra.mxu0 0.0
      %1372 = vmatpush.msra.mxu0 0.0
      %1373 = vmatpush.msra.mxu0 0.0
      %1374 = vmatpush.msra.mxu0 0.0
      %1375 = vmatpush.msra.mxu0 0.0
      %1376 = vmatpush.msra.mxu0 0.0
      %1377 = vmatpush.msra.mxu0 0.0
      %1378 = vmatpush.msra.mxu0 0.0
      %1379 = vmatpush.msra.mxu0 0.0
      %1380 = vmatpush.msra.mxu0 0.0
      %1381 = vmatpush.msra.mxu0 0.0
      %1382 = vmatpush.msra.mxu0 %v1362
      %1383 = vmatpush.msra.mxu0 %v1361
      %1384 = vmatpush.msra.mxu0 %v1360
      %1385 = vmatpush.msra.mxu0 %v1359
      %1386 = vmatmul.f32.gmra.mxu0 %v1368
      %v1387 = vpop.f32.mrf.mxu0
      %v1388 = vadd.f32 %v1365, %v1387
      %1389 = vdwg.mxu0
      %v1390 = vmul.f32 %v1388, 0.5
      %v1391 = vmul.f32 %v1388, 0.044715
      %v1392 = vmul.f32 %v1391, %v1388
      %v1393 = vmul.f32 %v1392, %v1388
      %v1394 = vadd.f32 %v1388, %v1393
      %v1395 = vmul.f32 %v1394, 0.7978846
      %v1396 = vtanh.pop %v1395
      %v1397 = vadd.f32 %v1396, 1.0
      %v1398 = vmul.f32 %v1390, %v1397
      %v1399 = vld [vmem:[%s15] sm:$0xff]
      %v1400 = vld [vmem:[%s15 + $0x8] sm:$0xff]
      %v1401 = vld [vmem:[%s15 + $0x10] sm:$0xff]
      %v1402 = vld [vmem:[%s15 + $0x18] sm:$0xff]
      %v1403 = vld [vmem:[%s15 + $0x20] sm:$0xff]
      %v1404 = vld [vmem:[%s15 + $0x28] sm:$0xff]
      %v1405 = vld [vmem:[%s15 + $0x30] sm:$0xff]
      %v1406 = vld [vmem:[%s15 + $0x38] sm:$0xff]
      %v1407 = vld [vmem:[%s16] sm:$0x1]
      %v1409 = vperm.slane %v1407, 0
      %vm1411 = vcmask 523264
      %v1413 = vsel %vm1411, %v1398, 0
      %1415 = vmatpush.msra.mxu0 0.0
      %1416 = vmatpush.msra.mxu0 0.0
      %1417 = vmatpush.msra.mxu0 0.0
      %1418 = vmatpush.msra.mxu0 0.0
      %1419 = vmatpush.msra.mxu0 0.0
      %1420 = vmatpush.msra.mxu0 0.0
      %1421 = vmatpush.msra.mxu0 0.0
      %1422 = vmatpush.msra.mxu0 0.0
      %1423 = vmatpush.msra.mxu0 %v1406
      %1424 = vmatpush.msra.mxu0 %v1405
      %1425 = vmatpush.msra.mxu0 %v1404
      %1426 = vmatpush.msra.mxu0 %v1403
      %1427 = vmatpush.msra.mxu0 %v1402
      %1428 = vmatpush.msra.mxu0 %v1401
      %1429 = vmatpush.msra.mxu0 %v1400
      %1430 = vmatpush.msra.mxu0 %v1399
      %1431 = vmatmul.f32.gmra.mxu0 %v1413
      %v1432 = vpop.f32.mrf.mxu0
      %v1433 = vadd.f32 %v1409, %v1432
      %1434 = vdwg.mxu0
      %v1435 = vadd.f32 %v1433, %v1358
      %v1436 = vld [vmem:[%s17] sm:$0x1]
      %v1437 = vld [vmem:[%s18] sm:$0x1]
      %v1438 = vsel %vm628, %v1435, 0.0
      %1439 = vadd.xlane.f32.xlu0 %v1438
      %v1440 = vpop.xlane.xlu0 %1439
      %v1441 = vmul.f32 %v1440, %v638
      %v1442 = vsub.f32 %v1435, %v1441
      %v1443 = vmul.f32 %v1442, %v1442
      %v1444 = vsel %vm628, %v1443, 0.0
      %1445 = vadd.xlane.f32.xlu0 %v1444
      %v1446 = vpop.xlane.xlu0 %1445
      %v1447 = vmul.f32 %v1446, %v638
      %v1448 = vadd.f32 %v1447, 1e-05
      %v1449 = vrsqrt.pop %v1448
      %v1450 = vmul.f32 %v1449, %v1448
      %v1451 = vmul.f32 %v1450, %v1449
      %v1452 = vmul.f32 0.5, %v1451
      %v1453 = vsub.f32 1.5, %v1452
      %v1454 = vmul.f32 %v1449, %v1453
      %vm1455 = vweird.f32 %v1448
      %vm1456 = vweird.f32 %v1449
      %vm1457 = vmor %vm1455, %vm1456
      %v1458 = vsel %vm1457, %v1449, %v1454
      %v1459 = vmul.f32 %v1442, %v1458
      %v1461 = vperm.slane %v1436, 0
      %v1463 = vmul.f32 %v1459, %v1461
      %v1465 = vperm.slane %v1437, 0
      %v1467 = vadd.f32 %v1463, %v1465
      %s1468 = scalar_lea.vmem %s7, 32
      %v1469 = vld [vmem:[%s1468] sm:$0xff]
      %v1470 = vld [vmem:[%s1468 + $0x8] sm:$0xff]
      %v1471 = vld [vmem:[%s1468 + $0x10] sm:$0xff]
      %v1472 = vld [vmem:[%s1468 + $0x18] sm:$0xff]
      %s1473 = scalar_lea.vmem %s8, 1
      %v1474 = vld [vmem:[%s1473] sm:$0x1]
      %v1476 = vperm.slane %v1474, 0
      %v1479 = vsel %vm628, %v1467, 0
      %1481 = vmatpush.msra.mxu0 0.0
      %1482 = vmatpush.msra.mxu0 0.0
      %1483 = vmatpush.msra.mxu0 0.0
      %1484 = vmatpush.msra.mxu0 0.0
      %1485 = vmatpush.msra.mxu0 0.0
      %1486 = vmatpush.msra.mxu0 0.0
      %1487 = vmatpush.msra.mxu0 0.0
      %1488 = vmatpush.msra.mxu0 0.0
      %1489 = vmatpush.msra.mxu0 0.0
      %1490 = vmatpush.msra.mxu0 0.0
      %1491 = vmatpush.msra.mxu0 0.0
      %1492 = vmatpush.msra.mxu0 0.0
      %1493 = vmatpush.msra.mxu0 %v1472
      %1494 = vmatpush.msra.mxu0 %v1471
      %1495 = vmatpush.msra.mxu0 %v1470
      %1496 = vmatpush.msra.mxu0 %v1469
      %1497 = vmatmul.f32.gmra.mxu0 %v1479
      %v1498 = vpop.f32.mrf.mxu0
      %v1499 = vadd.f32 %v1476, %v1498
      %1500 = vdwg.mxu0
      %s1501 = scalar_lea.vmem %s5, 4
      %v1502 = vld [vmem:[%s1501] sm:$0xf]
      %s1503 = scalar_lea.vmem %s6, 4
      %v1504 = vld [vmem:[%s1503] sm:$0xf]
      %s1505 = scalar_lea.vmem %s9, 32
      %v1506 = vld [vmem:[%s1505] sm:$0xff]
      %v1507 = vld [vmem:[%s1505 + $0x8] sm:$0xff]
      %v1508 = vld [vmem:[%s1505 + $0x10] sm:$0xff]
      %v1509 = vld [vmem:[%s1505 + $0x18] sm:$0xff]
      %s1510 = scalar_lea.vmem %s10, 1
      %v1511 = vld [vmem:[%s1510] sm:$0x1]
      %v1513 = vsel %vm704, %v1499, 0
      %v1516 = vsel %vm704, %v1502, 0
      %1518 = vmatpush.xpose.msra.mxu0 0.0
      %1519 = vmatpush.xpose.msra.mxu0 0.0
      %1520 = vmatpush.xpose.msra.mxu0 0.0
      %1521 = vmatpush.xpose.msra.mxu0 0.0
      %1522 = vmatpush.xpose.msra.mxu0 0.0
      %1523 = vmatpush.xpose.msra.mxu0 0.0
      %1524 = vmatpush.xpose.msra.mxu0 0.0
      %1525 = vmatpush.xpose.msra.mxu0 0.0
      %1526 = vmatpush.xpose.msra.mxu0 0.0
      %1527 = vmatpush.xpose.msra.mxu0 0.0
      %1528 = vmatpush.xpose.msra.mxu0 0.0
      %1529 = vmatpush.xpose.msra.mxu0 0.0
      %1530 = vmatpush.xpose.msra.mxu0 0.0
      %1531 = vmatpush.xpose.msra.mxu0 0.0
      %1532 = vmatpush.xpose.msra.mxu0 0.0
      %1533 = vmatpush.xpose.msra.mxu0 %v1516
      %1534 = vmatmul.f32.gmra.mxu0 %v1513
      %v1535 = vpop.f32.mrf.mxu0
      %v1536 = vadd.f32 0.0, %v1535
      %1537 = vdwg.mxu0
      %v1538 = vmul.f32 %v1536, 0.35355338
      %1539 = vrot.lane.b32.xlu0 %v1499, 96
      %v1540 = vpop.permute.xlu0 %1539
      %v1541 = vsel %vm704, %v1540, 0
      %1543 = vmatpush.xpose.msra.mxu0 0.0
      %1544 = vmatpush.xpose.msra.mxu0 0.0
      %1545 = vmatpush.xpose.msra.mxu0 0.0
      %1546 = vmatpush.xpose.msra.mxu0 0.0
      %1547 = vmatpush.xpose.msra.mxu0 0.0
      %1548 = vmatpush.xpose.msra.mxu0 0.0
      %1549 = vmatpush.xpose.msra.mxu0 0.0
      %1550 = vmatpush.xpose.msra.mxu0 0.0
      %1551 = vmatpush.xpose.msra.mxu0 0.0
      %1552 = vmatpush.xpose.msra.mxu0 0.0
      %1553 = vmatpush.xpose.msra.mxu0 0.0
      %1554 = vmatpush.xpose.msra.mxu0 0.0
      %1555 = vmatpush.xpose.msra.mxu0 0.0
      %1556 = vmatpush.xpose.msra.mxu0 0.0
      %1557 = vmatpush.xpose.msra.mxu0 0.0
      %1558 = vmatpush.xpose.msra.mxu0 %v1541
      %1559 = vmatmul.f32.gmra.mxu0 %v1513
      %v1560 = vpop.f32.mrf.mxu0
      %v1561 = vadd.f32 0.0, %v1560
      %1562 = vdwg.mxu0
      %v1563 = vmul.f32 %v1561, 0.35355338
      %v1564 = vadd.f32 %v1563, %v758
      %v1565 = vsel %vm761, %v1538, -inf
      %1566 = vmax.xlane.f32.xlu0 %v1565
      %v1567 = vpop.xlane.xlu0 %1566
      %v1568 = vsel %vm704, %v1564, -inf
      %1569 = vmax.xlane.f32.xlu0 %v1568
      %v1570 = vpop.xlane.xlu0 %1569
      %v1571 = vmax.f32 %v1567, %v1570
      %v1572 = vsub.f32 %v1538, %v1571
      %v1573 = vmul.f32 %v1572, 1.442695
      %v1574 = vpow.pop %v1573
      %v1575 = vsub.f32 %v1564, %v1571
      %v1576 = vmul.f32 %v1575, 1.442695
      %v1577 = vpow.pop %v1576
      %v1578 = vsel %vm761, %v1574, 0.0
      %1579 = vadd.xlane.f32.xlu0 %v1578
      %v1580 = vpop.xlane.xlu0 %1579
      %v1581 = vsel %vm704, %v1577, 0.0
      %1582 = vadd.xlane.f32.xlu0 %v1581
      %v1583 = vpop.xlane.xlu0 %1582
      %v1584 = vadd.f32 %v1580, %v1583
      %v1585 = vrcp.pop %v1584
      %1586 = vrot.lane.b32.xlu0 %v1499, 64
      %v1587 = vpop.permute.xlu0 %1586
      %v1590 = vsel %vm704, %v1577, 0
      %1592 = vmatpush.msra.mxu0 0.0
      %1593 = vmatpush.msra.mxu0 0.0
      %1594 = vmatpush.msra.mxu0 0.0
      %1595 = vmatpush.msra.mxu0 0.0
      %1596 = vmatpush.msra.mxu0 0.0
      %1597 = vmatpush.msra.mxu0 0.0
      %1598 = vmatpush.msra.mxu0 0.0
      %1599 = vmatpush.msra.mxu0 0.0
      %1600 = vmatpush.msra.mxu0 0.0
      %1601 = vmatpush.msra.mxu0 0.0
      %1602 = vmatpush.msra.mxu0 0.0
      %1603 = vmatpush.msra.mxu0 0.0
      %1604 = vmatpush.msra.mxu0 0.0
      %1605 = vmatpush.msra.mxu0 0.0
      %1606 = vmatpush.msra.mxu0 0.0
      %1607 = vmatpush.msra.mxu0 %v1587
      %1608 = vmatmul.f32.gmra.mxu0 %v1590
      %v1609 = vpop.f32.mrf.mxu0
      %v1610 = vadd.f32 0.0, %v1609
      %1611 = vdwg.mxu0
      %v1613 = vsel %vm761, %v1574, 0
      %v1616 = vsel %vm812, %v1504, 0
      %1618 = vmatpush.msra.mxu0 0.0
      %1619 = vmatpush.msra.mxu0 0.0
      %1620 = vmatpush.msra.mxu0 0.0
      %1621 = vmatpush.msra.mxu0 0.0
      %1622 = vmatpush.msra.mxu0 0.0
      %1623 = vmatpush.msra.mxu0 0.0
      %1624 = vmatpush.msra.mxu0 0.0
      %1625 = vmatpush.msra.mxu0 0.0
      %1626 = vmatpush.msra.mxu0 0.0
      %1627 = vmatpush.msra.mxu0 0.0
      %1628 = vmatpush.msra.mxu0 0.0
      %1629 = vmatpush.msra.mxu0 0.0
      %1630 = vmatpush.msra.mxu0 0.0
      %1631 = vmatpush.msra.mxu0 0.0
      %1632 = vmatpush.msra.mxu0 0.0
      %1633 = vmatpush.msra.mxu0 %v1616
      %1634 = vmatmul.f32.gmra.mxu0 %v1613
      %v1635 = vpop.f32.mrf.mxu0
      %v1636 = vadd.f32 %v1610, %v1635
      %1637 = vdwg.mxu0
      %v1638 = vmul.f32 %v1636, %v1585
      %v1640 = vsel %vm704, %v1638, 0
      %1642 = vmatpush.msra.mxu0 0.0
      %1643 = vmatpush.msra.mxu0 0.0
      %1644 = vmatpush.msra.mxu0 0.0
      %1645 = vmatpush.msra.mxu0 0.0
      %1646 = vmatpush.msra.mxu0 0.0
      %1647 = vmatpush.msra.mxu0 0.0
      %1648 = vmatpush.msra.mxu0 0.0
      %1649 = vmatpush.msra.mxu0 0.0
      %1650 = vmatpush.msra.mxu0 0.0
      %1651 = vmatpush.msra.mxu0 0.0
      %1652 = vmatpush.msra.mxu0 0.0
      %1653 = vmatpush.msra.mxu0 0.0
      %1654 = vmatpush.msra.mxu0 0.0
      %1655 = vmatpush.msra.mxu0 0.0
      %1656 = vmatpush.msra.mxu0 0.0
      %1657 = vmatpush.msra.mxu0 %v1506
      %1658 = vmatmul.f32.gmra.mxu0 %v1640
      %v1659 = vpop.f32.mrf.mxu0
      %v1660 = vadd.f32 0.0, %v1659
      %1661 = vdwg.mxu0
      %v1663 = vperm.slane %v1511, 0
      %v1665 = vadd.f32 %v1663, %v1660
      %1666 = vrot.lane.b32.xlu0 %v1499, 120
      %v1667 = vpop.permute.xlu0 %1666
      %1668 = vrot.lane.b32.xlu0 %v1502, 120
      %v1669 = vpop.permute.xlu0 %1668
      %v1670 = vsel %vm704, %v1667, 0
      %v1672 = vsel %vm704, %v1669, 0
      %1674 = vmatpush.xpose.msra.mxu0 0.0
      %1675 = vmatpush.xpose.msra.mxu0 0.0
      %1676 = vmatpush.xpose.msra.mxu0 0.0
      %1677 = vmatpush.xpose.msra.mxu0 0.0
      %1678 = vmatpush.xpose.msra.mxu0 0.0
      %1679 = vmatpush.xpose.msra.mxu0 0.0
      %1680 = vmatpush.xpose.msra.mxu0 0.0
      %1681 = vmatpush.xpose.msra.mxu0 0.0
      %1682 = vmatpush.xpose.msra.mxu0 0.0
      %1683 = vmatpush.xpose.msra.mxu0 0.0
      %1684 = vmatpush.xpose.msra.mxu0 0.0
      %1685 = vmatpush.xpose.msra.mxu0 0.0
      %1686 = vmatpush.xpose.msra.mxu0 0.0
      %1687 = vmatpush.xpose.msra.mxu0 0.0
      %1688 = vmatpush.xpose.msra.mxu0 0.0
      %1689 = vmatpush.xpose.msra.mxu0 %v1672
      %1690 = vmatmul.f32.gmra.mxu0 %v1670
      %v1691 = vpop.f32.mrf.mxu0
      %v1692 = vadd.f32 0.0, %v1691
      %1693 = vdwg.mxu0
      %v1694 = vmul.f32 %v1692, 0.35355338
      %1695 = vrot.lane.b32.xlu0 %v1499, 88
      %v1696 = vpop.permute.xlu0 %1695
      %v1697 = vsel %vm704, %v1696, 0
      %1699 = vmatpush.xpose.msra.mxu0 0.0
      %1700 = vmatpush.xpose.msra.mxu0 0.0
      %1701 = vmatpush.xpose.msra.mxu0 0.0
      %1702 = vmatpush.xpose.msra.mxu0 0.0
      %1703 = vmatpush.xpose.msra.mxu0 0.0
      %1704 = vmatpush.xpose.msra.mxu0 0.0
      %1705 = vmatpush.xpose.msra.mxu0 0.0
      %1706 = vmatpush.xpose.msra.mxu0 0.0
      %1707 = vmatpush.xpose.msra.mxu0 0.0
      %1708 = vmatpush.xpose.msra.mxu0 0.0
      %1709 = vmatpush.xpose.msra.mxu0 0.0
      %1710 = vmatpush.xpose.msra.mxu0 0.0
      %1711 = vmatpush.xpose.msra.mxu0 0.0
      %1712 = vmatpush.xpose.msra.mxu0 0.0
      %1713 = vmatpush.xpose.msra.mxu0 0.0
      %1714 = vmatpush.xpose.msra.mxu0 %v1697
      %1715 = vmatmul.f32.gmra.mxu0 %v1670
      %v1716 = vpop.f32.mrf.mxu0
      %v1717 = vadd.f32 0.0, %v1716
      %1718 = vdwg.mxu0
      %v1719 = vmul.f32 %v1717, 0.35355338
      %v1720 = vadd.f32 %v1719, %v758
      %v1721 = vsel %vm761, %v1694, -inf
      %1722 = vmax.xlane.f32.xlu0 %v1721
      %v1723 = vpop.xlane.xlu0 %1722
      %v1724 = vsel %vm704, %v1720, -inf
      %1725 = vmax.xlane.f32.xlu0 %v1724
      %v1726 = vpop.xlane.xlu0 %1725
      %v1727 = vmax.f32 %v1723, %v1726
      %v1728 = vsub.f32 %v1694, %v1727
      %v1729 = vmul.f32 %v1728, 1.442695
      %v1730 = vpow.pop %v1729
      %v1731 = vsub.f32 %v1720, %v1727
      %v1732 = vmul.f32 %v1731, 1.442695
      %v1733 = vpow.pop %v1732
      %v1734 = vsel %vm761, %v1730, 0.0
      %1735 = vadd.xlane.f32.xlu0 %v1734
      %v1736 = vpop.xlane.xlu0 %1735
      %v1737 = vsel %vm704, %v1733, 0.0
      %1738 = vadd.xlane.f32.xlu0 %v1737
      %v1739 = vpop.xlane.xlu0 %1738
      %v1740 = vadd.f32 %v1736, %v1739
      %v1741 = vrcp.pop %v1740
      %1742 = vrot.lane.b32.xlu0 %v1499, 56
      %v1743 = vpop.permute.xlu0 %1742
      %v1746 = vsel %vm704, %v1733, 0
      %1748 = vmatpush.msra.mxu0 0.0
      %1749 = vmatpush.msra.mxu0 0.0
      %1750 = vmatpush.msra.mxu0 0.0
      %1751 = vmatpush.msra.mxu0 0.0
      %1752 = vmatpush.msra.mxu0 0.0
      %1753 = vmatpush.msra.mxu0 0.0
      %1754 = vmatpush.msra.mxu0 0.0
      %1755 = vmatpush.msra.mxu0 0.0
      %1756 = vmatpush.msra.mxu0 0.0
      %1757 = vmatpush.msra.mxu0 0.0
      %1758 = vmatpush.msra.mxu0 0.0
      %1759 = vmatpush.msra.mxu0 0.0
      %1760 = vmatpush.msra.mxu0 0.0
      %1761 = vmatpush.msra.mxu0 0.0
      %1762 = vmatpush.msra.mxu0 0.0
      %1763 = vmatpush.msra.mxu0 %v1743
      %1764 = vmatmul.f32.gmra.mxu0 %v1746
      %v1765 = vpop.f32.mrf.mxu0
      %v1766 = vadd.f32 0.0, %v1765
      %1767 = vdwg.mxu0
      %1768 = vrot.lane.b32.xlu0 %v1504, 120
      %v1769 = vpop.permute.xlu0 %1768
      %v1771 = vsel %vm761, %v1730, 0
      %v1773 = vsel %vm812, %v1769, 0
      %1775 = vmatpush.msra.mxu0 0.0
      %1776 = vmatpush.msra.mxu0 0.0
      %1777 = vmatpush.msra.mxu0 0.0
      %1778 = vmatpush.msra.mxu0 0.0
      %1779 = vmatpush.msra.mxu0 0.0
      %1780 = vmatpush.msra.mxu0 0.0
      %1781 = vmatpush.msra.mxu0 0.0
      %1782 = vmatpush.msra.mxu0 0.0
      %1783 = vmatpush.msra.mxu0 0.0
      %1784 = vmatpush.msra.mxu0 0.0
      %1785 = vmatpush.msra.mxu0 0.0
      %1786 = vmatpush.msra.mxu0 0.0
      %1787 = vmatpush.msra.mxu0 0.0
      %1788 = vmatpush.msra.mxu0 0.0
      %1789 = vmatpush.msra.mxu0 0.0
      %1790 = vmatpush.msra.mxu0 %v1773
      %1791 = vmatmul.f32.gmra.mxu0 %v1771
      %v1792 = vpop.f32.mrf.mxu0
      %v1793 = vadd.f32 %v1766, %v1792
      %1794 = vdwg.mxu0
      %v1795 = vmul.f32 %v1793, %v1741
      %v1797 = vsel %vm704, %v1795, 0
      %1799 = vmatpush.msra.mxu0 0.0
      %1800 = vmatpush.msra.mxu0 0.0
      %1801 = vmatpush.msra.mxu0 0.0
      %1802 = vmatpush.msra.mxu0 0.0
      %1803 = vmatpush.msra.mxu0 0.0
      %1804 = vmatpush.msra.mxu0 0.0
      %1805 = vmatpush.msra.mxu0 0.0
      %1806 = vmatpush.msra.mxu0 0.0
      %1807 = vmatpush.msra.mxu0 0.0
      %1808 = vmatpush.msra.mxu0 0.0
      %1809 = vmatpush.msra.mxu0 0.0
      %1810 = vmatpush.msra.mxu0 0.0
      %1811 = vmatpush.msra.mxu0 0.0
      %1812 = vmatpush.msra.mxu0 0.0
      %1813 = vmatpush.msra.mxu0 0.0
      %1814 = vmatpush.msra.mxu0 %v1507
      %1815 = vmatmul.f32.gmra.mxu0 %v1797
      %v1816 = vpop.f32.mrf.mxu0
      %v1817 = vadd.f32 0.0, %v1816
      %1818 = vdwg.mxu0
      %v1819 = vadd.f32 %v1665, %v1817
      %1820 = vrot.lane.b32.xlu0 %v1499, 112
      %v1821 = vpop.permute.xlu0 %1820
      %1822 = vrot.lane.b32.xlu0 %v1502, 112
      %v1823 = vpop.permute.xlu0 %1822
      %v1824 = vsel %vm704, %v1821, 0
      %v1826 = vsel %vm704, %v1823, 0
      %1828 = vmatpush.xpose.msra.mxu0 0.0
      %1829 = vmatpush.xpose.msra.mxu0 0.0
      %1830 = vmatpush.xpose.msra.mxu0 0.0
      %1831 = vmatpush.xpose.msra.mxu0 0.0
      %1832 = vmatpush.xpose.msra.mxu0 0.0
      %1833 = vmatpush.xpose.msra.mxu0 0.0
      %1834 = vmatpush.xpose.msra.mxu0 0.0
      %1835 = vmatpush.xpose.msra.mxu0 0.0
      %1836 = vmatpush.xpose.msra.mxu0 0.0
      %1837 = vmatpush.xpose.msra.mxu0 0.0
      %1838 = vmatpush.xpose.msra.mxu0 0.0
      %1839 = vmatpush.xpose.msra.mxu0 0.0
      %1840 = vmatpush.xpose.msra.mxu0 0.0
      %1841 = vmatpush.xpose.msra.mxu0 0.0
      %1842 = vmatpush.xpose.msra.mxu0 0.0
      %1843 = vmatpush.xpose.msra.mxu0 %v1826
      %1844 = vmatmul.f32.gmra.mxu0 %v1824
      %v1845 = vpop.f32.mrf.mxu0
      %v1846 = vadd.f32 0.0, %v1845
      %1847 = vdwg.mxu0
      %v1848 = vmul.f32 %v1846, 0.35355338
      %1849 = vrot.lane.b32.xlu0 %v1499, 80
      %v1850 = vpop.permute.xlu0 %1849
      %v1851 = vsel %vm704, %v1850, 0
      %1853 = vmatpush.xpose.msra.mxu0 0.0
      %1854 = vmatpush.xpose.msra.mxu0 0.0
      %1855 = vmatpush.xpose.msra.mxu0 0.0
      %1856 = vmatpush.xpose.msra.mxu0 0.0
      %1857 = vmatpush.xpose.msra.mxu0 0.0
      %1858 = vmatpush.xpose.msra.mxu0 0.0
      %1859 = vmatpush.xpose.msra.mxu0 0.0
      %1860 = vmatpush.xpose.msra.mxu0 0.0
      %1861 = vmatpush.xpose.msra.mxu0 0.0
      %1862 = vmatpush.xpose.msra.mxu0 0.0
      %1863 = vmatpush.xpose.msra.mxu0 0.0
      %1864 = vmatpush.xpose.msra.mxu0 0.0
      %1865 = vmatpush.xpose.msra.mxu0 0.0
      %1866 = vmatpush.xpose.msra.mxu0 0.0
      %1867 = vmatpush.xpose.msra.mxu0 0.0
      %1868 = vmatpush.xpose.msra.mxu0 %v1851
      %1869 = vmatmul.f32.gmra.mxu0 %v1824
      %v1870 = vpop.f32.mrf.mxu0
      %v1871 = vadd.f32 0.0, %v1870
      %1872 = vdwg.mxu0
      %v1873 = vmul.f32 %v1871, 0.35355338
      %v1874 = vadd.f32 %v1873, %v758
      %v1875 = vsel %vm761, %v1848, -inf
      %1876 = vmax.xlane.f32.xlu0 %v1875
      %v1877 = vpop.xlane.xlu0 %1876
      %v1878 = vsel %vm704, %v1874, -inf
      %1879 = vmax.xlane.f32.xlu0 %v1878
      %v1880 = vpop.xlane.xlu0 %1879
      %v1881 = vmax.f32 %v1877, %v1880
      %v1882 = vsub.f32 %v1848, %v1881
      %v1883 = vmul.f32 %v1882, 1.442695
      %v1884 = vpow.pop %v1883
      %v1885 = vsub.f32 %v1874, %v1881
      %v1886 = vmul.f32 %v1885, 1.442695
      %v1887 = vpow.pop %v1886
      %v1888 = vsel %vm761, %v1884, 0.0
      %1889 = vadd.xlane.f32.xlu0 %v1888
      %v1890 = vpop.xlane.xlu0 %1889
      %v1891 = vsel %vm704, %v1887, 0.0
      %1892 = vadd.xlane.f32.xlu0 %v1891
      %v1893 = vpop.xlane.xlu0 %1892
      %v1894 = vadd.f32 %v1890, %v1893
      %v1895 = vrcp.pop %v1894
      %1896 = vrot.lane.b32.xlu0 %v1499, 48
      %v1897 = vpop.permute.xlu0 %1896
      %v1900 = vsel %vm704, %v1887, 0
      %1902 = vmatpush.msra.mxu0 0.0
      %1903 = vmatpush.msra.mxu0 0.0
      %1904 = vmatpush.msra.mxu0 0.0
      %1905 = vmatpush.msra.mxu0 0.0
      %1906 = vmatpush.msra.mxu0 0.0
      %1907 = vmatpush.msra.mxu0 0.0
      %1908 = vmatpush.msra.mxu0 0.0
      %1909 = vmatpush.msra.mxu0 0.0
      %1910 = vmatpush.msra.mxu0 0.0
      %1911 = vmatpush.msra.mxu0 0.0
      %1912 = vmatpush.msra.mxu0 0.0
      %1913 = vmatpush.msra.mxu0 0.0
      %1914 = vmatpush.msra.mxu0 0.0
      %1915 = vmatpush.msra.mxu0 0.0
      %1916 = vmatpush.msra.mxu0 0.0
      %1917 = vmatpush.msra.mxu0 %v1897
      %1918 = vmatmul.f32.gmra.mxu0 %v1900
      %v1919 = vpop.f32.mrf.mxu0
      %v1920 = vadd.f32 0.0, %v1919
      %1921 = vdwg.mxu0
      %1922 = vrot.lane.b32.xlu0 %v1504, 112
      %v1923 = vpop.permute.xlu0 %1922
      %v1925 = vsel %vm761, %v1884, 0
      %v1927 = vsel %vm812, %v1923, 0
      %1929 = vmatpush.msra.mxu0 0.0
      %1930 = vmatpush.msra.mxu0 0.0
      %1931 = vmatpush.msra.mxu0 0.0
      %1932 = vmatpush.msra.mxu0 0.0
      %1933 = vmatpush.msra.mxu0 0.0
      %1934 = vmatpush.msra.mxu0 0.0
      %1935 = vmatpush.msra.mxu0 0.0
      %1936 = vmatpush.msra.mxu0 0.0
      %1937 = vmatpush.msra.mxu0 0.0
      %1938 = vmatpush.msra.mxu0 0.0
      %1939 = vmatpush.msra.mxu0 0.0
      %1940 = vmatpush.msra.mxu0 0.0
      %1941 = vmatpush.msra.mxu0 0.0
      %1942 = vmatpush.msra.mxu0 0.0
      %1943 = vmatpush.msra.mxu0 0.0
      %1944 = vmatpush.msra.mxu0 %v1927
      %1945 = vmatmul.f32.gmra.mxu0 %v1925
      %v1946 = vpop.f32.mrf.mxu0
      %v1947 = vadd.f32 %v1920, %v1946
      %1948 = vdwg.mxu0
      %v1949 = vmul.f32 %v1947, %v1895
      %v1951 = vsel %vm704, %v1949, 0
      %1953 = vmatpush.msra.mxu0 0.0
      %1954 = vmatpush.msra.mxu0 0.0
      %1955 = vmatpush.msra.mxu0 0.0
      %1956 = vmatpush.msra.mxu0 0.0
      %1957 = vmatpush.msra.mxu0 0.0
      %1958 = vmatpush.msra.mxu0 0.0
      %1959 = vmatpush.msra.mxu0 0.0
      %1960 = vmatpush.msra.mxu0 0.0
      %1961 = vmatpush.msra.mxu0 0.0
      %1962 = vmatpush.msra.mxu0 0.0
      %1963 = vmatpush.msra.mxu0 0.0
      %1964 = vmatpush.msra.mxu0 0.0
      %1965 = vmatpush.msra.mxu0 0.0
      %1966 = vmatpush.msra.mxu0 0.0
      %1967 = vmatpush.msra.mxu0 0.0
      %1968 = vmatpush.msra.mxu0 %v1508
      %1969 = vmatmul.f32.gmra.mxu0 %v1951
      %v1970 = vpop.f32.mrf.mxu0
      %v1971 = vadd.f32 0.0, %v1970
      %1972 = vdwg.mxu0
      %v1973 = vadd.f32 %v1819, %v1971
      %1974 = vrot.lane.b32.xlu0 %v1499, 104
      %v1975 = vpop.permute.xlu0 %1974
      %1976 = vrot.lane.b32.xlu0 %v1502, 104
      %v1977 = vpop.permute.xlu0 %1976
      %v1978 = vsel %vm704, %v1975, 0
      %v1980 = vsel %vm704, %v1977, 0
      %1982 = vmatpush.xpose.msra.mxu0 0.0
      %1983 = vmatpush.xpose.msra.mxu0 0.0
      %1984 = vmatpush.xpose.msra.mxu0 0.0
      %1985 = vmatpush.xpose.msra.mxu0 0.0
      %1986 = vmatpush.xpose.msra.mxu0 0.0
      %1987 = vmatpush.xpose.msra.mxu0 0.0
      %1988 = vmatpush.xpose.msra.mxu0 0.0
      %1989 = vmatpush.xpose.msra.mxu0 0.0
      %1990 = vmatpush.xpose.msra.mxu0 0.0
      %1991 = vmatpush.xpose.msra.mxu0 0.0
      %1992 = vmatpush.xpose.msra.mxu0 0.0
      %1993 = vmatpush.xpose.msra.mxu0 0.0
      %1994 = vmatpush.xpose.msra.mxu0 0.0
      %1995 = vmatpush.xpose.msra.mxu0 0.0
      %1996 = vmatpush.xpose.msra.mxu0 0.0
      %1997 = vmatpush.xpose.msra.mxu0 %v1980
      %1998 = vmatmul.f32.gmra.mxu0 %v1978
      %v1999 = vpop.f32.mrf.mxu0
      %v2000 = vadd.f32 0.0, %v1999
      %2001 = vdwg.mxu0
      %v2002 = vmul.f32 %v2000, 0.35355338
      %2003 = vrot.lane.b32.xlu0 %v1499, 72
      %v2004 = vpop.permute.xlu0 %2003
      %v2005 = vsel %vm704, %v2004, 0
      %2007 = vmatpush.xpose.msra.mxu0 0.0
      %2008 = vmatpush.xpose.msra.mxu0 0.0
      %2009 = vmatpush.xpose.msra.mxu0 0.0
      %2010 = vmatpush.xpose.msra.mxu0 0.0
      %2011 = vmatpush.xpose.msra.mxu0 0.0
      %2012 = vmatpush.xpose.msra.mxu0 0.0
      %2013 = vmatpush.xpose.msra.mxu0 0.0
      %2014 = vmatpush.xpose.msra.mxu0 0.0
      %2015 = vmatpush.xpose.msra.mxu0 0.0
      %2016 = vmatpush.xpose.msra.mxu0 0.0
      %2017 = vmatpush.xpose.msra.mxu0 0.0
      %2018 = vmatpush.xpose.msra.mxu0 0.0
      %2019 = vmatpush.xpose.msra.mxu0 0.0
      %2020 = vmatpush.xpose.msra.mxu0 0.0
      %2021 = vmatpush.xpose.msra.mxu0 0.0
      %2022 = vmatpush.xpose.msra.mxu0 %v2005
      %2023 = vmatmul.f32.gmra.mxu0 %v1978
      %v2024 = vpop.f32.mrf.mxu0
      %v2025 = vadd.f32 0.0, %v2024
      %2026 = vdwg.mxu0
      %v2027 = vmul.f32 %v2025, 0.35355338
      %v2028 = vadd.f32 %v2027, %v758
      %v2029 = vsel %vm761, %v2002, -inf
      %2030 = vmax.xlane.f32.xlu0 %v2029
      %v2031 = vpop.xlane.xlu0 %2030
      %v2032 = vsel %vm704, %v2028, -inf
      %2033 = vmax.xlane.f32.xlu0 %v2032
      %v2034 = vpop.xlane.xlu0 %2033
      %v2035 = vmax.f32 %v2031, %v2034
      %v2036 = vsub.f32 %v2002, %v2035
      %v2037 = vmul.f32 %v2036, 1.442695
      %v2038 = vpow.pop %v2037
      %v2039 = vsub.f32 %v2028, %v2035
      %v2040 = vmul.f32 %v2039, 1.442695
      %v2041 = vpow.pop %v2040
      %v2042 = vsel %vm761, %v2038, 0.0
      %2043 = vadd.xlane.f32.xlu0 %v2042
      %v2044 = vpop.xlane.xlu0 %2043
      %v2045 = vsel %vm704, %v2041, 0.0
      %2046 = vadd.xlane.f32.xlu0 %v2045
      %v2047 = vpop.xlane.xlu0 %2046
      %v2048 = vadd.f32 %v2044, %v2047
      %v2049 = vrcp.pop %v2048
      %2050 = vrot.lane.b32.xlu0 %v1499, 40
      %v2051 = vpop.permute.xlu0 %2050
      %v2054 = vsel %vm704, %v2041, 0
      %2056 = vmatpush.msra.mxu0 0.0
      %2057 = vmatpush.msra.mxu0 0.0
      %2058 = vmatpush.msra.mxu0 0.0
      %2059 = vmatpush.msra.mxu0 0.0
      %2060 = vmatpush.msra.mxu0 0.0
      %2061 = vmatpush.msra.mxu0 0.0
      %2062 = vmatpush.msra.mxu0 0.0
      %2063 = vmatpush.msra.mxu0 0.0
      %2064 = vmatpush.msra.mxu0 0.0
      %2065 = vmatpush.msra.mxu0 0.0
      %2066 = vmatpush.msra.mxu0 0.0
      %2067 = vmatpush.msra.mxu0 0.0
      %2068 = vmatpush.msra.mxu0 0.0
      %2069 = vmatpush.msra.mxu0 0.0
      %2070 = vmatpush.msra.mxu0 0.0
      %2071 = vmatpush.msra.mxu0 %v2051
      %2072 = vmatmul.f32.gmra.mxu0 %v2054
      %v2073 = vpop.f32.mrf.mxu0
      %v2074 = vadd.f32 0.0, %v2073
      %2075 = vdwg.mxu0
      %2076 = vrot.lane.b32.xlu0 %v1504, 104
      %v2077 = vpop.permute.xlu0 %2076
      %v2079 = vsel %vm761, %v2038, 0
      %v2081 = vsel %vm812, %v2077, 0
      %2083 = vmatpush.msra.mxu0 0.0
      %2084 = vmatpush.msra.mxu0 0.0
      %2085 = vmatpush.msra.mxu0 0.0
      %2086 = vmatpush.msra.mxu0 0.0
      %2087 = vmatpush.msra.mxu0 0.0
      %2088 = vmatpush.msra.mxu0 0.0
      %2089 = vmatpush.msra.mxu0 0.0
      %2090 = vmatpush.msra.mxu0 0.0
      %2091 = vmatpush.msra.mxu0 0.0
      %2092 = vmatpush.msra.mxu0 0.0
      %2093 = vmatpush.msra.mxu0 0.0
      %2094 = vmatpush.msra.mxu0 0.0
      %2095 = vmatpush.msra.mxu0 0.0
      %2096 = vmatpush.msra.mxu0 0.0
      %2097 = vmatpush.msra.mxu0 0.0
      %2098 = vmatpush.msra.mxu0 %v2081
      %2099 = vmatmul.f32.gmra.mxu0 %v2079
      %v2100 = vpop.f32.mrf.mxu0
      %v2101 = vadd.f32 %v2074, %v2100
      %2102 = vdwg.mxu0
      %v2103 = vmul.f32 %v2101, %v2049
      %v2105 = vsel %vm704, %v2103, 0
      %2107 = vmatpush.msra.mxu0 0.0
      %2108 = vmatpush.msra.mxu0 0.0
      %2109 = vmatpush.msra.mxu0 0.0
      %2110 = vmatpush.msra.mxu0 0.0
      %2111 = vmatpush.msra.mxu0 0.0
      %2112 = vmatpush.msra.mxu0 0.0
      %2113 = vmatpush.msra.mxu0 0.0
      %2114 = vmatpush.msra.mxu0 0.0
      %2115 = vmatpush.msra.mxu0 0.0
      %2116 = vmatpush.msra.mxu0 0.0
      %2117 = vmatpush.msra.mxu0 0.0
      %2118 = vmatpush.msra.mxu0 0.0
      %2119 = vmatpush.msra.mxu0 0.0
      %2120 = vmatpush.msra.mxu0 0.0
      %2121 = vmatpush.msra.mxu0 0.0
      %2122 = vmatpush.msra.mxu0 %v1509
      %2123 = vmatmul.f32.gmra.mxu0 %v2105
      %v2124 = vpop.f32.mrf.mxu0
      %v2125 = vadd.f32 0.0, %v2124
      %2126 = vdwg.mxu0
      %v2127 = vadd.f32 %v1973, %v2125
      %v2128 = vadd.f32 %v2127, %v1467
      %s2129 = scalar_lea.vmem %s11, 1
      %v2130 = vld [vmem:[%s2129] sm:$0x1]
      %s2131 = scalar_lea.vmem %s12, 1
      %v2132 = vld [vmem:[%s2131] sm:$0x1]
      %v2133 = vsel %vm628, %v2128, 0.0
      %2134 = vadd.xlane.f32.xlu0 %v2133
      %v2135 = vpop.xlane.xlu0 %2134
      %v2136 = vmul.f32 %v2135, %v638
      %v2137 = vsub.f32 %v2128, %v2136
      %v2138 = vmul.f32 %v2137, %v2137
      %v2139 = vsel %vm628, %v2138, 0.0
      %2140 = vadd.xlane.f32.xlu0 %v2139
      %v2141 = vpop.xlane.xlu0 %2140
      %v2142 = vmul.f32 %v2141, %v638
      %v2143 = vadd.f32 %v2142, 1e-05
      %v2144 = vrsqrt.pop %v2143
      %v2145 = vmul.f32 %v2144, %v2143
      %v2146 = vmul.f32 %v2145, %v2144
      %v2147 = vmul.f32 0.5, %v2146
      %v2148 = vsub.f32 1.5, %v2147
      %v2149 = vmul.f32 %v2144, %v2148
      %vm2150 = vweird.f32 %v2143
      %vm2151 = vweird.f32 %v2144
      %vm2152 = vmor %vm2150, %vm2151
      %v2153 = vsel %vm2152, %v2144, %v2149
      %v2154 = vmul.f32 %v2137, %v2153
      %v2156 = vperm.slane %v2130, 0
      %v2158 = vmul.f32 %v2154, %v2156
      %v2160 = vperm.slane %v2132, 0
      %v2162 = vadd.f32 %v2158, %v2160
      %s2163 = scalar_lea.vmem %s13, 32
      %v2164 = vld [vmem:[%s2163] sm:$0xff]
      %v2165 = vld [vmem:[%s2163 + $0x8] sm:$0xff]
      %v2166 = vld [vmem:[%s2163 + $0x10] sm:$0xff]
      %v2167 = vld [vmem:[%s2163 + $0x18] sm:$0xff]
      %s2168 = scalar_lea.vmem %s14, 1
      %v2169 = vld [vmem:[%s2168] sm:$0x1]
      %v2171 = vperm.slane %v2169, 0
      %v2174 = vsel %vm628, %v2162, 0
      %2176 = vmatpush.msra.mxu0 0.0
      %2177 = vmatpush.msra.mxu0 0.0
      %2178 = vmatpush.msra.mxu0 0.0
      %2179 = vmatpush.msra.mxu0 0.0
      %2180 = vmatpush.msra.mxu0 0.0
      %2181 = vmatpush.msra.mxu0 0.0
      %2182 = vmatpush.msra.mxu0 0.0
      %2183 = vmatpush.msra.mxu0 0.0
      %2184 = vmatpush.msra.mxu0 0.0
      %2185 = vmatpush.msra.mxu0 0.0
      %2186 = vmatpush.msra.mxu0 0.0
      %2187 = vmatpush.msra.mxu0 0.0
      %2188 = vmatpush.msra.mxu0 %v2167
      %2189 = vmatpush.msra.mxu0 %v2166
      %2190 = vmatpush.msra.mxu0 %v2165
      %2191 = vmatpush.msra.mxu0 %v2164
      %2192 = vmatmul.f32.gmra.mxu0 %v2174
      %v2193 = vpop.f32.mrf.mxu0
      %v2194 = vadd.f32 %v2171, %v2193
      %2195 = vdwg.mxu0
      %v2196 = vmul.f32 %v2194, 0.5
      %v2197 = vmul.f32 %v2194, 0.044715
      %v2198 = vmul.f32 %v2197, %v2194
      %v2199 = vmul.f32 %v2198, %v2194
      %v2200 = vadd.f32 %v2194, %v2199
      %v2201 = vmul.f32 %v2200, 0.7978846
      %v2202 = vtanh.pop %v2201
      %v2203 = vadd.f32 %v2202, 1.0
      %v2204 = vmul.f32 %v2196, %v2203
      %s2205 = scalar_lea.vmem %s15, 64
      %v2206 = vld [vmem:[%s2205] sm:$0xff]
      %v2207 = vld [vmem:[%s2205 + $0x8] sm:$0xff]
      %v2208 = vld [vmem:[%s2205 + $0x10] sm:$0xff]
      %v2209 = vld [vmem:[%s2205 + $0x18] sm:$0xff]
      %v2210 = vld [vmem:[%s2205 + $0x20] sm:$0xff]
      %v2211 = vld [vmem:[%s2205 + $0x28] sm:$0xff]
      %v2212 = vld [vmem:[%s2205 + $0x30] sm:$0xff]
      %v2213 = vld [vmem:[%s2205 + $0x38] sm:$0xff]
      %s2214 = scalar_lea.vmem %s16, 1
      %v2215 = vld [vmem:[%s2214] sm:$0x1]
      %v2217 = vperm.slane %v2215, 0
      %v2220 = vsel %vm1411, %v2204, 0
      %2222 = vmatpush.msra.mxu0 0.0
      %2223 = vmatpush.msra.mxu0 0.0
      %2224 = vmatpush.msra.mxu0 0.0
      %2225 = vmatpush.msra.mxu0 0.0
      %2226 = vmatpush.msra.mxu0 0.0
      %2227 = vmatpush.msra.mxu0 0.0
      %2228 = vmatpush.msra.mxu0 0.0
      %2229 = vmatpush.msra.mxu0 0.0
      %2230 = vmatpush.msra.mxu0 %v2213
      %2231 = vmatpush.msra.mxu0 %v2212
      %2232 = vmatpush.msra.mxu0 %v2211
      %2233 = vmatpush.msra.mxu0 %v2210
      %2234 = vmatpush.msra.mxu0 %v2209
      %2235 = vmatpush.msra.mxu0 %v2208
      %2236 = vmatpush.msra.mxu0 %v2207
      %2237 = vmatpush.msra.mxu0 %v2206
      %2238 = vmatmul.f32.gmra.mxu0 %v2220
      %v2239 = vpop.f32.mrf.mxu0
      %v2240 = vadd.f32 %v2217, %v2239
      %2241 = vdwg.mxu0
      %v2242 = vadd.f32 %v2240, %v2162
      %s2243 = scalar_lea.vmem %s17, 1
      %v2244 = vld [vmem:[%s2243] sm:$0x1]
      %s2245 = scalar_lea.vmem %s18, 1
      %v2246 = vld [vmem:[%s2245] sm:$0x1]
      %v2247 = vsel %vm628, %v2242, 0.0
      %2248 = vadd.xlane.f32.xlu0 %v2247
      %v2249 = vpop.xlane.xlu0 %2248
      %v2250 = vmul.f32 %v2249, %v638
      %v2251 = vsub.f32 %v2242, %v2250
      %v2252 = vmul.f32 %v2251, %v2251
      %v2253 = vsel %vm628, %v2252, 0.0
      %2254 = vadd.xlane.f32.xlu0 %v2253
      %v2255 = vpop.xlane.xlu0 %2254
      %v2256 = vmul.f32 %v2255, %v638
      %v2257 = vadd.f32 %v2256, 1e-05
      %v2258 = vrsqrt.pop %v2257
      %v2259 = vmul.f32 %v2258, %v2257
      %v2260 = vmul.f32 %v2259, %v2258
      %v2261 = vmul.f32 0.5, %v2260
      %v2262 = vsub.f32 1.5, %v2261
      %v2263 = vmul.f32 %v2258, %v2262
      %vm2264 = vweird.f32 %v2257
      %vm2265 = vweird.f32 %v2258
      %vm2266 = vmor %vm2264, %vm2265
      %v2267 = vsel %vm2266, %v2258, %v2263
      %v2268 = vmul.f32 %v2251, %v2267
      %v2270 = vperm.slane %v2244, 0
      %v2272 = vmul.f32 %v2268, %v2270
      %v2274 = vperm.slane %v2246, 0
      %v2276 = vadd.f32 %v2272, %v2274
      %v2277 = vld [vmem:[%s620] sm:$0x1]
      %v2279 = vsel %vm704, %v2277, 0
      %2281 = vmatpush.msra.mxu0 0.0
      %2282 = vmatpush.msra.mxu0 0.0
      %2283 = vmatpush.msra.mxu0 0.0
      %2284 = vmatpush.msra.mxu0 0.0
      %2285 = vmatpush.msra.mxu0 0.0
      %2286 = vmatpush.msra.mxu0 0.0
      %2287 = vmatpush.msra.mxu0 0.0
      %2288 = vmatpush.msra.mxu0 0.0
      %2289 = vmatpush.msra.mxu0 0.0
      %2290 = vmatpush.msra.mxu0 0.0
      %2291 = vmatpush.msra.mxu0 0.0
      %2292 = vmatpush.msra.mxu0 0.0
      %2293 = vmatpush.msra.mxu0 0.0
      %2294 = vmatpush.msra.mxu0 0.0
      %2295 = vmatpush.msra.mxu0 0.0
      %2296 = vmatpush.msra.mxu0 %v2276
      %2297 = vmatmul.f32.gmra.mxu0 %v2279
      %v2298 = vpop.f32.mrf.mxu0
      %v2299 = vadd.f32 0.0, %v2298
      %2300 = vdwg.mxu0
      %vm2301 = vcmask 253952
      %2302 = vst.msk [vmem:[%s623] sm:$0x1] %vm2301, %v2299
      %p2303 = scmp.lt.s32.totalorder %s30, 3
      %s2304 = scalar_select %p2303, %s30, 3
      %s2305 = scalar_lea.vmem %s19, %s2304
      // Predicated region
      $region97: #{p_tuningv2_forward.1} parent=95 // pred_check
        %p2306 = pneg %p462
      $region98: #{p_tuningv2_forward.1} parent=95 // pred_check_branch
        %2308 = sbr.rel (%p2306) target = $region100
      $region99: #{p_tuningv2_forward.1} parent=95 // pred_region
        _
      $region100: #{p_tuningv2_forward.1} parent=95 // pred_fallthru
        _
    $region96: #{p_tuningv2_forward.1} parent=5 // pred_fallthru
      _
    %p2309 = scmp.le.s32.totalorder 2, %s25
    // Predicated region
    $region101: #{p_tuningv2_forward.1} parent=5 // pred_check
      %p2310 = pneg %p2309
    $region102: #{p_tuningv2_forward.1} parent=5 // pred_check_branch
      %2312 = sbr.rel (%p2310) target = $region104
    $region103: #{p_tuningv2_forward.1} parent=5 // pred_region
      %s2313 = ssub.s32 %s25, 2
      // Predicated region
      $region105: #{p_tuningv2_forward.1} parent=103 // pred_check
        %p2314 = pneg %p468
      $region106: #{p_tuningv2_forward.1} parent=103 // pred_check_branch
        %2316 = sbr.rel (%p2314) target = $region108
      $region107: #{p_tuningv2_forward.1} parent=103 // pred_region
        %p2317 = scmp.lt.s32.totalorder %s31, 3
        %s2318 = scalar_select %p2317, %s31, 3
        %s2319 = scalar_lea.vmem %s19, %s2318
      $region108: #{p_tuningv2_forward.1} parent=103 // pred_fallthru
        _
    $region104: #{p_tuningv2_forward.1} parent=5 // pred_fallthru
      _
  $region6: #{p_tuningv2_forward.1} parent=0 // loop_footer
    %s29 = sadd.s32 1, %s25
  $region7: #{p_tuningv2_forward.1} parent=0 // loop_footer_branch
    %24 = sbr.rel target = $region3
  $region8: #{p_tuningv2_forward.1} parent=0 // loop_exit
    _

</llo_original>
